<compile_context>
chip_gen: v5e
topology: v5e:2x2
jax: 0.10.0
libtpu: 0.0.40
codegen_flags: <defaults>
</compile_context>

<pallas_src>
import numpy as np
import jax
import jax.numpy as jnp
from jax import lax
from jax.experimental import pallas as pl
from jax.experimental.pallas import tpu as pltpu

EPS = 1e-5


# ------------------------------ fused kernel ------------------------------- #

def _fused_disc_kernel(pat_ref, w1_ref, g1_ref, b1_ref,
                       s2_ref, w2_ref, g2_ref, b2_ref,
                       s3_ref, w3_ref, g3_ref, b3_ref,
                       s4_ref, w4_ref, b4_ref,
                       lw_ref, lb_ref, o_ref):
    """Whole Discriminator forward in one kernel.

    Activations are kept as (N*H*W, C) matrices (rows in N,H,W order, channels
    on the lane dim).  conv_l is computed as
        sum_t  S_t @ act @ W_t
    where S_t is a 0/1 row-selection matrix for kernel tap t (zero rows encode
    padding) and W_t is the (Cin, Cout) slice of the conv weight for that tap.
    """

    def bn_relu(y, g, b):
        # Per-channel batch-norm (training mode) over all N*H*W rows + ReLU.
        mean = jnp.mean(y, axis=0, keepdims=True)
        var = jnp.mean(jnp.square(y - mean), axis=0, keepdims=True)
        yhat = (y - mean) * lax.rsqrt(var + EPS)
        return jnp.maximum(yhat * g + b, 0.0)

    def conv_taps(a, s_ref, w_ref):
        # sum over kernel taps of  (S_t @ a) @ W_t   (all tiny 2-D MXU dots).
        n_taps = s_ref.shape[0]
        acc = None
        for t in range(n_taps):          # static unroll (<= 9 taps)
            y = jnp.dot(
                jnp.dot(s_ref[t], a, preferred_element_type=jnp.float32),
                w_ref[t], preferred_element_type=jnp.float32)
            acc = y if acc is None else acc + y
        return acc

    # conv1 (im2col patches supplied):  (N*13*13, 64) @ (64, 4) -> BN -> ReLU
    a = jnp.dot(pat_ref[...], w1_ref[...], preferred_element_type=jnp.float32)
    a = bn_relu(a, g1_ref[...], b1_ref[...])

    # conv2 (k=3, s=2, p=1):  -> (N*7*7, 8)
    a = bn_relu(conv_taps(a, s2_ref, w2_ref), g2_ref[...], b2_ref[...])

    # conv3 (k=3, s=2, p=1):  -> (N*4*4, 16)
    a = bn_relu(conv_taps(a, s3_ref, w3_ref), g3_ref[...], b3_ref[...])

    # conv4 (k=2, s=2, p=1) + bias + ReLU:  -> (N*9, 1)
    a = jnp.maximum(conv_taps(a, s4_ref, w4_ref) + b4_ref[...], 0.0)

    # flatten + Linear(9, 1) folded into one (N, N*9) matmul, then sigmoid.
    y = jnp.dot(lw_ref[...], a, preferred_element_type=jnp.float32) + lb_ref[...]
    # sigmoid via EUP reciprocal (free bundle slot); exp also on EUP.
    o_ref[...] = pl.reciprocal(1.0 + jnp.exp(-y), approx=True)


# ------------------------------- JAX glue ---------------------------------- #

def _im2col(x, kh, kw, stride, pad):
    """x: (N, C, H, W) -> patches (N*OH*OW, C*kh*kw) (rows in N,OH,OW order)."""
    n, c, h, w = x.shape
    xp = jnp.pad(x, ((0, 0), (0, 0), (pad, pad), (pad, pad)))
    oh = (h + 2 * pad - kh) // stride + 1
    ow = (w + 2 * pad - kw) // stride + 1
    cols = []
    for i in range(kh):
        for j in range(kw):
            cols.append(xp[:, :, i:i + stride * oh:stride, j:j + stride * ow:stride])
    p = jnp.stack(cols, axis=0).reshape(kh, kw, n, c, oh, ow)
    p = p.transpose(2, 4, 5, 3, 0, 1).reshape(n * oh * ow, c * kh * kw)
    return p, oh, ow


def _reshape_w(w):
    """PyTorch (Cout, Cin, kh, kw) -> (Cin*kh*kw, Cout) (matches _im2col cols)."""
    cout = w.shape[0]
    return w.reshape(cout, -1).T


def _per_tap_w(w):
    """PyTorch (Cout, Cin, kh, kw) -> (kh*kw, Cin, Cout), tap t = ky*kw + kx."""
    cout, cin, kh, kw = w.shape
    return jnp.transpose(w, (2, 3, 1, 0)).reshape(kh * kw, cin, cout)


def _build_selection(n, h, w, kh, kw, stride, pad):
    """0/1 tap-selection matrices S[t, q, r] mapping (N*H*W, C) -> (N*OH*OW, C).

    Zero rows encode zero-padding.  Shape-only constant (built once on host).
    """
    oh = (h + 2 * pad - kh) // stride + 1
    ow = (w + 2 * pad - kw) // stride + 1
    s = np.zeros((kh * kw, n * oh * ow, n * h * w), np.float32)
    for ky in range(kh):
        for kx in range(kw):
            t = ky * kw + kx
            for b in range(n):
                for oy in range(oh):
                    iy = oy * stride - pad + ky
                    if not (0 <= iy < h):
                        continue
                    for ox in range(ow):
                        ix = ox * stride - pad + kx
                        if not (0 <= ix < w):
                            continue
                        q = b * oh * ow + oy * ow + ox
                        r = b * h * w + iy * w + ix
                        s[t, q, r] = 1.0
    return jnp.asarray(s), oh, ow


# -------------------------- parameter construction ------------------------- #

def init_params(key):
    ks = jax.random.split(key, 6)
    p = {}
    # conv1: Conv2d(4, 4, 4, stride=2, bias=False)
    p["w1"] = jax.random.normal(ks[0], (4, 4, 4, 4), jnp.float32) * 0.1
    p["g1"] = jnp.ones((1, 4), jnp.float32)
    p["b1"] = jnp.zeros((1, 4), jnp.float32)
    # conv2: Conv2d(4, 8, 3, stride=2, pad=1, bias=False)
    p["w2"] = jax.random.normal(ks[1], (8, 4, 3, 3), jnp.float32) * 0.1
    p["g2"] = jnp.ones((1, 8), jnp.float32)
    p["b2"] = jnp.zeros((1, 8), jnp.float32)
    # conv3: Conv2d(8, 16, 3, stride=2, pad=1, bias=False)
    p["w3"] = jax.random.normal(ks[2], (16, 8, 3, 3), jnp.float32) * 0.1
    p["g3"] = jnp.ones((1, 16), jnp.float32)
    p["b3"] = jnp.zeros((1, 16), jnp.float32)
    # conv4: Conv2d(16, 1, 2, stride=2, pad=1) with bias
    p["w4"] = jax.random.normal(ks[3], (1, 16, 2, 2), jnp.float32) * 0.1
    p["b4"] = jax.random.normal(ks[4], (1, 1), jnp.float32) * 0.1
    # lin: Linear(9, 1)
    p["wl"] = jax.random.normal(ks[5], (9, 1), jnp.float32) * 0.1
    p["bl"] = jnp.zeros((1, 1), jnp.float32)
    return p


def build_kernel_consts(p, n, h=28, w=28):
    """Host-side, shape/weight-only constants for the fused kernel (built once)."""
    c = {}
    c["w1"], c["g1"], c["b1"] = _reshape_w(p["w1"]), p["g1"], p["b1"]
    oh1 = (h - 4) // 2 + 1                         # 13
    ow1 = (w - 4) // 2 + 1                         # 13
    c["S2"], oh2, ow2 = _build_selection(n, oh1, ow1, 3, 3, 2, 1)   # -> 7x7
    c["w2"], c["g2"], c["b2"] = _per_tap_w(p["w2"]), p["g2"], p["b2"]
    c["S3"], oh3, ow3 = _build_selection(n, oh2, ow2, 3, 3, 2, 1)   # -> 4x4
    c["w3"], c["g3"], c["b3"] = _per_tap_w(p["w3"]), p["g3"], p["b3"]
    c["S4"], oh4, ow4 = _build_selection(n, oh3, ow3, 2, 2, 2, 1)   # -> 3x3
    c["w4"], c["b4"] = _per_tap_w(p["w4"]), p["b4"]
    assert oh4 * ow4 == 9, (oh4, ow4)
    # Flatten + Linear(9,1): out[n] = sum_j wl[j] * conv4_flat[n*9 + j]
    c["L"] = jnp.kron(jnp.eye(n, dtype=jnp.float32), p["wl"].T)     # (N, N*9)
    c["bl"] = p["bl"]
    return c


# ------------------------------ forward pass ------------------------------- #

def discriminator_forward(x, c):
    n = x.shape[0]
    # conv1 im2col of the raw input (cheap XLA glue); everything after this is
    # one fused Pallas kernel with all activations resident in VMEM.
    pat, _, _ = _im2col(x, 4, 4, 2, 0)             # (N*169, 64)
    args = (pat, c["w1"], c["g1"], c["b1"],
            c["S2"], c["w2"], c["g2"], c["b2"],
            c["S3"], c["w3"], c["g3"], c["b3"],
            c["S4"], c["w4"], c["b4"],
            c["L"], c["bl"])
    vmem = lambda: pl.BlockSpec(memory_space=pltpu.MemorySpace.VMEM)
    return pl.pallas_call(
        _fused_disc_kernel,
        out_shape=jax.ShapeDtypeStruct((n, 1), jnp.float32),
        in_specs=[vmem() for _ in args],
        out_specs=vmem(),
        compiler_params=pltpu.CompilerParams(
            vmem_limit_bytes=32 * 1024 * 1024),    # total working set ~2 MiB
    )(*args)


# -------------------------- pure-JAX reference ----------------------------- #

def _ref_conv(x, w, stride, pad):
    return lax.conv_general_dilated(
        x, w, (stride, stride), ((pad, pad), (pad, pad)),
        dimension_numbers=("NCHW", "OIHW", "NCHW"))


def _ref_bn(x, g, b):
    mean = x.mean(axis=(0, 2, 3), keepdims=True)
    var = jnp.square(x - mean).mean(axis=(0, 2, 3), keepdims=True)
    xhat = (x - mean) * lax.rsqrt(var + EPS)
    return xhat * g.reshape(1, -1, 1, 1) + b.reshape(1, -1, 1, 1)


def reference_forward(x, p):
    out = jax.nn.relu(_ref_bn(_ref_conv(x, p["w1"], 2, 0), p["g1"], p["b1"]))
    out = jax.nn.relu(_ref_bn(_ref_conv(out, p["w2"], 2, 1), p["g2"], p["b2"]))
    out = jax.nn.relu(_ref_bn(_ref_conv(out, p["w3"], 2, 1), p["g3"], p["b3"]))
    out = jax.nn.relu(_ref_conv(out, p["w4"], 2, 1) + p["b4"].reshape(1, 1, 1, 1))
    out = out.reshape(out.shape[0], -1)            # (N, 9)
    out = out @ p["wl"] + p["bl"]
    return jax.nn.sigmoid(out)


# ---------------------------------- main ------------------------------------ #

if __name__ == "__main__":
    key = jax.random.PRNGKey(0)
    k_x, k_p = jax.random.split(key)
    # Spatial size 28 is required by the architecture (Linear(9, 1) after conv4).
    x = jax.random.normal(k_x, (2, 4, 28, 28), jnp.float32)
    params = init_params(k_p)
    consts = build_kernel_consts(params, n=x.shape[0], h=28, w=28)

    fwd = jax.jit(discriminator_forward)
    out = jax.block_until_ready(fwd(x, consts))
    ref = jax.block_until_ready(reference_forward(x, params))

    assert out.shape == (2, 1), out.shape
    # Slightly relaxed tolerance: the sigmoid uses the EUP approximate
    # reciprocal (pl.reciprocal(..., approx=True)).
    assert jnp.allclose(out, ref, rtol=2e-3, atol=2e-3), (out, ref)
    print("KERNEL_OK")
</pallas_src>

<mosaic_0001>
module attributes {stable_mosaic.version = 11 : i64} {
  func.func @_fused_disc_kernel(%arg0: memref<338x64xf32, #tpu.memory_space<vmem>>, %arg1: memref<64x4xf32, #tpu.memory_space<vmem>>, %arg2: memref<1x4xf32, #tpu.memory_space<vmem>>, %arg3: memref<1x4xf32, #tpu.memory_space<vmem>>, %arg4: memref<9x98x338xf32, #tpu.memory_space<vmem>>, %arg5: memref<9x4x8xf32, #tpu.memory_space<vmem>>, %arg6: memref<1x8xf32, #tpu.memory_space<vmem>>, %arg7: memref<1x8xf32, #tpu.memory_space<vmem>>, %arg8: memref<9x32x98xf32, #tpu.memory_space<vmem>>, %arg9: memref<9x8x16xf32, #tpu.memory_space<vmem>>, %arg10: memref<1x16xf32, #tpu.memory_space<vmem>>, %arg11: memref<1x16xf32, #tpu.memory_space<vmem>>, %arg12: memref<4x18x32xf32, #tpu.memory_space<vmem>>, %arg13: memref<4x16x1xf32, #tpu.memory_space<vmem>>, %arg14: memref<1x1xf32, #tpu.memory_space<vmem>>, %arg15: memref<2x18xf32, #tpu.memory_space<vmem>>, %arg16: memref<1x1xf32, #tpu.memory_space<vmem>>, %arg17: memref<2x1xf32, #tpu.memory_space<vmem>>) attributes {dimension_semantics = [], scalar_prefetch = 0 : i64, scratch_operands = 0 : i64, tpu.core_type = #tpu.core_type<tc>} {
    %c0 = arith.constant 0 : index
    %c0_0 = arith.constant 0 : index
    %0 = vector.load %arg0[%c0, %c0_0] : memref<338x64xf32, #tpu.memory_space<vmem>>, vector<338x64xf32>
    %c0_1 = arith.constant 0 : index
    %c0_2 = arith.constant 0 : index
    %1 = vector.load %arg1[%c0_1, %c0_2] : memref<64x4xf32, #tpu.memory_space<vmem>>, vector<64x4xf32>
    %cst = arith.constant dense<0.000000e+00> : vector<338x4xf32>
    %2 = tpu.matmul %0, %1, %cst {dimension_numbers = #tpu.dot_dimension_numbers<[1], [0], [0], [1], [0, 0, 1, 1], [], []>} : vector<338x64xf32>, vector<64x4xf32>, vector<338x4xf32> -> vector<338x4xf32>
    %c0_3 = arith.constant 0 : index
    %c0_4 = arith.constant 0 : index
    %3 = vector.load %arg2[%c0_3, %c0_4] : memref<1x4xf32, #tpu.memory_space<vmem>>, vector<1x4xf32>
    %c0_5 = arith.constant 0 : index
    %c0_6 = arith.constant 0 : index
    %4 = vector.load %arg3[%c0_5, %c0_6] : memref<1x4xf32, #tpu.memory_space<vmem>>, vector<1x4xf32>
    %cst_7 = arith.constant dense<0.000000e+00> : vector<4xf32>
    %5 = vector.multi_reduction <add>, %2, %cst_7 [0] : vector<338x4xf32> to vector<4xf32>
    %6 = vector.shape_cast %5 : vector<4xf32> to vector<1x4xf32>
    %cst_8 = arith.constant 3.380000e+02 : f32
    %7 = vector.broadcast %cst_8 : f32 to vector<1x4xf32>
    %8 = arith.divf %6, %7 : vector<1x4xf32>
    %9 = vector.broadcast %8 : vector<1x4xf32> to vector<338x4xf32>
    %10 = arith.subf %2, %9 : vector<338x4xf32>
    %11 = arith.mulf %10, %10 : vector<338x4xf32>
    %cst_9 = arith.constant dense<0.000000e+00> : vector<4xf32>
    %12 = vector.multi_reduction <add>, %11, %cst_9 [0] : vector<338x4xf32> to vector<4xf32>
    %13 = vector.shape_cast %12 : vector<4xf32> to vector<1x4xf32>
    %cst_10 = arith.constant 3.380000e+02 : f32
    %14 = vector.broadcast %cst_10 : f32 to vector<1x4xf32>
    %15 = arith.divf %13, %14 : vector<1x4xf32>
    %16 = vector.broadcast %8 : vector<1x4xf32> to vector<338x4xf32>
    %17 = arith.subf %2, %16 : vector<338x4xf32>
    %cst_11 = arith.constant 9.99999974E-6 : f32
    %18 = vector.broadcast %cst_11 : f32 to vector<1x4xf32>
    %19 = arith.addf %15, %18 : vector<1x4xf32>
    %20 = math.rsqrt %19 : vector<1x4xf32>
    %21 = vector.broadcast %20 : vector<1x4xf32> to vector<338x4xf32>
    %22 = arith.mulf %17, %21 : vector<338x4xf32>
    %23 = vector.broadcast %3 : vector<1x4xf32> to vector<338x4xf32>
    %24 = arith.mulf %22, %23 : vector<338x4xf32>
    %25 = vector.broadcast %4 : vector<1x4xf32> to vector<338x4xf32>
    %26 = arith.addf %24, %25 : vector<338x4xf32>
    %cst_12 = arith.constant 0.000000e+00 : f32
    %27 = vector.broadcast %cst_12 : f32 to vector<338x4xf32>
    %28 = arith.maximumf %26, %27 : vector<338x4xf32>
    %c0_13 = arith.constant 0 : index
    %c0_14 = arith.constant 0 : index
    %c0_15 = arith.constant 0 : index
    %29 = vector.load %arg4[%c0_13, %c0_14, %c0_15] : memref<9x98x338xf32, #tpu.memory_space<vmem>>, vector<1x98x338xf32>
    %30 = vector.shape_cast %29 : vector<1x98x338xf32> to vector<98x338xf32>
    %cst_16 = arith.constant dense<0.000000e+00> : vector<98x4xf32>
    %31 = tpu.matmul %30, %28, %cst_16 {dimension_numbers = #tpu.dot_dimension_numbers<[1], [0], [0], [1], [0, 0, 1, 1], [], []>} : vector<98x338xf32>, vector<338x4xf32>, vector<98x4xf32> -> vector<98x4xf32>
    %c0_17 = arith.constant 0 : index
    %c0_18 = arith.constant 0 : index
    %c0_19 = arith.constant 0 : index
    %32 = vector.load %arg5[%c0_17, %c0_18, %c0_19] : memref<9x4x8xf32, #tpu.memory_space<vmem>>, vector<1x4x8xf32>
    %33 = vector.shape_cast %32 : vector<1x4x8xf32> to vector<4x8xf32>
    %cst_20 = arith.constant dense<0.000000e+00> : vector<98x8xf32>
    %34 = tpu.matmul %31, %33, %cst_20 {dimension_numbers = #tpu.dot_dimension_numbers<[1], [0], [0], [1], [0, 0, 1, 1], [], []>} : vector<98x4xf32>, vector<4x8xf32>, vector<98x8xf32> -> vector<98x8xf32>
    %c1 = arith.constant 1 : index
    %c0_21 = arith.constant 0 : index
    %c0_22 = arith.constant 0 : index
    %35 = vector.load %arg4[%c1, %c0_21, %c0_22] : memref<9x98x338xf32, #tpu.memory_space<vmem>>, vector<1x98x338xf32>
    %36 = vector.shape_cast %35 : vector<1x98x338xf32> to vector<98x338xf32>
    %cst_23 = arith.constant dense<0.000000e+00> : vector<98x4xf32>
    %37 = tpu.matmul %36, %28, %cst_23 {dimension_numbers = #tpu.dot_dimension_numbers<[1], [0], [0], [1], [0, 0, 1, 1], [], []>} : vector<98x338xf32>, vector<338x4xf32>, vector<98x4xf32> -> vector<98x4xf32>
    %c1_24 = arith.constant 1 : index
    %c0_25 = arith.constant 0 : index
    %c0_26 = arith.constant 0 : index
    %38 = vector.load %arg5[%c1_24, %c0_25, %c0_26] : memref<9x4x8xf32, #tpu.memory_space<vmem>>, vector<1x4x8xf32>
    %39 = vector.shape_cast %38 : vector<1x4x8xf32> to vector<4x8xf32>
    %cst_27 = arith.constant dense<0.000000e+00> : vector<98x8xf32>
    %40 = tpu.matmul %37, %39, %cst_27 {dimension_numbers = #tpu.dot_dimension_numbers<[1], [0], [0], [1], [0, 0, 1, 1], [], []>} : vector<98x4xf32>, vector<4x8xf32>, vector<98x8xf32> -> vector<98x8xf32>
    %41 = arith.addf %34, %40 : vector<98x8xf32>
    %c2 = arith.constant 2 : index
    %c0_28 = arith.constant 0 : index
    %c0_29 = arith.constant 0 : index
    %42 = vector.load %arg4[%c2, %c0_28, %c0_29] : memref<9x98x338xf32, #tpu.memory_space<vmem>>, vector<1x98x338xf32>
    %43 = vector.shape_cast %42 : vector<1x98x338xf32> to vector<98x338xf32>
    %cst_30 = arith.constant dense<0.000000e+00> : vector<98x4xf32>
    %44 = tpu.matmul %43, %28, %cst_30 {dimension_numbers = #tpu.dot_dimension_numbers<[1], [0], [0], [1], [0, 0, 1, 1], [], []>} : vector<98x338xf32>, vector<338x4xf32>, vector<98x4xf32> -> vector<98x4xf32>
    %c2_31 = arith.constant 2 : index
    %c0_32 = arith.constant 0 : index
    %c0_33 = arith.constant 0 : index
    %45 = vector.load %arg5[%c2_31, %c0_32, %c0_33] : memref<9x4x8xf32, #tpu.memory_space<vmem>>, vector<1x4x8xf32>
    %46 = vector.shape_cast %45 : vector<1x4x8xf32> to vector<4x8xf32>
    %cst_34 = arith.constant dense<0.000000e+00> : vector<98x8xf32>
    %47 = tpu.matmul %44, %46, %cst_34 {dimension_numbers = #tpu.dot_dimension_numbers<[1], [0], [0], [1], [0, 0, 1, 1], [], []>} : vector<98x4xf32>, vector<4x8xf32>, vector<98x8xf32> -> vector<98x8xf32>
    %48 = arith.addf %41, %47 : vector<98x8xf32>
    %c3 = arith.constant 3 : index
    %c0_35 = arith.constant 0 : index
    %c0_36 = arith.constant 0 : index
    %49 = vector.load %arg4[%c3, %c0_35, %c0_36] : memref<9x98x338xf32, #tpu.memory_space<vmem>>, vector<1x98x338xf32>
    %50 = vector.shape_cast %49 : vector<1x98x338xf32> to vector<98x338xf32>
    %cst_37 = arith.constant dense<0.000000e+00> : vector<98x4xf32>
    %51 = tpu.matmul %50, %28, %cst_37 {dimension_numbers = #tpu.dot_dimension_numbers<[1], [0], [0], [1], [0, 0, 1, 1], [], []>} : vector<98x338xf32>, vector<338x4xf32>, vector<98x4xf32> -> vector<98x4xf32>
    %c3_38 = arith.constant 3 : index
    %c0_39 = arith.constant 0 : index
    %c0_40 = arith.constant 0 : index
    %52 = vector.load %arg5[%c3_38, %c0_39, %c0_40] : memref<9x4x8xf32, #tpu.memory_space<vmem>>, vector<1x4x8xf32>
    %53 = vector.shape_cast %52 : vector<1x4x8xf32> to vector<4x8xf32>
    %cst_41 = arith.constant dense<0.000000e+00> : vector<98x8xf32>
    %54 = tpu.matmul %51, %53, %cst_41 {dimension_numbers = #tpu.dot_dimension_numbers<[1], [0], [0], [1], [0, 0, 1, 1], [], []>} : vector<98x4xf32>, vector<4x8xf32>, vector<98x8xf32> -> vector<98x8xf32>
    %55 = arith.addf %48, %54 : vector<98x8xf32>
    %c4 = arith.constant 4 : index
    %c0_42 = arith.constant 0 : index
    %c0_43 = arith.constant 0 : index
    %56 = vector.load %arg4[%c4, %c0_42, %c0_43] : memref<9x98x338xf32, #tpu.memory_space<vmem>>, vector<1x98x338xf32>
    %57 = vector.shape_cast %56 : vector<1x98x338xf32> to vector<98x338xf32>
    %cst_44 = arith.constant dense<0.000000e+00> : vector<98x4xf32>
    %58 = tpu.matmul %57, %28, %cst_44 {dimension_numbers = #tpu.dot_dimension_numbers<[1], [0], [0], [1], [0, 0, 1, 1], [], []>} : vector<98x338xf32>, vector<338x4xf32>, vector<98x4xf32> -> vector<98x4xf32>
    %c4_45 = arith.constant 4 : index
    %c0_46 = arith.constant 0 : index
    %c0_47 = arith.constant 0 : index
    %59 = vector.load %arg5[%c4_45, %c0_46, %c0_47] : memref<9x4x8xf32, #tpu.memory_space<vmem>>, vector<1x4x8xf32>
    %60 = vector.shape_cast %59 : vector<1x4x8xf32> to vector<4x8xf32>
    %cst_48 = arith.constant dense<0.000000e+00> : vector<98x8xf32>
    %61 = tpu.matmul %58, %60, %cst_48 {dimension_numbers = #tpu.dot_dimension_numbers<[1], [0], [0], [1], [0, 0, 1, 1], [], []>} : vector<98x4xf32>, vector<4x8xf32>, vector<98x8xf32> -> vector<98x8xf32>
    %62 = arith.addf %55, %61 : vector<98x8xf32>
    %c5 = arith.constant 5 : index
    %c0_49 = arith.constant 0 : index
    %c0_50 = arith.constant 0 : index
    %63 = vector.load %arg4[%c5, %c0_49, %c0_50] : memref<9x98x338xf32, #tpu.memory_space<vmem>>, vector<1x98x338xf32>
    %64 = vector.shape_cast %63 : vector<1x98x338xf32> to vector<98x338xf32>
    %cst_51 = arith.constant dense<0.000000e+00> : vector<98x4xf32>
    %65 = tpu.matmul %64, %28, %cst_51 {dimension_numbers = #tpu.dot_dimension_numbers<[1], [0], [0], [1], [0, 0, 1, 1], [], []>} : vector<98x338xf32>, vector<338x4xf32>, vector<98x4xf32> -> vector<98x4xf32>
    %c5_52 = arith.constant 5 : index
    %c0_53 = arith.constant 0 : index
    %c0_54 = arith.constant 0 : index
    %66 = vector.load %arg5[%c5_52, %c0_53, %c0_54] : memref<9x4x8xf32, #tpu.memory_space<vmem>>, vector<1x4x8xf32>
    %67 = vector.shape_cast %66 : vector<1x4x8xf32> to vector<4x8xf32>
    %cst_55 = arith.constant dense<0.000000e+00> : vector<98x8xf32>
    %68 = tpu.matmul %65, %67, %cst_55 {dimension_numbers = #tpu.dot_dimension_numbers<[1], [0], [0], [1], [0, 0, 1, 1], [], []>} : vector<98x4xf32>, vector<4x8xf32>, vector<98x8xf32> -> vector<98x8xf32>
    %69 = arith.addf %62, %68 : vector<98x8xf32>
    %c6 = arith.constant 6 : index
    %c0_56 = arith.constant 0 : index
    %c0_57 = arith.constant 0 : index
    %70 = vector.load %arg4[%c6, %c0_56, %c0_57] : memref<9x98x338xf32, #tpu.memory_space<vmem>>, vector<1x98x338xf32>
    %71 = vector.shape_cast %70 : vector<1x98x338xf32> to vector<98x338xf32>
    %cst_58 = arith.constant dense<0.000000e+00> : vector<98x4xf32>
    %72 = tpu.matmul %71, %28, %cst_58 {dimension_numbers = #tpu.dot_dimension_numbers<[1], [0], [0], [1], [0, 0, 1, 1], [], []>} : vector<98x338xf32>, vector<338x4xf32>, vector<98x4xf32> -> vector<98x4xf32>
    %c6_59 = arith.constant 6 : index
    %c0_60 = arith.constant 0 : index
    %c0_61 = arith.constant 0 : index
    %73 = vector.load %arg5[%c6_59, %c0_60, %c0_61] : memref<9x4x8xf32, #tpu.memory_space<vmem>>, vector<1x4x8xf32>
    %74 = vector.shape_cast %73 : vector<1x4x8xf32> to vector<4x8xf32>
    %cst_62 = arith.constant dense<0.000000e+00> : vector<98x8xf32>
    %75 = tpu.matmul %72, %74, %cst_62 {dimension_numbers = #tpu.dot_dimension_numbers<[1], [0], [0], [1], [0, 0, 1, 1], [], []>} : vector<98x4xf32>, vector<4x8xf32>, vector<98x8xf32> -> vector<98x8xf32>
    %76 = arith.addf %69, %75 : vector<98x8xf32>
    %c7 = arith.constant 7 : index
    %c0_63 = arith.constant 0 : index
    %c0_64 = arith.constant 0 : index
    %77 = vector.load %arg4[%c7, %c0_63, %c0_64] : memref<9x98x338xf32, #tpu.memory_space<vmem>>, vector<1x98x338xf32>
    %78 = vector.shape_cast %77 : vector<1x98x338xf32> to vector<98x338xf32>
    %cst_65 = arith.constant dense<0.000000e+00> : vector<98x4xf32>
    %79 = tpu.matmul %78, %28, %cst_65 {dimension_numbers = #tpu.dot_dimension_numbers<[1], [0], [0], [1], [0, 0, 1, 1], [], []>} : vector<98x338xf32>, vector<338x4xf32>, vector<98x4xf32> -> vector<98x4xf32>
    %c7_66 = arith.constant 7 : index
    %c0_67 = arith.constant 0 : index
    %c0_68 = arith.constant 0 : index
    %80 = vector.load %arg5[%c7_66, %c0_67, %c0_68] : memref<9x4x8xf32, #tpu.memory_space<vmem>>, vector<1x4x8xf32>
    %81 = vector.shape_cast %80 : vector<1x4x8xf32> to vector<4x8xf32>
    %cst_69 = arith.constant dense<0.000000e+00> : vector<98x8xf32>
    %82 = tpu.matmul %79, %81, %cst_69 {dimension_numbers = #tpu.dot_dimension_numbers<[1], [0], [0], [1], [0, 0, 1, 1], [], []>} : vector<98x4xf32>, vector<4x8xf32>, vector<98x8xf32> -> vector<98x8xf32>
    %83 = arith.addf %76, %82 : vector<98x8xf32>
    %c8 = arith.constant 8 : index
    %c0_70 = arith.constant 0 : index
    %c0_71 = arith.constant 0 : index
    %84 = vector.load %arg4[%c8, %c0_70, %c0_71] : memref<9x98x338xf32, #tpu.memory_space<vmem>>, vector<1x98x338xf32>
    %85 = vector.shape_cast %84 : vector<1x98x338xf32> to vector<98x338xf32>
    %cst_72 = arith.constant dense<0.000000e+00> : vector<98x4xf32>
    %86 = tpu.matmul %85, %28, %cst_72 {dimension_numbers = #tpu.dot_dimension_numbers<[1], [0], [0], [1], [0, 0, 1, 1], [], []>} : vector<98x338xf32>, vector<338x4xf32>, vector<98x4xf32> -> vector<98x4xf32>
    %c8_73 = arith.constant 8 : index
    %c0_74 = arith.constant 0 : index
    %c0_75 = arith.constant 0 : index
    %87 = vector.load %arg5[%c8_73, %c0_74, %c0_75] : memref<9x4x8xf32, #tpu.memory_space<vmem>>, vector<1x4x8xf32>
    %88 = vector.shape_cast %87 : vector<1x4x8xf32> to vector<4x8xf32>
    %cst_76 = arith.constant dense<0.000000e+00> : vector<98x8xf32>
    %89 = tpu.matmul %86, %88, %cst_76 {dimension_numbers = #tpu.dot_dimension_numbers<[1], [0], [0], [1], [0, 0, 1, 1], [], []>} : vector<98x4xf32>, vector<4x8xf32>, vector<98x8xf32> -> vector<98x8xf32>
    %90 = arith.addf %83, %89 : vector<98x8xf32>
    %c0_77 = arith.constant 0 : index
    %c0_78 = arith.constant 0 : index
    %91 = vector.load %arg6[%c0_77, %c0_78] : memref<1x8xf32, #tpu.memory_space<vmem>>, vector<1x8xf32>
    %c0_79 = arith.constant 0 : index
    %c0_80 = arith.constant 0 : index
    %92 = vector.load %arg7[%c0_79, %c0_80] : memref<1x8xf32, #tpu.memory_space<vmem>>, vector<1x8xf32>
    %cst_81 = arith.constant dense<0.000000e+00> : vector<8xf32>
    %93 = vector.multi_reduction <add>, %90, %cst_81 [0] : vector<98x8xf32> to vector<8xf32>
    %94 = vector.shape_cast %93 : vector<8xf32> to vector<1x8xf32>
    %cst_82 = arith.constant 9.800000e+01 : f32
    %95 = vector.broadcast %cst_82 : f32 to vector<1x8xf32>
    %96 = arith.divf %94, %95 : vector<1x8xf32>
    %97 = vector.broadcast %96 : vector<1x8xf32> to vector<98x8xf32>
    %98 = arith.subf %90, %97 : vector<98x8xf32>
    %99 = arith.mulf %98, %98 : vector<98x8xf32>
    %cst_83 = arith.constant dense<0.000000e+00> : vector<8xf32>
    %100 = vector.multi_reduction <add>, %99, %cst_83 [0] : vector<98x8xf32> to vector<8xf32>
    %101 = vector.shape_cast %100 : vector<8xf32> to vector<1x8xf32>
    %cst_84 = arith.constant 9.800000e+01 : f32
    %102 = vector.broadcast %cst_84 : f32 to vector<1x8xf32>
    %103 = arith.divf %101, %102 : vector<1x8xf32>
    %104 = vector.broadcast %96 : vector<1x8xf32> to vector<98x8xf32>
    %105 = arith.subf %90, %104 : vector<98x8xf32>
    %cst_85 = arith.constant 9.99999974E-6 : f32
    %106 = vector.broadcast %cst_85 : f32 to vector<1x8xf32>
    %107 = arith.addf %103, %106 : vector<1x8xf32>
    %108 = math.rsqrt %107 : vector<1x8xf32>
    %109 = vector.broadcast %108 : vector<1x8xf32> to vector<98x8xf32>
    %110 = arith.mulf %105, %109 : vector<98x8xf32>
    %111 = vector.broadcast %91 : vector<1x8xf32> to vector<98x8xf32>
    %112 = arith.mulf %110, %111 : vector<98x8xf32>
    %113 = vector.broadcast %92 : vector<1x8xf32> to vector<98x8xf32>
    %114 = arith.addf %112, %113 : vector<98x8xf32>
    %cst_86 = arith.constant 0.000000e+00 : f32
    %115 = vector.broadcast %cst_86 : f32 to vector<98x8xf32>
    %116 = arith.maximumf %114, %115 : vector<98x8xf32>
    %c0_87 = arith.constant 0 : index
    %c0_88 = arith.constant 0 : index
    %c0_89 = arith.constant 0 : index
    %117 = vector.load %arg8[%c0_87, %c0_88, %c0_89] : memref<9x32x98xf32, #tpu.memory_space<vmem>>, vector<1x32x98xf32>
    %118 = vector.shape_cast %117 : vector<1x32x98xf32> to vector<32x98xf32>
    %cst_90 = arith.constant dense<0.000000e+00> : vector<32x8xf32>
    %119 = tpu.matmul %118, %116, %cst_90 {dimension_numbers = #tpu.dot_dimension_numbers<[1], [0], [0], [1], [0, 0, 1, 1], [], []>} : vector<32x98xf32>, vector<98x8xf32>, vector<32x8xf32> -> vector<32x8xf32>
    %c0_91 = arith.constant 0 : index
    %c0_92 = arith.constant 0 : index
    %c0_93 = arith.constant 0 : index
    %120 = vector.load %arg9[%c0_91, %c0_92, %c0_93] : memref<9x8x16xf32, #tpu.memory_space<vmem>>, vector<1x8x16xf32>
    %121 = vector.shape_cast %120 : vector<1x8x16xf32> to vector<8x16xf32>
    %cst_94 = arith.constant dense<0.000000e+00> : vector<32x16xf32>
    %122 = tpu.matmul %119, %121, %cst_94 {dimension_numbers = #tpu.dot_dimension_numbers<[1], [0], [0], [1], [0, 0, 1, 1], [], []>} : vector<32x8xf32>, vector<8x16xf32>, vector<32x16xf32> -> vector<32x16xf32>
    %c1_95 = arith.constant 1 : index
    %c0_96 = arith.constant 0 : index
    %c0_97 = arith.constant 0 : index
    %123 = vector.load %arg8[%c1_95, %c0_96, %c0_97] : memref<9x32x98xf32, #tpu.memory_space<vmem>>, vector<1x32x98xf32>
    %124 = vector.shape_cast %123 : vector<1x32x98xf32> to vector<32x98xf32>
    %cst_98 = arith.constant dense<0.000000e+00> : vector<32x8xf32>
    %125 = tpu.matmul %124, %116, %cst_98 {dimension_numbers = #tpu.dot_dimension_numbers<[1], [0], [0], [1], [0, 0, 1, 1], [], []>} : vector<32x98xf32>, vector<98x8xf32>, vector<32x8xf32> -> vector<32x8xf32>
    %c1_99 = arith.constant 1 : index
    %c0_100 = arith.constant 0 : index
    %c0_101 = arith.constant 0 : index
    %126 = vector.load %arg9[%c1_99, %c0_100, %c0_101] : memref<9x8x16xf32, #tpu.memory_space<vmem>>, vector<1x8x16xf32>
    %127 = vector.shape_cast %126 : vector<1x8x16xf32> to vector<8x16xf32>
    %cst_102 = arith.constant dense<0.000000e+00> : vector<32x16xf32>
    %128 = tpu.matmul %125, %127, %cst_102 {dimension_numbers = #tpu.dot_dimension_numbers<[1], [0], [0], [1], [0, 0, 1, 1], [], []>} : vector<32x8xf32>, vector<8x16xf32>, vector<32x16xf32> -> vector<32x16xf32>
    %129 = arith.addf %122, %128 : vector<32x16xf32>
    %c2_103 = arith.constant 2 : index
    %c0_104 = arith.constant 0 : index
    %c0_105 = arith.constant 0 : index
    %130 = vector.load %arg8[%c2_103, %c0_104, %c0_105] : memref<9x32x98xf32, #tpu.memory_space<vmem>>, vector<1x32x98xf32>
    %131 = vector.shape_cast %130 : vector<1x32x98xf32> to vector<32x98xf32>
    %cst_106 = arith.constant dense<0.000000e+00> : vector<32x8xf32>
    %132 = tpu.matmul %131, %116, %cst_106 {dimension_numbers = #tpu.dot_dimension_numbers<[1], [0], [0], [1], [0, 0, 1, 1], [], []>} : vector<32x98xf32>, vector<98x8xf32>, vector<32x8xf32> -> vector<32x8xf32>
    %c2_107 = arith.constant 2 : index
    %c0_108 = arith.constant 0 : index
    %c0_109 = arith.constant 0 : index
    %133 = vector.load %arg9[%c2_107, %c0_108, %c0_109] : memref<9x8x16xf32, #tpu.memory_space<vmem>>, vector<1x8x16xf32>
    %134 = vector.shape_cast %133 : vector<1x8x16xf32> to vector<8x16xf32>
    %cst_110 = arith.constant dense<0.000000e+00> : vector<32x16xf32>
    %135 = tpu.matmul %132, %134, %cst_110 {dimension_numbers = #tpu.dot_dimension_numbers<[1], [0], [0], [1], [0, 0, 1, 1], [], []>} : vector<32x8xf32>, vector<8x16xf32>, vector<32x16xf32> -> vector<32x16xf32>
    %136 = arith.addf %129, %135 : vector<32x16xf32>
    %c3_111 = arith.constant 3 : index
    %c0_112 = arith.constant 0 : index
    %c0_113 = arith.constant 0 : index
    %137 = vector.load %arg8[%c3_111, %c0_112, %c0_113] : memref<9x32x98xf32, #tpu.memory_space<vmem>>, vector<1x32x98xf32>
    %138 = vector.shape_cast %137 : vector<1x32x98xf32> to vector<32x98xf32>
    %cst_114 = arith.constant dense<0.000000e+00> : vector<32x8xf32>
    %139 = tpu.matmul %138, %116, %cst_114 {dimension_numbers = #tpu.dot_dimension_numbers<[1], [0], [0], [1], [0, 0, 1, 1], [], []>} : vector<32x98xf32>, vector<98x8xf32>, vector<32x8xf32> -> vector<32x8xf32>
    %c3_115 = arith.constant 3 : index
    %c0_116 = arith.constant 0 : index
    %c0_117 = arith.constant 0 : index
    %140 = vector.load %arg9[%c3_115, %c0_116, %c0_117] : memref<9x8x16xf32, #tpu.memory_space<vmem>>, vector<1x8x16xf32>
    %141 = vector.shape_cast %140 : vector<1x8x16xf32> to vector<8x16xf32>
    %cst_118 = arith.constant dense<0.000000e+00> : vector<32x16xf32>
    %142 = tpu.matmul %139, %141, %cst_118 {dimension_numbers = #tpu.dot_dimension_numbers<[1], [0], [0], [1], [0, 0, 1, 1], [], []>} : vector<32x8xf32>, vector<8x16xf32>, vector<32x16xf32> -> vector<32x16xf32>
    %143 = arith.addf %136, %142 : vector<32x16xf32>
    %c4_119 = arith.constant 4 : index
    %c0_120 = arith.constant 0 : index
    %c0_121 = arith.constant 0 : index
    %144 = vector.load %arg8[%c4_119, %c0_120, %c0_121] : memref<9x32x98xf32, #tpu.memory_space<vmem>>, vector<1x32x98xf32>
    %145 = vector.shape_cast %144 : vector<1x32x98xf32> to vector<32x98xf32>
    %cst_122 = arith.constant dense<0.000000e+00> : vector<32x8xf32>
    %146 = tpu.matmul %145, %116, %cst_122 {dimension_numbers = #tpu.dot_dimension_numbers<[1], [0], [0], [1], [0, 0, 1, 1], [], []>} : vector<32x98xf32>, vector<98x8xf32>, vector<32x8xf32> -> vector<32x8xf32>
    %c4_123 = arith.constant 4 : index
    %c0_124 = arith.constant 0 : index
    %c0_125 = arith.constant 0 : index
    %147 = vector.load %arg9[%c4_123, %c0_124, %c0_125] : memref<9x8x16xf32, #tpu.memory_space<vmem>>, vector<1x8x16xf32>
    %148 = vector.shape_cast %147 : vector<1x8x16xf32> to vector<8x16xf32>
    %cst_126 = arith.constant dense<0.000000e+00> : vector<32x16xf32>
    %149 = tpu.matmul %146, %148, %cst_126 {dimension_numbers = #tpu.dot_dimension_numbers<[1], [0], [0], [1], [0, 0, 1, 1], [], []>} : vector<32x8xf32>, vector<8x16xf32>, vector<32x16xf32> -> vector<32x16xf32>
    %150 = arith.addf %143, %149 : vector<32x16xf32>
    %c5_127 = arith.constant 5 : index
    %c0_128 = arith.constant 0 : index
    %c0_129 = arith.constant 0 : index
    %151 = vector.load %arg8[%c5_127, %c0_128, %c0_129] : memref<9x32x98xf32, #tpu.memory_space<vmem>>, vector<1x32x98xf32>
    %152 = vector.shape_cast %151 : vector<1x32x98xf32> to vector<32x98xf32>
    %cst_130 = arith.constant dense<0.000000e+00> : vector<32x8xf32>
    %153 = tpu.matmul %152, %116, %cst_130 {dimension_numbers = #tpu.dot_dimension_numbers<[1], [0], [0], [1], [0, 0, 1, 1], [], []>} : vector<32x98xf32>, vector<98x8xf32>, vector<32x8xf32> -> vector<32x8xf32>
    %c5_131 = arith.constant 5 : index
    %c0_132 = arith.constant 0 : index
    %c0_133 = arith.constant 0 : index
    %154 = vector.load %arg9[%c5_131, %c0_132, %c0_133] : memref<9x8x16xf32, #tpu.memory_space<vmem>>, vector<1x8x16xf32>
    %155 = vector.shape_cast %154 : vector<1x8x16xf32> to vector<8x16xf32>
    %cst_134 = arith.constant dense<0.000000e+00> : vector<32x16xf32>
    %156 = tpu.matmul %153, %155, %cst_134 {dimension_numbers = #tpu.dot_dimension_numbers<[1], [0], [0], [1], [0, 0, 1, 1], [], []>} : vector<32x8xf32>, vector<8x16xf32>, vector<32x16xf32> -> vector<32x16xf32>
    %157 = arith.addf %150, %156 : vector<32x16xf32>
    %c6_135 = arith.constant 6 : index
    %c0_136 = arith.constant 0 : index
    %c0_137 = arith.constant 0 : index
    %158 = vector.load %arg8[%c6_135, %c0_136, %c0_137] : memref<9x32x98xf32, #tpu.memory_space<vmem>>, vector<1x32x98xf32>
    %159 = vector.shape_cast %158 : vector<1x32x98xf32> to vector<32x98xf32>
    %cst_138 = arith.constant dense<0.000000e+00> : vector<32x8xf32>
    %160 = tpu.matmul %159, %116, %cst_138 {dimension_numbers = #tpu.dot_dimension_numbers<[1], [0], [0], [1], [0, 0, 1, 1], [], []>} : vector<32x98xf32>, vector<98x8xf32>, vector<32x8xf32> -> vector<32x8xf32>
    %c6_139 = arith.constant 6 : index
    %c0_140 = arith.constant 0 : index
    %c0_141 = arith.constant 0 : index
    %161 = vector.load %arg9[%c6_139, %c0_140, %c0_141] : memref<9x8x16xf32, #tpu.memory_space<vmem>>, vector<1x8x16xf32>
    %162 = vector.shape_cast %161 : vector<1x8x16xf32> to vector<8x16xf32>
    %cst_142 = arith.constant dense<0.000000e+00> : vector<32x16xf32>
    %163 = tpu.matmul %160, %162, %cst_142 {dimension_numbers = #tpu.dot_dimension_numbers<[1], [0], [0], [1], [0, 0, 1, 1], [], []>} : vector<32x8xf32>, vector<8x16xf32>, vector<32x16xf32> -> vector<32x16xf32>
    %164 = arith.addf %157, %163 : vector<32x16xf32>
    %c7_143 = arith.constant 7 : index
    %c0_144 = arith.constant 0 : index
    %c0_145 = arith.constant 0 : index
    %165 = vector.load %arg8[%c7_143, %c0_144, %c0_145] : memref<9x32x98xf32, #tpu.memory_space<vmem>>, vector<1x32x98xf32>
    %166 = vector.shape_cast %165 : vector<1x32x98xf32> to vector<32x98xf32>
    %cst_146 = arith.constant dense<0.000000e+00> : vector<32x8xf32>
    %167 = tpu.matmul %166, %116, %cst_146 {dimension_numbers = #tpu.dot_dimension_numbers<[1], [0], [0], [1], [0, 0, 1, 1], [], []>} : vector<32x98xf32>, vector<98x8xf32>, vector<32x8xf32> -> vector<32x8xf32>
    %c7_147 = arith.constant 7 : index
    %c0_148 = arith.constant 0 : index
    %c0_149 = arith.constant 0 : index
    %168 = vector.load %arg9[%c7_147, %c0_148, %c0_149] : memref<9x8x16xf32, #tpu.memory_space<vmem>>, vector<1x8x16xf32>
    %169 = vector.shape_cast %168 : vector<1x8x16xf32> to vector<8x16xf32>
    %cst_150 = arith.constant dense<0.000000e+00> : vector<32x16xf32>
    %170 = tpu.matmul %167, %169, %cst_150 {dimension_numbers = #tpu.dot_dimension_numbers<[1], [0], [0], [1], [0, 0, 1, 1], [], []>} : vector<32x8xf32>, vector<8x16xf32>, vector<32x16xf32> -> vector<32x16xf32>
    %171 = arith.addf %164, %170 : vector<32x16xf32>
    %c8_151 = arith.constant 8 : index
    %c0_152 = arith.constant 0 : index
    %c0_153 = arith.constant 0 : index
    %172 = vector.load %arg8[%c8_151, %c0_152, %c0_153] : memref<9x32x98xf32, #tpu.memory_space<vmem>>, vector<1x32x98xf32>
    %173 = vector.shape_cast %172 : vector<1x32x98xf32> to vector<32x98xf32>
    %cst_154 = arith.constant dense<0.000000e+00> : vector<32x8xf32>
    %174 = tpu.matmul %173, %116, %cst_154 {dimension_numbers = #tpu.dot_dimension_numbers<[1], [0], [0], [1], [0, 0, 1, 1], [], []>} : vector<32x98xf32>, vector<98x8xf32>, vector<32x8xf32> -> vector<32x8xf32>
    %c8_155 = arith.constant 8 : index
    %c0_156 = arith.constant 0 : index
    %c0_157 = arith.constant 0 : index
    %175 = vector.load %arg9[%c8_155, %c0_156, %c0_157] : memref<9x8x16xf32, #tpu.memory_space<vmem>>, vector<1x8x16xf32>
    %176 = vector.shape_cast %175 : vector<1x8x16xf32> to vector<8x16xf32>
    %cst_158 = arith.constant dense<0.000000e+00> : vector<32x16xf32>
    %177 = tpu.matmul %174, %176, %cst_158 {dimension_numbers = #tpu.dot_dimension_numbers<[1], [0], [0], [1], [0, 0, 1, 1], [], []>} : vector<32x8xf32>, vector<8x16xf32>, vector<32x16xf32> -> vector<32x16xf32>
    %178 = arith.addf %171, %177 : vector<32x16xf32>
    %c0_159 = arith.constant 0 : index
    %c0_160 = arith.constant 0 : index
    %179 = vector.load %arg10[%c0_159, %c0_160] : memref<1x16xf32, #tpu.memory_space<vmem>>, vector<1x16xf32>
    %c0_161 = arith.constant 0 : index
    %c0_162 = arith.constant 0 : index
    %180 = vector.load %arg11[%c0_161, %c0_162] : memref<1x16xf32, #tpu.memory_space<vmem>>, vector<1x16xf32>
    %cst_163 = arith.constant dense<0.000000e+00> : vector<16xf32>
    %181 = vector.multi_reduction <add>, %178, %cst_163 [0] : vector<32x16xf32> to vector<16xf32>
    %182 = vector.shape_cast %181 : vector<16xf32> to vector<1x16xf32>
    %cst_164 = arith.constant 3.200000e+01 : f32
    %183 = vector.broadcast %cst_164 : f32 to vector<1x16xf32>
    %184 = arith.divf %182, %183 : vector<1x16xf32>
    %185 = vector.broadcast %184 : vector<1x16xf32> to vector<32x16xf32>
    %186 = arith.subf %178, %185 : vector<32x16xf32>
    %187 = arith.mulf %186, %186 : vector<32x16xf32>
    %cst_165 = arith.constant dense<0.000000e+00> : vector<16xf32>
    %188 = vector.multi_reduction <add>, %187, %cst_165 [0] : vector<32x16xf32> to vector<16xf32>
    %189 = vector.shape_cast %188 : vector<16xf32> to vector<1x16xf32>
    %cst_166 = arith.constant 3.200000e+01 : f32
    %190 = vector.broadcast %cst_166 : f32 to vector<1x16xf32>
    %191 = arith.divf %189, %190 : vector<1x16xf32>
    %192 = vector.broadcast %184 : vector<1x16xf32> to vector<32x16xf32>
    %193 = arith.subf %178, %192 : vector<32x16xf32>
    %cst_167 = arith.constant 9.99999974E-6 : f32
    %194 = vector.broadcast %cst_167 : f32 to vector<1x16xf32>
    %195 = arith.addf %191, %194 : vector<1x16xf32>
    %196 = math.rsqrt %195 : vector<1x16xf32>
    %197 = vector.broadcast %196 : vector<1x16xf32> to vector<32x16xf32>
    %198 = arith.mulf %193, %197 : vector<32x16xf32>
    %199 = vector.broadcast %179 : vector<1x16xf32> to vector<32x16xf32>
    %200 = arith.mulf %198, %199 : vector<32x16xf32>
    %201 = vector.broadcast %180 : vector<1x16xf32> to vector<32x16xf32>
    %202 = arith.addf %200, %201 : vector<32x16xf32>
    %cst_168 = arith.constant 0.000000e+00 : f32
    %203 = vector.broadcast %cst_168 : f32 to vector<32x16xf32>
    %204 = arith.maximumf %202, %203 : vector<32x16xf32>
    %c0_169 = arith.constant 0 : index
    %c0_170 = arith.constant 0 : index
    %c0_171 = arith.constant 0 : index
    %205 = vector.load %arg12[%c0_169, %c0_170, %c0_171] : memref<4x18x32xf32, #tpu.memory_space<vmem>>, vector<1x18x32xf32>
    %206 = vector.shape_cast %205 : vector<1x18x32xf32> to vector<18x32xf32>
    %cst_172 = arith.constant dense<0.000000e+00> : vector<18x16xf32>
    %207 = tpu.matmul %206, %204, %cst_172 {dimension_numbers = #tpu.dot_dimension_numbers<[1], [0], [0], [1], [0, 0, 1, 1], [], []>} : vector<18x32xf32>, vector<32x16xf32>, vector<18x16xf32> -> vector<18x16xf32>
    %c0_173 = arith.constant 0 : index
    %c0_174 = arith.constant 0 : index
    %c0_175 = arith.constant 0 : index
    %208 = vector.load %arg13[%c0_173, %c0_174, %c0_175] : memref<4x16x1xf32, #tpu.memory_space<vmem>>, vector<1x16x1xf32>
    %209 = vector.shape_cast %208 : vector<1x16x1xf32> to vector<16x1xf32>
    %cst_176 = arith.constant dense<0.000000e+00> : vector<18x1xf32>
    %210 = tpu.matmul %207, %209, %cst_176 {dimension_numbers = #tpu.dot_dimension_numbers<[1], [0], [0], [1], [0, 0, 1, 1], [], []>} : vector<18x16xf32>, vector<16x1xf32>, vector<18x1xf32> -> vector<18x1xf32>
    %c1_177 = arith.constant 1 : index
    %c0_178 = arith.constant 0 : index
    %c0_179 = arith.constant 0 : index
    %211 = vector.load %arg12[%c1_177, %c0_178, %c0_179] : memref<4x18x32xf32, #tpu.memory_space<vmem>>, vector<1x18x32xf32>
    %212 = vector.shape_cast %211 : vector<1x18x32xf32> to vector<18x32xf32>
    %cst_180 = arith.constant dense<0.000000e+00> : vector<18x16xf32>
    %213 = tpu.matmul %212, %204, %cst_180 {dimension_numbers = #tpu.dot_dimension_numbers<[1], [0], [0], [1], [0, 0, 1, 1], [], []>} : vector<18x32xf32>, vector<32x16xf32>, vector<18x16xf32> -> vector<18x16xf32>
    %c1_181 = arith.constant 1 : index
    %c0_182 = arith.constant 0 : index
    %c0_183 = arith.constant 0 : index
    %214 = vector.load %arg13[%c1_181, %c0_182, %c0_183] : memref<4x16x1xf32, #tpu.memory_space<vmem>>, vector<1x16x1xf32>
    %215 = vector.shape_cast %214 : vector<1x16x1xf32> to vector<16x1xf32>
    %cst_184 = arith.constant dense<0.000000e+00> : vector<18x1xf32>
    %216 = tpu.matmul %213, %215, %cst_184 {dimension_numbers = #tpu.dot_dimension_numbers<[1], [0], [0], [1], [0, 0, 1, 1], [], []>} : vector<18x16xf32>, vector<16x1xf32>, vector<18x1xf32> -> vector<18x1xf32>
    %217 = arith.addf %210, %216 : vector<18x1xf32>
    %c2_185 = arith.constant 2 : index
    %c0_186 = arith.constant 0 : index
    %c0_187 = arith.constant 0 : index
    %218 = vector.load %arg12[%c2_185, %c0_186, %c0_187] : memref<4x18x32xf32, #tpu.memory_space<vmem>>, vector<1x18x32xf32>
    %219 = vector.shape_cast %218 : vector<1x18x32xf32> to vector<18x32xf32>
    %cst_188 = arith.constant dense<0.000000e+00> : vector<18x16xf32>
    %220 = tpu.matmul %219, %204, %cst_188 {dimension_numbers = #tpu.dot_dimension_numbers<[1], [0], [0], [1], [0, 0, 1, 1], [], []>} : vector<18x32xf32>, vector<32x16xf32>, vector<18x16xf32> -> vector<18x16xf32>
    %c2_189 = arith.constant 2 : index
    %c0_190 = arith.constant 0 : index
    %c0_191 = arith.constant 0 : index
    %221 = vector.load %arg13[%c2_189, %c0_190, %c0_191] : memref<4x16x1xf32, #tpu.memory_space<vmem>>, vector<1x16x1xf32>
    %222 = vector.shape_cast %221 : vector<1x16x1xf32> to vector<16x1xf32>
    %cst_192 = arith.constant dense<0.000000e+00> : vector<18x1xf32>
    %223 = tpu.matmul %220, %222, %cst_192 {dimension_numbers = #tpu.dot_dimension_numbers<[1], [0], [0], [1], [0, 0, 1, 1], [], []>} : vector<18x16xf32>, vector<16x1xf32>, vector<18x1xf32> -> vector<18x1xf32>
    %224 = arith.addf %217, %223 : vector<18x1xf32>
    %c3_193 = arith.constant 3 : index
    %c0_194 = arith.constant 0 : index
    %c0_195 = arith.constant 0 : index
    %225 = vector.load %arg12[%c3_193, %c0_194, %c0_195] : memref<4x18x32xf32, #tpu.memory_space<vmem>>, vector<1x18x32xf32>
    %226 = vector.shape_cast %225 : vector<1x18x32xf32> to vector<18x32xf32>
    %cst_196 = arith.constant dense<0.000000e+00> : vector<18x16xf32>
    %227 = tpu.matmul %226, %204, %cst_196 {dimension_numbers = #tpu.dot_dimension_numbers<[1], [0], [0], [1], [0, 0, 1, 1], [], []>} : vector<18x32xf32>, vector<32x16xf32>, vector<18x16xf32> -> vector<18x16xf32>
    %c3_197 = arith.constant 3 : index
    %c0_198 = arith.constant 0 : index
    %c0_199 = arith.constant 0 : index
    %228 = vector.load %arg13[%c3_197, %c0_198, %c0_199] : memref<4x16x1xf32, #tpu.memory_space<vmem>>, vector<1x16x1xf32>
    %229 = vector.shape_cast %228 : vector<1x16x1xf32> to vector<16x1xf32>
    %cst_200 = arith.constant dense<0.000000e+00> : vector<18x1xf32>
    %230 = tpu.matmul %227, %229, %cst_200 {dimension_numbers = #tpu.dot_dimension_numbers<[1], [0], [0], [1], [0, 0, 1, 1], [], []>} : vector<18x16xf32>, vector<16x1xf32>, vector<18x1xf32> -> vector<18x1xf32>
    %231 = arith.addf %224, %230 : vector<18x1xf32>
    %c0_201 = arith.constant 0 : index
    %c0_202 = arith.constant 0 : index
    %232 = vector.load %arg14[%c0_201, %c0_202] : memref<1x1xf32, #tpu.memory_space<vmem>>, vector<1x1xf32>
    %233 = vector.broadcast %232 : vector<1x1xf32> to vector<18x1xf32>
    %234 = arith.addf %231, %233 : vector<18x1xf32>
    %cst_203 = arith.constant 0.000000e+00 : f32
    %235 = vector.broadcast %cst_203 : f32 to vector<18x1xf32>
    %236 = arith.maximumf %234, %235 : vector<18x1xf32>
    %c0_204 = arith.constant 0 : index
    %c0_205 = arith.constant 0 : index
    %237 = vector.load %arg15[%c0_204, %c0_205] : memref<2x18xf32, #tpu.memory_space<vmem>>, vector<2x18xf32>
    %cst_206 = arith.constant dense<0.000000e+00> : vector<2x1xf32>
    %238 = tpu.matmul %237, %236, %cst_206 {dimension_numbers = #tpu.dot_dimension_numbers<[1], [0], [0], [1], [0, 0, 1, 1], [], []>} : vector<2x18xf32>, vector<18x1xf32>, vector<2x1xf32> -> vector<2x1xf32>
    %c0_207 = arith.constant 0 : index
    %c0_208 = arith.constant 0 : index
    %239 = vector.load %arg16[%c0_207, %c0_208] : memref<1x1xf32, #tpu.memory_space<vmem>>, vector<1x1xf32>
    %240 = vector.broadcast %239 : vector<1x1xf32> to vector<2x1xf32>
    %241 = arith.addf %238, %240 : vector<2x1xf32>
    %cst_209 = arith.constant 0.000000e+00 : f32
    %242 = vector.broadcast %cst_209 : f32 to vector<2x1xf32>
    %243 = arith.subf %242, %241 : vector<2x1xf32>
    %244 = math.exp %243 : vector<2x1xf32>
    %cst_210 = arith.constant 1.000000e+00 : f32
    %245 = vector.broadcast %cst_210 : f32 to vector<2x1xf32>
    %246 = arith.addf %245, %244 : vector<2x1xf32>
    %247 = tpu.reciprocal %246 {approx = true} : vector<2x1xf32> -> vector<2x1xf32>
    %c0_211 = arith.constant 0 : index
    %c0_212 = arith.constant 0 : index
    %248 = vector.load %arg17[%c0_211, %c0_212] : memref<2x1xf32, #tpu.memory_space<vmem>>, vector<2x1xf32>
    tpu.vector_store %arg17[%c0_211, %c0_212], %247 {strides = array<i32>} : memref<2x1xf32, #tpu.memory_space<vmem>>, vector<2x1xf32>,
    return
  }
}

</mosaic_0001>

<llo_original>
// kernel: discriminator_forward.1
$region0: #{discriminator_forward.1}
  #allocation0 [shape = 'u32[]', space=smem, size = 0x4, offset = 0x4, fixed_abs, tag = 'smem constant byte address 0x4 - core index']
  #allocation1 [shape = 'u32[72,128]{1,0:T(1,128)}', space=vmem, size = 0x9000, scoped, tag = 'internal scratch']
  #allocation2 [shape = 'f32[1,1]{1,0:T(1,128)S(1)}', space=vmem, size = 0x200, scoped, tag = 'scoped memory for discriminator_forward.1']
  #allocation3 [shape = 'f32[1,1]{1,0:T(1,128)S(1)}', space=vmem, size = 0x200, scoped, tag = 'scoped memory for discriminator_forward.1']
  %s0 = inlined_call_operand.vmem [shape: f32[338,64], index: 0, kind: input, shape index: {}]
  %s1 = inlined_call_operand.vmem [shape: f32[64,4], index: 1, kind: input, shape index: {}]
  %s2 = inlined_call_operand.vmem [shape: f32[1,4], index: 2, kind: input, shape index: {}]
  %s3 = inlined_call_operand.vmem [shape: f32[1,4], index: 3, kind: input, shape index: {}]
  %s4 = inlined_call_operand.vmem [shape: f32[9,98,338], index: 4, kind: input, shape index: {}]
  %s5 = inlined_call_operand.vmem [shape: f32[9,4,8], index: 5, kind: input, shape index: {}]
  %s6 = inlined_call_operand.vmem [shape: f32[1,8], index: 6, kind: input, shape index: {}]
  %s7 = inlined_call_operand.vmem [shape: f32[1,8], index: 7, kind: input, shape index: {}]
  %s8 = inlined_call_operand.vmem [shape: f32[9,32,98], index: 8, kind: input, shape index: {}]
  %s9 = inlined_call_operand.vmem [shape: f32[9,8,16], index: 9, kind: input, shape index: {}]
  %s10 = inlined_call_operand.vmem [shape: f32[1,16], index: 10, kind: input, shape index: {}]
  %s11 = inlined_call_operand.vmem [shape: f32[1,16], index: 11, kind: input, shape index: {}]
  %s12 = inlined_call_operand.vmem [shape: f32[4,18,32], index: 12, kind: input, shape index: {}]
  %s13 = inlined_call_operand.vmem [shape: f32[4,16,1], index: 13, kind: input, shape index: {}]
  %s14 = inlined_call_operand.<no memory space> [shape: f32[1,1], index: 14, kind: input, shape index: {}]
  %s15 = inlined_call_operand.vmem [shape: f32[2,18], index: 15, kind: input, shape index: {}]
  %s16 = inlined_call_operand.<no memory space> [shape: f32[1,1], index: 16, kind: input, shape index: {}]
  %s17 = inlined_call_operand.vmem [shape: f32[2,1], index: 17, kind: output, shape index: {}]
  %s18 = sld [smem:[#allocation0]]
  $region78: #{discriminator_forward.1} parent=0
    _
  %s20 = ssub.s32 1, %s18
  %s21 = scalar_select 0, %s20, %s18
  %v22 = vstv %s14
  %23 = vst [vmem:[#allocation2] sm:$0x1] %v22
  %v24 = vstv %s16
  %25 = vst [vmem:[#allocation3] sm:$0x1] %v24
  // Predicated region
  $region2: #{discriminator_forward.1} parent=0 // pred_check
    _
  $region3: #{discriminator_forward.1} parent=0 // pred_check_branch
    %27 = sbr.rel (0) target = $region5
  $region4: #{discriminator_forward.1} parent=0 // pred_region
    _
  $region5: #{discriminator_forward.1} parent=0 // pred_fallthru
    _
  // Predicated region
  $region6: #{discriminator_forward.1} parent=0 // pred_check
    _
  $region7: #{discriminator_forward.1} parent=0 // pred_check_branch
    %29 = sbr.rel (0) target = $region9
  $region8: #{discriminator_forward.1} parent=0 // pred_region
    _
  $region9: #{discriminator_forward.1} parent=0 // pred_fallthru
    _
  // Predicated region
  $region10: #{discriminator_forward.1} parent=0 // pred_check
    _
  $region11: #{discriminator_forward.1} parent=0 // pred_check_branch
    %31 = sbr.rel (0) target = $region13
  $region12: #{discriminator_forward.1} parent=0 // pred_region
    _
  $region13: #{discriminator_forward.1} parent=0 // pred_fallthru
    _
  // Predicated region
  $region14: #{discriminator_forward.1} parent=0 // pred_check
    _
  $region15: #{discriminator_forward.1} parent=0 // pred_check_branch
    %33 = sbr.rel (0) target = $region17
  $region16: #{discriminator_forward.1} parent=0 // pred_region
    _
  $region17: #{discriminator_forward.1} parent=0 // pred_fallthru
    _
  // Predicated region
  $region18: #{discriminator_forward.1} parent=0 // pred_check
    _
  $region19: #{discriminator_forward.1} parent=0 // pred_check_branch
    %35 = sbr.rel (0) target = $region21
  $region20: #{discriminator_forward.1} parent=0 // pred_region
    _
  $region21: #{discriminator_forward.1} parent=0 // pred_fallthru
    _
  // Predicated region
  $region22: #{discriminator_forward.1} parent=0 // pred_check
    _
  $region23: #{discriminator_forward.1} parent=0 // pred_check_branch
    %37 = sbr.rel (0) target = $region25
  $region24: #{discriminator_forward.1} parent=0 // pred_region
    _
  $region25: #{discriminator_forward.1} parent=0 // pred_fallthru
    _
  // Predicated region
  $region26: #{discriminator_forward.1} parent=0 // pred_check
    _
  $region27: #{discriminator_forward.1} parent=0 // pred_check_branch
    %39 = sbr.rel (0) target = $region29
  $region28: #{discriminator_forward.1} parent=0 // pred_region
    _
  $region29: #{discriminator_forward.1} parent=0 // pred_fallthru
    _
  // Predicated region
  $region30: #{discriminator_forward.1} parent=0 // pred_check
    _
  $region31: #{discriminator_forward.1} parent=0 // pred_check_branch
    %41 = sbr.rel (0) target = $region33
  $region32: #{discriminator_forward.1} parent=0 // pred_region
    _
  $region33: #{discriminator_forward.1} parent=0 // pred_fallthru
    _
  // Predicated region
  $region34: #{discriminator_forward.1} parent=0 // pred_check
    _
  $region35: #{discriminator_forward.1} parent=0 // pred_check_branch
    %43 = sbr.rel (0) target = $region37
  $region36: #{discriminator_forward.1} parent=0 // pred_region
    _
  $region37: #{discriminator_forward.1} parent=0 // pred_fallthru
    _
  // Predicated region
  $region38: #{discriminator_forward.1} parent=0 // pred_check
    _
  $region39: #{discriminator_forward.1} parent=0 // pred_check_branch
    %45 = sbr.rel (0) target = $region41
  $region40: #{discriminator_forward.1} parent=0 // pred_region
    _
  $region41: #{discriminator_forward.1} parent=0 // pred_fallthru
    _
  // Predicated region
  $region42: #{discriminator_forward.1} parent=0 // pred_check
    _
  $region43: #{discriminator_forward.1} parent=0 // pred_check_branch
    %47 = sbr.rel (0) target = $region45
  $region44: #{discriminator_forward.1} parent=0 // pred_region
    _
  $region45: #{discriminator_forward.1} parent=0 // pred_fallthru
    _
  // Predicated region
  $region46: #{discriminator_forward.1} parent=0 // pred_check
    _
  $region47: #{discriminator_forward.1} parent=0 // pred_check_branch
    %49 = sbr.rel (0) target = $region49
  $region48: #{discriminator_forward.1} parent=0 // pred_region
    _
  $region49: #{discriminator_forward.1} parent=0 // pred_fallthru
    _
  // Predicated region
  $region50: #{discriminator_forward.1} parent=0 // pred_check
    _
  $region51: #{discriminator_forward.1} parent=0 // pred_check_branch
    %51 = sbr.rel (0) target = $region53
  $region52: #{discriminator_forward.1} parent=0 // pred_region
    _
  $region53: #{discriminator_forward.1} parent=0 // pred_fallthru
    _
  // Predicated region
  $region54: #{discriminator_forward.1} parent=0 // pred_check
    _
  $region55: #{discriminator_forward.1} parent=0 // pred_check_branch
    %53 = sbr.rel (0) target = $region57
  $region56: #{discriminator_forward.1} parent=0 // pred_region
    _
  $region57: #{discriminator_forward.1} parent=0 // pred_fallthru
    _
  // Predicated region
  $region58: #{discriminator_forward.1} parent=0 // pred_check
    _
  $region59: #{discriminator_forward.1} parent=0 // pred_check_branch
    %55 = sbr.rel (0) target = $region61
  $region60: #{discriminator_forward.1} parent=0 // pred_region
    _
  $region61: #{discriminator_forward.1} parent=0 // pred_fallthru
    _
  // Predicated region
  $region62: #{discriminator_forward.1} parent=0 // pred_check
    _
  $region63: #{discriminator_forward.1} parent=0 // pred_check_branch
    %57 = sbr.rel (0) target = $region65
  $region64: #{discriminator_forward.1} parent=0 // pred_region
    _
  $region65: #{discriminator_forward.1} parent=0 // pred_fallthru
    _
  // Predicated region
  $region66: #{discriminator_forward.1} parent=0 // pred_check
    _
  $region67: #{discriminator_forward.1} parent=0 // pred_check_branch
    %59 = sbr.rel (0) target = $region69
  $region68: #{discriminator_forward.1} parent=0 // pred_region
    _
  $region69: #{discriminator_forward.1} parent=0 // pred_fallthru
    _
  %v60 = vld [vmem:[%s0] sm:$0xff]
  %v61 = vld [vmem:[%s0 + $0x8] sm:$0xff]
  %v62 = vld [vmem:[%s0 + $0x10] sm:$0xff]
  %v63 = vld [vmem:[%s0 + $0x18] sm:$0xff]
  %v64 = vld [vmem:[%s0 + $0x20] sm:$0xff]
  %v65 = vld [vmem:[%s0 + $0x28] sm:$0xff]
  %v66 = vld [vmem:[%s0 + $0x30] sm:$0xff]
  %v67 = vld [vmem:[%s0 + $0x38] sm:$0xff]
  %v68 = vld [vmem:[%s0 + $0x40] sm:$0xff]
  %v69 = vld [vmem:[%s0 + $0x48] sm:$0xff]
  %v70 = vld [vmem:[%s0 + $0x50] sm:$0xff]
  %v71 = vld [vmem:[%s0 + $0x58] sm:$0xff]
  %v72 = vld [vmem:[%s0 + $0x60] sm:$0xff]
  %v73 = vld [vmem:[%s0 + $0x68] sm:$0xff]
  %v74 = vld [vmem:[%s0 + $0x70] sm:$0xff]
  %v75 = vld [vmem:[%s0 + $0x78] sm:$0xff]
  %v76 = vld [vmem:[%s0 + $0x80] sm:$0xff]
  %v77 = vld [vmem:[%s0 + $0x88] sm:$0xff]
  %v78 = vld [vmem:[%s0 + $0x90] sm:$0xff]
  %v79 = vld [vmem:[%s0 + $0x98] sm:$0xff]
  %v80 = vld [vmem:[%s0 + $0xa0] sm:$0xff]
  %v81 = vld [vmem:[%s0 + $0xa8] sm:$0xff]
  %v82 = vld [vmem:[%s0 + $0xb0] sm:$0xff]
  %v83 = vld [vmem:[%s0 + $0xb8] sm:$0xff]
  %v84 = vld [vmem:[%s0 + $0xc0] sm:$0xff]
  %v85 = vld [vmem:[%s0 + $0xc8] sm:$0xff]
  %v86 = vld [vmem:[%s0 + $0xd0] sm:$0xff]
  %v87 = vld [vmem:[%s0 + $0xd8] sm:$0xff]
  %v88 = vld [vmem:[%s0 + $0xe0] sm:$0xff]
  %v89 = vld [vmem:[%s0 + $0xe8] sm:$0xff]
  %v90 = vld [vmem:[%s0 + $0xf0] sm:$0xff]
  %v91 = vld [vmem:[%s0 + $0xf8] sm:$0xff]
  %v92 = vld [vmem:[%s0 + $0x100] sm:$0xff]
  %v93 = vld [vmem:[%s0 + $0x108] sm:$0xff]
  %v94 = vld [vmem:[%s0 + $0x110] sm:$0xff]
  %v95 = vld [vmem:[%s0 + $0x118] sm:$0xff]
  %v96 = vld [vmem:[%s0 + $0x120] sm:$0xff]
  %v97 = vld [vmem:[%s0 + $0x128] sm:$0xff]
  %v98 = vld [vmem:[%s0 + $0x130] sm:$0xff]
  %v99 = vld [vmem:[%s0 + $0x138] sm:$0xff]
  %v100 = vld [vmem:[%s0 + $0x140] sm:$0xff]
  %v101 = vld [vmem:[%s0 + $0x148] sm:$0xff]
  %v102 = vld [vmem:[%s0 + $0x150] sm:$0x3]
  %v103 = vld [vmem:[%s1] sm:$0xff]
  %v104 = vld [vmem:[%s1 + $0x8] sm:$0xff]
  %v105 = vld [vmem:[%s1 + $0x10] sm:$0xff]
  %v106 = vld [vmem:[%s1 + $0x18] sm:$0xff]
  %v107 = vld [vmem:[%s1 + $0x20] sm:$0xff]
  %v108 = vld [vmem:[%s1 + $0x28] sm:$0xff]
  %v109 = vld [vmem:[%s1 + $0x30] sm:$0xff]
  %v110 = vld [vmem:[%s1 + $0x38] sm:$0xff]
  %vm111 = vcmask 523264
  %v113 = vsel %vm111, %v60, 0
  %v116 = vsel %vm111, %v61, 0
  %v119 = vsel %vm111, %v62, 0
  %v122 = vsel %vm111, %v63, 0
  %v125 = vsel %vm111, %v64, 0
  %v128 = vsel %vm111, %v65, 0
  %v131 = vsel %vm111, %v66, 0
  %v134 = vsel %vm111, %v67, 0
  %v137 = vsel %vm111, %v68, 0
  %v140 = vsel %vm111, %v69, 0
  %v143 = vsel %vm111, %v70, 0
  %v146 = vsel %vm111, %v71, 0
  %v149 = vsel %vm111, %v72, 0
  %v152 = vsel %vm111, %v73, 0
  %v155 = vsel %vm111, %v74, 0
  %v158 = vsel %vm111, %v75, 0
  %v161 = vsel %vm111, %v76, 0
  %v164 = vsel %vm111, %v77, 0
  %v167 = vsel %vm111, %v78, 0
  %v170 = vsel %vm111, %v79, 0
  %v173 = vsel %vm111, %v80, 0
  %v176 = vsel %vm111, %v81, 0
  %v179 = vsel %vm111, %v82, 0
  %v182 = vsel %vm111, %v83, 0
  %v185 = vsel %vm111, %v84, 0
  %v188 = vsel %vm111, %v85, 0
  %v191 = vsel %vm111, %v86, 0
  %v194 = vsel %vm111, %v87, 0
  %v197 = vsel %vm111, %v88, 0
  %v200 = vsel %vm111, %v89, 0
  %v203 = vsel %vm111, %v90, 0
  %v206 = vsel %vm111, %v91, 0
  %v209 = vsel %vm111, %v92, 0
  %v212 = vsel %vm111, %v93, 0
  %v215 = vsel %vm111, %v94, 0
  %v218 = vsel %vm111, %v95, 0
  %v221 = vsel %vm111, %v96, 0
  %v224 = vsel %vm111, %v97, 0
  %v227 = vsel %vm111, %v98, 0
  %v230 = vsel %vm111, %v99, 0
  %v233 = vsel %vm111, %v100, 0
  %v236 = vsel %vm111, %v101, 0
  %v239 = vsel %vm111, %v102, 0
  %241 = vmatpush.msra.mxu0 0.0
  %242 = vmatpush.msra.mxu0 0.0
  %243 = vmatpush.msra.mxu0 0.0
  %244 = vmatpush.msra.mxu0 0.0
  %245 = vmatpush.msra.mxu0 0.0
  %246 = vmatpush.msra.mxu0 0.0
  %247 = vmatpush.msra.mxu0 0.0
  %248 = vmatpush.msra.mxu0 0.0
  %249 = vmatpush.msra.mxu0 %v110
  %250 = vmatpush.msra.mxu0 %v109
  %251 = vmatpush.msra.mxu0 %v108
  %252 = vmatpush.msra.mxu0 %v107
  %253 = vmatpush.msra.mxu0 %v106
  %254 = vmatpush.msra.mxu0 %v105
  %255 = vmatpush.msra.mxu0 %v104
  %256 = vmatpush.msra.mxu0 %v103
  %257 = vmatmul.f32.gmra.mxu0 %v113
  %v258 = vpop.f32.mrf.mxu0
  %v259 = vadd.f32 0.0, %v258
  %260 = vmatmul.f32.gmra.mxu0 %v116
  %v261 = vpop.f32.mrf.mxu0
  %v262 = vadd.f32 0.0, %v261
  %263 = vmatmul.f32.gmra.mxu0 %v119
  %v264 = vpop.f32.mrf.mxu0
  %v265 = vadd.f32 0.0, %v264
  %266 = vmatmul.f32.gmra.mxu0 %v122
  %v267 = vpop.f32.mrf.mxu0
  %v268 = vadd.f32 0.0, %v267
  %269 = vmatmul.f32.gmra.mxu0 %v125
  %v270 = vpop.f32.mrf.mxu0
  %v271 = vadd.f32 0.0, %v270
  %272 = vmatmul.f32.gmra.mxu0 %v128
  %v273 = vpop.f32.mrf.mxu0
  %v274 = vadd.f32 0.0, %v273
  %275 = vmatmul.f32.gmra.mxu0 %v131
  %v276 = vpop.f32.mrf.mxu0
  %v277 = vadd.f32 0.0, %v276
  %278 = vmatmul.f32.gmra.mxu0 %v134
  %v279 = vpop.f32.mrf.mxu0
  %v280 = vadd.f32 0.0, %v279
  %281 = vmatmul.f32.gmra.mxu0 %v137
  %v282 = vpop.f32.mrf.mxu0
  %v283 = vadd.f32 0.0, %v282
  %284 = vmatmul.f32.gmra.mxu0 %v140
  %v285 = vpop.f32.mrf.mxu0
  %v286 = vadd.f32 0.0, %v285
  %287 = vmatmul.f32.gmra.mxu0 %v143
  %v288 = vpop.f32.mrf.mxu0
  %v289 = vadd.f32 0.0, %v288
  %290 = vmatmul.f32.gmra.mxu0 %v146
  %v291 = vpop.f32.mrf.mxu0
  %v292 = vadd.f32 0.0, %v291
  %293 = vmatmul.f32.gmra.mxu0 %v149
  %v294 = vpop.f32.mrf.mxu0
  %v295 = vadd.f32 0.0, %v294
  %296 = vmatmul.f32.gmra.mxu0 %v152
  %v297 = vpop.f32.mrf.mxu0
  %v298 = vadd.f32 0.0, %v297
  %299 = vmatmul.f32.gmra.mxu0 %v155
  %v300 = vpop.f32.mrf.mxu0
  %v301 = vadd.f32 0.0, %v300
  %302 = vmatmul.f32.gmra.mxu0 %v158
  %v303 = vpop.f32.mrf.mxu0
  %v304 = vadd.f32 0.0, %v303
  %305 = vmatmul.f32.gmra.mxu0 %v161
  %v306 = vpop.f32.mrf.mxu0
  %v307 = vadd.f32 0.0, %v306
  %308 = vmatmul.f32.gmra.mxu0 %v164
  %v309 = vpop.f32.mrf.mxu0
  %v310 = vadd.f32 0.0, %v309
  %311 = vmatmul.f32.gmra.mxu0 %v167
  %v312 = vpop.f32.mrf.mxu0
  %v313 = vadd.f32 0.0, %v312
  %314 = vmatmul.f32.gmra.mxu0 %v170
  %v315 = vpop.f32.mrf.mxu0
  %v316 = vadd.f32 0.0, %v315
  %317 = vmatmul.f32.gmra.mxu0 %v173
  %v318 = vpop.f32.mrf.mxu0
  %v319 = vadd.f32 0.0, %v318
  %320 = vmatmul.f32.gmra.mxu0 %v176
  %v321 = vpop.f32.mrf.mxu0
  %v322 = vadd.f32 0.0, %v321
  %323 = vmatmul.f32.gmra.mxu0 %v179
  %v324 = vpop.f32.mrf.mxu0
  %v325 = vadd.f32 0.0, %v324
  %326 = vmatmul.f32.gmra.mxu0 %v182
  %v327 = vpop.f32.mrf.mxu0
  %v328 = vadd.f32 0.0, %v327
  %329 = vmatmul.f32.gmra.mxu0 %v185
  %v330 = vpop.f32.mrf.mxu0
  %v331 = vadd.f32 0.0, %v330
  %332 = vmatmul.f32.gmra.mxu0 %v188
  %v333 = vpop.f32.mrf.mxu0
  %v334 = vadd.f32 0.0, %v333
  %335 = vmatmul.f32.gmra.mxu0 %v191
  %v336 = vpop.f32.mrf.mxu0
  %v337 = vadd.f32 0.0, %v336
  %338 = vmatmul.f32.gmra.mxu0 %v194
  %v339 = vpop.f32.mrf.mxu0
  %v340 = vadd.f32 0.0, %v339
  %341 = vmatmul.f32.gmra.mxu0 %v197
  %v342 = vpop.f32.mrf.mxu0
  %v343 = vadd.f32 0.0, %v342
  %344 = vmatmul.f32.gmra.mxu0 %v200
  %v345 = vpop.f32.mrf.mxu0
  %v346 = vadd.f32 0.0, %v345
  %347 = vmatmul.f32.gmra.mxu0 %v203
  %v348 = vpop.f32.mrf.mxu0
  %v349 = vadd.f32 0.0, %v348
  %350 = vmatmul.f32.gmra.mxu0 %v206
  %v351 = vpop.f32.mrf.mxu0
  %v352 = vadd.f32 0.0, %v351
  %353 = vmatmul.f32.gmra.mxu0 %v209
  %v354 = vpop.f32.mrf.mxu0
  %v355 = vadd.f32 0.0, %v354
  %356 = vmatmul.f32.gmra.mxu0 %v212
  %v357 = vpop.f32.mrf.mxu0
  %v358 = vadd.f32 0.0, %v357
  %359 = vmatmul.f32.gmra.mxu0 %v215
  %v360 = vpop.f32.mrf.mxu0
  %v361 = vadd.f32 0.0, %v360
  %362 = vmatmul.f32.gmra.mxu0 %v218
  %v363 = vpop.f32.mrf.mxu0
  %v364 = vadd.f32 0.0, %v363
  %365 = vmatmul.f32.gmra.mxu0 %v221
  %v366 = vpop.f32.mrf.mxu0
  %v367 = vadd.f32 0.0, %v366
  %368 = vmatmul.f32.gmra.mxu0 %v224
  %v369 = vpop.f32.mrf.mxu0
  %v370 = vadd.f32 0.0, %v369
  %371 = vmatmul.f32.gmra.mxu0 %v227
  %v372 = vpop.f32.mrf.mxu0
  %v373 = vadd.f32 0.0, %v372
  %374 = vmatmul.f32.gmra.mxu0 %v230
  %v375 = vpop.f32.mrf.mxu0
  %v376 = vadd.f32 0.0, %v375
  %377 = vmatmul.f32.gmra.mxu0 %v233
  %v378 = vpop.f32.mrf.mxu0
  %v379 = vadd.f32 0.0, %v378
  %380 = vmatmul.f32.gmra.mxu0 %v236
  %v381 = vpop.f32.mrf.mxu0
  %v382 = vadd.f32 0.0, %v381
  %383 = vmatmul.f32.gmra.mxu0 %v239
  %v384 = vpop.f32.mrf.mxu0
  %v385 = vadd.f32 0.0, %v384
  %386 = vdwg.mxu0
  %v387 = vld [vmem:[%s2] sm:$0x1]
  %v388 = vld [vmem:[%s3] sm:$0x1]
  %vm389 = vcmask 31744
  %v390 = vsel %vm389, %v259, 0.0
  %v391 = vsel %vm389, %v262, 0.0
  %v392 = vadd.f32 %v390, %v391
  %v393 = vsel %vm389, %v265, 0.0
  %v394 = vadd.f32 %v392, %v393
  %v395 = vsel %vm389, %v268, 0.0
  %v396 = vadd.f32 %v394, %v395
  %v397 = vsel %vm389, %v271, 0.0
  %v398 = vadd.f32 %v396, %v397
  %v399 = vsel %vm389, %v274, 0.0
  %v400 = vadd.f32 %v398, %v399
  %v401 = vsel %vm389, %v277, 0.0
  %v402 = vadd.f32 %v400, %v401
  %v403 = vsel %vm389, %v280, 0.0
  %v404 = vadd.f32 %v402, %v403
  %v405 = vsel %vm389, %v283, 0.0
  %v406 = vadd.f32 %v404, %v405
  %v407 = vsel %vm389, %v286, 0.0
  %v408 = vadd.f32 %v406, %v407
  %v409 = vsel %vm389, %v289, 0.0
  %v410 = vadd.f32 %v408, %v409
  %v411 = vsel %vm389, %v292, 0.0
  %v412 = vadd.f32 %v410, %v411
  %v413 = vsel %vm389, %v295, 0.0
  %v414 = vadd.f32 %v412, %v413
  %v415 = vsel %vm389, %v298, 0.0
  %v416 = vadd.f32 %v414, %v415
  %v417 = vsel %vm389, %v301, 0.0
  %v418 = vadd.f32 %v416, %v417
  %v419 = vsel %vm389, %v304, 0.0
  %v420 = vadd.f32 %v418, %v419
  %v421 = vsel %vm389, %v307, 0.0
  %v422 = vadd.f32 %v420, %v421
  %v423 = vsel %vm389, %v310, 0.0
  %v424 = vadd.f32 %v422, %v423
  %v425 = vsel %vm389, %v313, 0.0
  %v426 = vadd.f32 %v424, %v425
  %v427 = vsel %vm389, %v316, 0.0
  %v428 = vadd.f32 %v426, %v427
  %v429 = vsel %vm389, %v319, 0.0
  %v430 = vadd.f32 %v428, %v429
  %v431 = vsel %vm389, %v322, 0.0
  %v432 = vadd.f32 %v430, %v431
  %v433 = vsel %vm389, %v325, 0.0
  %v434 = vadd.f32 %v432, %v433
  %v435 = vsel %vm389, %v328, 0.0
  %v436 = vadd.f32 %v434, %v435
  %v437 = vsel %vm389, %v331, 0.0
  %v438 = vadd.f32 %v436, %v437
  %v439 = vsel %vm389, %v334, 0.0
  %v440 = vadd.f32 %v438, %v439
  %v441 = vsel %vm389, %v337, 0.0
  %v442 = vadd.f32 %v440, %v441
  %v443 = vsel %vm389, %v340, 0.0
  %v444 = vadd.f32 %v442, %v443
  %v445 = vsel %vm389, %v343, 0.0
  %v446 = vadd.f32 %v444, %v445
  %v447 = vsel %vm389, %v346, 0.0
  %v448 = vadd.f32 %v446, %v447
  %v449 = vsel %vm389, %v349, 0.0
  %v450 = vadd.f32 %v448, %v449
  %v451 = vsel %vm389, %v352, 0.0
  %v452 = vadd.f32 %v450, %v451
  %v453 = vsel %vm389, %v355, 0.0
  %v454 = vadd.f32 %v452, %v453
  %v455 = vsel %vm389, %v358, 0.0
  %v456 = vadd.f32 %v454, %v455
  %v457 = vsel %vm389, %v361, 0.0
  %v458 = vadd.f32 %v456, %v457
  %v459 = vsel %vm389, %v364, 0.0
  %v460 = vadd.f32 %v458, %v459
  %v461 = vsel %vm389, %v367, 0.0
  %v462 = vadd.f32 %v460, %v461
  %v463 = vsel %vm389, %v370, 0.0
  %v464 = vadd.f32 %v462, %v463
  %v465 = vsel %vm389, %v373, 0.0
  %v466 = vadd.f32 %v464, %v465
  %v467 = vsel %vm389, %v376, 0.0
  %v468 = vadd.f32 %v466, %v467
  %v469 = vsel %vm389, %v379, 0.0
  %v470 = vadd.f32 %v468, %v469
  %v471 = vsel %vm389, %v382, 0.0
  %v472 = vadd.f32 %v470, %v471
  %vm473 = vcmask 25600
  %v474 = vsel %vm473, %v385, 0.0
  %v475 = vadd.f32 %v472, %v474
  %v476 = vrot.slane %v475, 4
  %v477 = vadd.f32 %v475, %v476
  %v478 = vrot.slane %v477, 2
  %v479 = vadd.f32 %v477, %v478
  %v480 = vrot.slane %v479, 1
  %v481 = vadd.f32 %v479, %v480
  %v482 = vrcp.pop 338.0
  %v483 = vmul.f32 338.0, %v482
  %v484 = vsub.f32 1.0, %v483
  %v485 = vmul.f32 %v482, %v484
  %v486 = vadd.f32 %v482, %v485
  %vm487 = vweird.f32 %v482
  %v488 = vsel %vm487, %v482, %v486
  %v489 = vmul.f32 %v481, %v488
  %v490 = vsub.f32 %v259, %v489
  %v491 = vsub.f32 %v262, %v489
  %v492 = vsub.f32 %v265, %v489
  %v493 = vsub.f32 %v268, %v489
  %v494 = vsub.f32 %v271, %v489
  %v495 = vsub.f32 %v274, %v489
  %v496 = vsub.f32 %v277, %v489
  %v497 = vsub.f32 %v280, %v489
  %v498 = vsub.f32 %v283, %v489
  %v499 = vsub.f32 %v286, %v489
  %v500 = vsub.f32 %v289, %v489
  %v501 = vsub.f32 %v292, %v489
  %v502 = vsub.f32 %v295, %v489
  %v503 = vsub.f32 %v298, %v489
  %v504 = vsub.f32 %v301, %v489
  %v505 = vsub.f32 %v304, %v489
  %v506 = vsub.f32 %v307, %v489
  %v507 = vsub.f32 %v310, %v489
  %v508 = vsub.f32 %v313, %v489
  %v509 = vsub.f32 %v316, %v489
  %v510 = vsub.f32 %v319, %v489
  %v511 = vsub.f32 %v322, %v489
  %v512 = vsub.f32 %v325, %v489
  %v513 = vsub.f32 %v328, %v489
  %v514 = vsub.f32 %v331, %v489
  %v515 = vsub.f32 %v334, %v489
  %v516 = vsub.f32 %v337, %v489
  %v517 = vsub.f32 %v340, %v489
  %v518 = vsub.f32 %v343, %v489
  %v519 = vsub.f32 %v346, %v489
  %v520 = vsub.f32 %v349, %v489
  %v521 = vsub.f32 %v352, %v489
  %v522 = vsub.f32 %v355, %v489
  %v523 = vsub.f32 %v358, %v489
  %v524 = vsub.f32 %v361, %v489
  %v525 = vsub.f32 %v364, %v489
  %v526 = vsub.f32 %v367, %v489
  %v527 = vsub.f32 %v370, %v489
  %v528 = vsub.f32 %v373, %v489
  %v529 = vsub.f32 %v376, %v489
  %v530 = vsub.f32 %v379, %v489
  %v531 = vsub.f32 %v382, %v489
  %v532 = vsub.f32 %v385, %v489
  %v533 = vmul.f32 %v490, %v490
  %v534 = vmul.f32 %v491, %v491
  %v535 = vmul.f32 %v492, %v492
  %v536 = vmul.f32 %v493, %v493
  %v537 = vmul.f32 %v494, %v494
  %v538 = vmul.f32 %v495, %v495
  %v539 = vmul.f32 %v496, %v496
  %v540 = vmul.f32 %v497, %v497
  %v541 = vmul.f32 %v498, %v498
  %v542 = vmul.f32 %v499, %v499
  %v543 = vmul.f32 %v500, %v500
  %v544 = vmul.f32 %v501, %v501
  %v545 = vmul.f32 %v502, %v502
  %v546 = vmul.f32 %v503, %v503
  %v547 = vmul.f32 %v504, %v504
  %v548 = vmul.f32 %v505, %v505
  %v549 = vmul.f32 %v506, %v506
  %v550 = vmul.f32 %v507, %v507
  %v551 = vmul.f32 %v508, %v508
  %v552 = vmul.f32 %v509, %v509
  %v553 = vmul.f32 %v510, %v510
  %v554 = vmul.f32 %v511, %v511
  %v555 = vmul.f32 %v512, %v512
  %v556 = vmul.f32 %v513, %v513
  %v557 = vmul.f32 %v514, %v514
  %v558 = vmul.f32 %v515, %v515
  %v559 = vmul.f32 %v516, %v516
  %v560 = vmul.f32 %v517, %v517
  %v561 = vmul.f32 %v518, %v518
  %v562 = vmul.f32 %v519, %v519
  %v563 = vmul.f32 %v520, %v520
  %v564 = vmul.f32 %v521, %v521
  %v565 = vmul.f32 %v522, %v522
  %v566 = vmul.f32 %v523, %v523
  %v567 = vmul.f32 %v524, %v524
  %v568 = vmul.f32 %v525, %v525
  %v569 = vmul.f32 %v526, %v526
  %v570 = vmul.f32 %v527, %v527
  %v571 = vmul.f32 %v528, %v528
  %v572 = vmul.f32 %v529, %v529
  %v573 = vmul.f32 %v530, %v530
  %v574 = vmul.f32 %v531, %v531
  %v575 = vmul.f32 %v532, %v532
  %v576 = vsel %vm389, %v533, 0.0
  %v577 = vsel %vm389, %v534, 0.0
  %v578 = vadd.f32 %v576, %v577
  %v579 = vsel %vm389, %v535, 0.0
  %v580 = vadd.f32 %v578, %v579
  %v581 = vsel %vm389, %v536, 0.0
  %v582 = vadd.f32 %v580, %v581
  %v583 = vsel %vm389, %v537, 0.0
  %v584 = vadd.f32 %v582, %v583
  %v585 = vsel %vm389, %v538, 0.0
  %v586 = vadd.f32 %v584, %v585
  %v587 = vsel %vm389, %v539, 0.0
  %v588 = vadd.f32 %v586, %v587
  %v589 = vsel %vm389, %v540, 0.0
  %v590 = vadd.f32 %v588, %v589
  %v591 = vsel %vm389, %v541, 0.0
  %v592 = vadd.f32 %v590, %v591
  %v593 = vsel %vm389, %v542, 0.0
  %v594 = vadd.f32 %v592, %v593
  %v595 = vsel %vm389, %v543, 0.0
  %v596 = vadd.f32 %v594, %v595
  %v597 = vsel %vm389, %v544, 0.0
  %v598 = vadd.f32 %v596, %v597
  %v599 = vsel %vm389, %v545, 0.0
  %v600 = vadd.f32 %v598, %v599
  %v601 = vsel %vm389, %v546, 0.0
  %v602 = vadd.f32 %v600, %v601
  %v603 = vsel %vm389, %v547, 0.0
  %v604 = vadd.f32 %v602, %v603
  %v605 = vsel %vm389, %v548, 0.0
  %v606 = vadd.f32 %v604, %v605
  %v607 = vsel %vm389, %v549, 0.0
  %v608 = vadd.f32 %v606, %v607
  %v609 = vsel %vm389, %v550, 0.0
  %v610 = vadd.f32 %v608, %v609
  %v611 = vsel %vm389, %v551, 0.0
  %v612 = vadd.f32 %v610, %v611
  %v613 = vsel %vm389, %v552, 0.0
  %v614 = vadd.f32 %v612, %v613
  %v615 = vsel %vm389, %v553, 0.0
  %v616 = vadd.f32 %v614, %v615
  %v617 = vsel %vm389, %v554, 0.0
  %v618 = vadd.f32 %v616, %v617
  %v619 = vsel %vm389, %v555, 0.0
  %v620 = vadd.f32 %v618, %v619
  %v621 = vsel %vm389, %v556, 0.0
  %v622 = vadd.f32 %v620, %v621
  %v623 = vsel %vm389, %v557, 0.0
  %v624 = vadd.f32 %v622, %v623
  %v625 = vsel %vm389, %v558, 0.0
  %v626 = vadd.f32 %v624, %v625
  %v627 = vsel %vm389, %v559, 0.0
  %v628 = vadd.f32 %v626, %v627
  %v629 = vsel %vm389, %v560, 0.0
  %v630 = vadd.f32 %v628, %v629
  %v631 = vsel %vm389, %v561, 0.0
  %v632 = vadd.f32 %v630, %v631
  %v633 = vsel %vm389, %v562, 0.0
  %v634 = vadd.f32 %v632, %v633
  %v635 = vsel %vm389, %v563, 0.0
  %v636 = vadd.f32 %v634, %v635
  %v637 = vsel %vm389, %v564, 0.0
  %v638 = vadd.f32 %v636, %v637
  %v639 = vsel %vm389, %v565, 0.0
  %v640 = vadd.f32 %v638, %v639
  %v641 = vsel %vm389, %v566, 0.0
  %v642 = vadd.f32 %v640, %v641
  %v643 = vsel %vm389, %v567, 0.0
  %v644 = vadd.f32 %v642, %v643
  %v645 = vsel %vm389, %v568, 0.0
  %v646 = vadd.f32 %v644, %v645
  %v647 = vsel %vm389, %v569, 0.0
  %v648 = vadd.f32 %v646, %v647
  %v649 = vsel %vm389, %v570, 0.0
  %v650 = vadd.f32 %v648, %v649
  %v651 = vsel %vm389, %v571, 0.0
  %v652 = vadd.f32 %v650, %v651
  %v653 = vsel %vm389, %v572, 0.0
  %v654 = vadd.f32 %v652, %v653
  %v655 = vsel %vm389, %v573, 0.0
  %v656 = vadd.f32 %v654, %v655
  %v657 = vsel %vm389, %v574, 0.0
  %v658 = vadd.f32 %v656, %v657
  %v659 = vsel %vm473, %v575, 0.0
  %v660 = vadd.f32 %v658, %v659
  %v661 = vrot.slane %v660, 4
  %v662 = vadd.f32 %v660, %v661
  %v663 = vrot.slane %v662, 2
  %v664 = vadd.f32 %v662, %v663
  %v665 = vrot.slane %v664, 1
  %v666 = vadd.f32 %v664, %v665
  %v667 = vmul.f32 %v666, %v488
  %v668 = vadd.f32 %v667, 1e-05
  %v669 = vrsqrt.pop %v668
  %v670 = vmul.f32 %v669, %v668
  %v671 = vmul.f32 %v670, %v669
  %v672 = vmul.f32 0.5, %v671
  %v673 = vsub.f32 1.5, %v672
  %v674 = vmul.f32 %v669, %v673
  %vm675 = vweird.f32 %v668
  %vm676 = vweird.f32 %v669
  %vm677 = vmor %vm675, %vm676
  %v678 = vsel %vm677, %v669, %v674
  %v679 = vmul.f32 %v490, %v678
  %v680 = vmul.f32 %v491, %v678
  %v681 = vmul.f32 %v492, %v678
  %v682 = vmul.f32 %v493, %v678
  %v683 = vmul.f32 %v494, %v678
  %v684 = vmul.f32 %v495, %v678
  %v685 = vmul.f32 %v496, %v678
  %v686 = vmul.f32 %v497, %v678
  %v687 = vmul.f32 %v498, %v678
  %v688 = vmul.f32 %v499, %v678
  %v689 = vmul.f32 %v500, %v678
  %v690 = vmul.f32 %v501, %v678
  %v691 = vmul.f32 %v502, %v678
  %v692 = vmul.f32 %v503, %v678
  %v693 = vmul.f32 %v504, %v678
  %v694 = vmul.f32 %v505, %v678
  %v695 = vmul.f32 %v506, %v678
  %v696 = vmul.f32 %v507, %v678
  %v697 = vmul.f32 %v508, %v678
  %v698 = vmul.f32 %v509, %v678
  %v699 = vmul.f32 %v510, %v678
  %v700 = vmul.f32 %v511, %v678
  %v701 = vmul.f32 %v512, %v678
  %v702 = vmul.f32 %v513, %v678
  %v703 = vmul.f32 %v514, %v678
  %v704 = vmul.f32 %v515, %v678
  %v705 = vmul.f32 %v516, %v678
  %v706 = vmul.f32 %v517, %v678
  %v707 = vmul.f32 %v518, %v678
  %v708 = vmul.f32 %v519, %v678
  %v709 = vmul.f32 %v520, %v678
  %v710 = vmul.f32 %v521, %v678
  %v711 = vmul.f32 %v522, %v678
  %v712 = vmul.f32 %v523, %v678
  %v713 = vmul.f32 %v524, %v678
  %v714 = vmul.f32 %v525, %v678
  %v715 = vmul.f32 %v526, %v678
  %v716 = vmul.f32 %v527, %v678
  %v717 = vmul.f32 %v528, %v678
  %v718 = vmul.f32 %v529, %v678
  %v719 = vmul.f32 %v530, %v678
  %v720 = vmul.f32 %v531, %v678
  %v721 = vmul.f32 %v532, %v678
  %v723 = vperm.slane %v387, 0
  %v725 = vmul.f32 %v679, %v723
  %v726 = vmul.f32 %v680, %v723
  %v727 = vmul.f32 %v681, %v723
  %v728 = vmul.f32 %v682, %v723
  %v729 = vmul.f32 %v683, %v723
  %v730 = vmul.f32 %v684, %v723
  %v731 = vmul.f32 %v685, %v723
  %v732 = vmul.f32 %v686, %v723
  %v733 = vmul.f32 %v687, %v723
  %v734 = vmul.f32 %v688, %v723
  %v735 = vmul.f32 %v689, %v723
  %v736 = vmul.f32 %v690, %v723
  %v737 = vmul.f32 %v691, %v723
  %v738 = vmul.f32 %v692, %v723
  %v739 = vmul.f32 %v693, %v723
  %v740 = vmul.f32 %v694, %v723
  %v741 = vmul.f32 %v695, %v723
  %v742 = vmul.f32 %v696, %v723
  %v743 = vmul.f32 %v697, %v723
  %v744 = vmul.f32 %v698, %v723
  %v745 = vmul.f32 %v699, %v723
  %v746 = vmul.f32 %v700, %v723
  %v747 = vmul.f32 %v701, %v723
  %v748 = vmul.f32 %v702, %v723
  %v749 = vmul.f32 %v703, %v723
  %v750 = vmul.f32 %v704, %v723
  %v751 = vmul.f32 %v705, %v723
  %v752 = vmul.f32 %v706, %v723
  %v753 = vmul.f32 %v707, %v723
  %v754 = vmul.f32 %v708, %v723
  %v755 = vmul.f32 %v709, %v723
  %v756 = vmul.f32 %v710, %v723
  %v757 = vmul.f32 %v711, %v723
  %v758 = vmul.f32 %v712, %v723
  %v759 = vmul.f32 %v713, %v723
  %v760 = vmul.f32 %v714, %v723
  %v761 = vmul.f32 %v715, %v723
  %v762 = vmul.f32 %v716, %v723
  %v763 = vmul.f32 %v717, %v723
  %v764 = vmul.f32 %v718, %v723
  %v765 = vmul.f32 %v719, %v723
  %v766 = vmul.f32 %v720, %v723
  %v767 = vmul.f32 %v721, %v723
  %v769 = vperm.slane %v388, 0
  %v771 = vadd.f32 %v725, %v769
  %v772 = vadd.f32 %v726, %v769
  %v773 = vadd.f32 %v727, %v769
  %v774 = vadd.f32 %v728, %v769
  %v775 = vadd.f32 %v729, %v769
  %v776 = vadd.f32 %v730, %v769
  %v777 = vadd.f32 %v731, %v769
  %v778 = vadd.f32 %v732, %v769
  %v779 = vadd.f32 %v733, %v769
  %v780 = vadd.f32 %v734, %v769
  %v781 = vadd.f32 %v735, %v769
  %v782 = vadd.f32 %v736, %v769
  %v783 = vadd.f32 %v737, %v769
  %v784 = vadd.f32 %v738, %v769
  %v785 = vadd.f32 %v739, %v769
  %v786 = vadd.f32 %v740, %v769
  %v787 = vadd.f32 %v741, %v769
  %v788 = vadd.f32 %v742, %v769
  %v789 = vadd.f32 %v743, %v769
  %v790 = vadd.f32 %v744, %v769
  %v791 = vadd.f32 %v745, %v769
  %v792 = vadd.f32 %v746, %v769
  %v793 = vadd.f32 %v747, %v769
  %v794 = vadd.f32 %v748, %v769
  %v795 = vadd.f32 %v749, %v769
  %v796 = vadd.f32 %v750, %v769
  %v797 = vadd.f32 %v751, %v769
  %v798 = vadd.f32 %v752, %v769
  %v799 = vadd.f32 %v753, %v769
  %v800 = vadd.f32 %v754, %v769
  %v801 = vadd.f32 %v755, %v769
  %v802 = vadd.f32 %v756, %v769
  %v803 = vadd.f32 %v757, %v769
  %v804 = vadd.f32 %v758, %v769
  %v805 = vadd.f32 %v759, %v769
  %v806 = vadd.f32 %v760, %v769
  %v807 = vadd.f32 %v761, %v769
  %v808 = vadd.f32 %v762, %v769
  %v809 = vadd.f32 %v763, %v769
  %v810 = vadd.f32 %v764, %v769
  %v811 = vadd.f32 %v765, %v769
  %v812 = vadd.f32 %v766, %v769
  %v813 = vadd.f32 %v767, %v769
  %v814 = vmax.f32 %v771, 0.0
  %v815 = vmax.f32 %v772, 0.0
  %v816 = vmax.f32 %v773, 0.0
  %v817 = vmax.f32 %v774, 0.0
  %v818 = vmax.f32 %v775, 0.0
  %v819 = vmax.f32 %v776, 0.0
  %v820 = vmax.f32 %v777, 0.0
  %v821 = vmax.f32 %v778, 0.0
  %v822 = vmax.f32 %v779, 0.0
  %v823 = vmax.f32 %v780, 0.0
  %v824 = vmax.f32 %v781, 0.0
  %v825 = vmax.f32 %v782, 0.0
  %v826 = vmax.f32 %v783, 0.0
  %v827 = vmax.f32 %v784, 0.0
  %v828 = vmax.f32 %v785, 0.0
  %v829 = vmax.f32 %v786, 0.0
  %v830 = vmax.f32 %v787, 0.0
  %v831 = vmax.f32 %v788, 0.0
  %v832 = vmax.f32 %v789, 0.0
  %v833 = vmax.f32 %v790, 0.0
  %v834 = vmax.f32 %v791, 0.0
  %v835 = vmax.f32 %v792, 0.0
  %v836 = vmax.f32 %v793, 0.0
  %v837 = vmax.f32 %v794, 0.0
  %v838 = vmax.f32 %v795, 0.0
  %v839 = vmax.f32 %v796, 0.0
  %v840 = vmax.f32 %v797, 0.0
  %v841 = vmax.f32 %v798, 0.0
  %v842 = vmax.f32 %v799, 0.0
  %v843 = vmax.f32 %v800, 0.0
  %v844 = vmax.f32 %v801, 0.0
  %v845 = vmax.f32 %v802, 0.0
  %v846 = vmax.f32 %v803, 0.0
  %v847 = vmax.f32 %v804, 0.0
  %v848 = vmax.f32 %v805, 0.0
  %v849 = vmax.f32 %v806, 0.0
  %v850 = vmax.f32 %v807, 0.0
  %v851 = vmax.f32 %v808, 0.0
  %v852 = vmax.f32 %v809, 0.0
  %v853 = vmax.f32 %v810, 0.0
  %v854 = vmax.f32 %v811, 0.0
  %v855 = vmax.f32 %v812, 0.0
  %v856 = vmax.f32 %v813, 0.0
  %v857 = vld [vmem:[%s4] sm:$0xff]
  %v858 = vld [vmem:[%s4 + $0x8] sm:$0xff]
  %v859 = vld [vmem:[%s4 + $0x10] sm:$0xff]
  %v860 = vld [vmem:[%s4 + $0x18] sm:$0xff]
  %v861 = vld [vmem:[%s4 + $0x20] sm:$0xff]
  %v862 = vld [vmem:[%s4 + $0x28] sm:$0xff]
  %v863 = vld [vmem:[%s4 + $0x30] sm:$0xff]
  %v864 = vld [vmem:[%s4 + $0x38] sm:$0xff]
  %v865 = vld [vmem:[%s4 + $0x40] sm:$0xff]
  %v866 = vld [vmem:[%s4 + $0x48] sm:$0xff]
  %v867 = vld [vmem:[%s4 + $0x50] sm:$0xff]
  %v868 = vld [vmem:[%s4 + $0x58] sm:$0xff]
  %v869 = vld [vmem:[%s4 + $0x60] sm:$0xff]
  %v870 = vld [vmem:[%s4 + $0x68] sm:$0xff]
  %v871 = vld [vmem:[%s4 + $0x70] sm:$0xff]
  %v872 = vld [vmem:[%s4 + $0x78] sm:$0xff]
  %v873 = vld [vmem:[%s4 + $0x80] sm:$0xff]
  %v874 = vld [vmem:[%s4 + $0x88] sm:$0xff]
  %v875 = vld [vmem:[%s4 + $0x90] sm:$0xff]
  %v876 = vld [vmem:[%s4 + $0x98] sm:$0xff]
  %v877 = vld [vmem:[%s4 + $0xa0] sm:$0xff]
  %v878 = vld [vmem:[%s4 + $0xa8] sm:$0xff]
  %v879 = vld [vmem:[%s4 + $0xb0] sm:$0xff]
  %v880 = vld [vmem:[%s4 + $0xb8] sm:$0xff]
  %v881 = vld [vmem:[%s4 + $0xc0] sm:$0xff]
  %v882 = vld [vmem:[%s4 + $0xc8] sm:$0xff]
  %v883 = vld [vmem:[%s4 + $0xd0] sm:$0xff]
  %v884 = vld [vmem:[%s4 + $0xd8] sm:$0xff]
  %v885 = vld [vmem:[%s4 + $0xe0] sm:$0xff]
  %v886 = vld [vmem:[%s4 + $0xe8] sm:$0xff]
  %v887 = vld [vmem:[%s4 + $0xf0] sm:$0xff]
  %v888 = vld [vmem:[%s4 + $0xf8] sm:$0xff]
  %v889 = vld [vmem:[%s4 + $0x100] sm:$0xff]
  %v890 = vld [vmem:[%s4 + $0x108] sm:$0xff]
  %v891 = vld [vmem:[%s4 + $0x110] sm:$0xff]
  %v892 = vld [vmem:[%s4 + $0x118] sm:$0xff]
  %v893 = vld [vmem:[%s4 + $0x120] sm:$0x3]
  %v894 = vld [vmem:[%s4 + $0x128] sm:$0x3]
  %v895 = vld [vmem:[%s4 + $0x130] sm:$0x3]
  %vm896 = vcmask 670720
  %v898 = vsel %vm896, %v859, 0
  %v901 = vsel %vm896, %v862, 0
  %v904 = vsel %vm896, %v865, 0
  %v907 = vsel %vm896, %v868, 0
  %v910 = vsel %vm896, %v871, 0
  %v913 = vsel %vm896, %v874, 0
  %v916 = vsel %vm896, %v877, 0
  %v919 = vsel %vm896, %v880, 0
  %v922 = vsel %vm896, %v883, 0
  %v925 = vsel %vm896, %v886, 0
  %v928 = vsel %vm896, %v889, 0
  %v931 = vsel %vm896, %v892, 0
  %v934 = vsel %vm896, %v895, 0
  %vm936 = vcmask 1041408
  %v938 = vsel %vm936, %v856, 0
  %940 = vmatpush.msra.mxu0 %v829
  %941 = vmatpush.msra.mxu0 %v828
  %942 = vmatpush.msra.mxu0 %v827
  %943 = vmatpush.msra.mxu0 %v826
  %944 = vmatpush.msra.mxu0 %v825
  %945 = vmatpush.msra.mxu0 %v824
  %946 = vmatpush.msra.mxu0 %v823
  %947 = vmatpush.msra.mxu0 %v822
  %948 = vmatpush.msra.mxu0 %v821
  %949 = vmatpush.msra.mxu0 %v820
  %950 = vmatpush.msra.mxu0 %v819
  %951 = vmatpush.msra.mxu0 %v818
  %952 = vmatpush.msra.mxu0 %v817
  %953 = vmatpush.msra.mxu0 %v816
  %954 = vmatpush.msra.mxu0 %v815
  %955 = vmatpush.msra.mxu0 %v814
  %956 = vmatmul.f32.gmra.mxu0 %v857
  %v957 = vpop.f32.mrf.mxu0
  %v958 = vadd.f32 0.0, %v957
  %959 = vmatmul.f32.gmra.mxu0 %v860
  %v960 = vpop.f32.mrf.mxu0
  %v961 = vadd.f32 0.0, %v960
  %962 = vmatmul.f32.gmra.mxu0 %v863
  %v963 = vpop.f32.mrf.mxu0
  %v964 = vadd.f32 0.0, %v963
  %965 = vmatmul.f32.gmra.mxu0 %v866
  %v966 = vpop.f32.mrf.mxu0
  %v967 = vadd.f32 0.0, %v966
  %968 = vmatmul.f32.gmra.mxu0 %v869
  %v969 = vpop.f32.mrf.mxu0
  %v970 = vadd.f32 0.0, %v969
  %971 = vmatmul.f32.gmra.mxu0 %v872
  %v972 = vpop.f32.mrf.mxu0
  %v973 = vadd.f32 0.0, %v972
  %974 = vmatmul.f32.gmra.mxu0 %v875
  %v975 = vpop.f32.mrf.mxu0
  %v976 = vadd.f32 0.0, %v975
  %977 = vmatmul.f32.gmra.mxu0 %v878
  %v978 = vpop.f32.mrf.mxu0
  %v979 = vadd.f32 0.0, %v978
  %980 = vmatmul.f32.gmra.mxu0 %v881
  %v981 = vpop.f32.mrf.mxu0
  %v982 = vadd.f32 0.0, %v981
  %983 = vmatmul.f32.gmra.mxu0 %v884
  %v984 = vpop.f32.mrf.mxu0
  %v985 = vadd.f32 0.0, %v984
  %986 = vmatmul.f32.gmra.mxu0 %v887
  %v987 = vpop.f32.mrf.mxu0
  %v988 = vadd.f32 0.0, %v987
  %989 = vmatmul.f32.gmra.mxu0 %v890
  %v990 = vpop.f32.mrf.mxu0
  %v991 = vadd.f32 0.0, %v990
  %992 = vmatmul.f32.gmra.mxu0 %v893
  %v993 = vpop.f32.mrf.mxu0
  %v994 = vadd.f32 0.0, %v993
  %995 = vdwg.mxu0
  %996 = vmatpush.msra.mxu0 %v845
  %997 = vmatpush.msra.mxu0 %v844
  %998 = vmatpush.msra.mxu0 %v843
  %999 = vmatpush.msra.mxu0 %v842
  %1000 = vmatpush.msra.mxu0 %v841
  %1001 = vmatpush.msra.mxu0 %v840
  %1002 = vmatpush.msra.mxu0 %v839
  %1003 = vmatpush.msra.mxu0 %v838
  %1004 = vmatpush.msra.mxu0 %v837
  %1005 = vmatpush.msra.mxu0 %v836
  %1006 = vmatpush.msra.mxu0 %v835
  %1007 = vmatpush.msra.mxu0 %v834
  %1008 = vmatpush.msra.mxu0 %v833
  %1009 = vmatpush.msra.mxu0 %v832
  %1010 = vmatpush.msra.mxu0 %v831
  %1011 = vmatpush.msra.mxu0 %v830
  %1012 = vmatmul.f32.gmra.mxu0 %v858
  %v1013 = vpop.f32.mrf.mxu0
  %v1014 = vadd.f32 %v958, %v1013
  %1015 = vmatmul.f32.gmra.mxu0 %v861
  %v1016 = vpop.f32.mrf.mxu0
  %v1017 = vadd.f32 %v961, %v1016
  %1018 = vmatmul.f32.gmra.mxu0 %v864
  %v1019 = vpop.f32.mrf.mxu0
  %v1020 = vadd.f32 %v964, %v1019
  %1021 = vmatmul.f32.gmra.mxu0 %v867
  %v1022 = vpop.f32.mrf.mxu0
  %v1023 = vadd.f32 %v967, %v1022
  %1024 = vmatmul.f32.gmra.mxu0 %v870
  %v1025 = vpop.f32.mrf.mxu0
  %v1026 = vadd.f32 %v970, %v1025
  %1027 = vmatmul.f32.gmra.mxu0 %v873
  %v1028 = vpop.f32.mrf.mxu0
  %v1029 = vadd.f32 %v973, %v1028
  %1030 = vmatmul.f32.gmra.mxu0 %v876
  %v1031 = vpop.f32.mrf.mxu0
  %v1032 = vadd.f32 %v976, %v1031
  %1033 = vmatmul.f32.gmra.mxu0 %v879
  %v1034 = vpop.f32.mrf.mxu0
  %v1035 = vadd.f32 %v979, %v1034
  %1036 = vmatmul.f32.gmra.mxu0 %v882
  %v1037 = vpop.f32.mrf.mxu0
  %v1038 = vadd.f32 %v982, %v1037
  %1039 = vmatmul.f32.gmra.mxu0 %v885
  %v1040 = vpop.f32.mrf.mxu0
  %v1041 = vadd.f32 %v985, %v1040
  %1042 = vmatmul.f32.gmra.mxu0 %v888
  %v1043 = vpop.f32.mrf.mxu0
  %v1044 = vadd.f32 %v988, %v1043
  %1045 = vmatmul.f32.gmra.mxu0 %v891
  %v1046 = vpop.f32.mrf.mxu0
  %v1047 = vadd.f32 %v991, %v1046
  %1048 = vmatmul.f32.gmra.mxu0 %v894
  %v1049 = vpop.f32.mrf.mxu0
  %v1050 = vadd.f32 %v994, %v1049
  %1051 = vdwg.mxu0
  %1052 = vmatpush.msra.mxu0 0.0
  %1053 = vmatpush.msra.mxu0 0.0
  %1054 = vmatpush.msra.mxu0 0.0
  %1055 = vmatpush.msra.mxu0 0.0
  %1056 = vmatpush.msra.mxu0 0.0
  %1057 = vmatpush.msra.mxu0 %v938
  %1058 = vmatpush.msra.mxu0 %v855
  %1059 = vmatpush.msra.mxu0 %v854
  %1060 = vmatpush.msra.mxu0 %v853
  %1061 = vmatpush.msra.mxu0 %v852
  %1062 = vmatpush.msra.mxu0 %v851
  %1063 = vmatpush.msra.mxu0 %v850
  %1064 = vmatpush.msra.mxu0 %v849
  %1065 = vmatpush.msra.mxu0 %v848
  %1066 = vmatpush.msra.mxu0 %v847
  %1067 = vmatpush.msra.mxu0 %v846
  %1068 = vmatmul.f32.gmra.mxu0 %v898
  %v1069 = vpop.f32.mrf.mxu0
  %v1070 = vadd.f32 %v1014, %v1069
  %1071 = vmatmul.f32.gmra.mxu0 %v901
  %v1072 = vpop.f32.mrf.mxu0
  %v1073 = vadd.f32 %v1017, %v1072
  %1074 = vmatmul.f32.gmra.mxu0 %v904
  %v1075 = vpop.f32.mrf.mxu0
  %v1076 = vadd.f32 %v1020, %v1075
  %1077 = vmatmul.f32.gmra.mxu0 %v907
  %v1078 = vpop.f32.mrf.mxu0
  %v1079 = vadd.f32 %v1023, %v1078
  %1080 = vmatmul.f32.gmra.mxu0 %v910
  %v1081 = vpop.f32.mrf.mxu0
  %v1082 = vadd.f32 %v1026, %v1081
  %1083 = vmatmul.f32.gmra.mxu0 %v913
  %v1084 = vpop.f32.mrf.mxu0
  %v1085 = vadd.f32 %v1029, %v1084
  %1086 = vmatmul.f32.gmra.mxu0 %v916
  %v1087 = vpop.f32.mrf.mxu0
  %v1088 = vadd.f32 %v1032, %v1087
  %1089 = vmatmul.f32.gmra.mxu0 %v919
  %v1090 = vpop.f32.mrf.mxu0
  %v1091 = vadd.f32 %v1035, %v1090
  %1092 = vmatmul.f32.gmra.mxu0 %v922
  %v1093 = vpop.f32.mrf.mxu0
  %v1094 = vadd.f32 %v1038, %v1093
  %1095 = vmatmul.f32.gmra.mxu0 %v925
  %v1096 = vpop.f32.mrf.mxu0
  %v1097 = vadd.f32 %v1041, %v1096
  %1098 = vmatmul.f32.gmra.mxu0 %v928
  %v1099 = vpop.f32.mrf.mxu0
  %v1100 = vadd.f32 %v1044, %v1099
  %1101 = vmatmul.f32.gmra.mxu0 %v931
  %v1102 = vpop.f32.mrf.mxu0
  %v1103 = vadd.f32 %v1047, %v1102
  %1104 = vmatmul.f32.gmra.mxu0 %v934
  %v1105 = vpop.f32.mrf.mxu0
  %v1106 = vadd.f32 %v1050, %v1105
  %1107 = vdwg.mxu0
  %v1108 = vld [vmem:[%s5] sm:$0xf]
  %s1109 = scalar_lea.vmem %s4, 312
  %v1110 = vld [vmem:[%s1109] sm:$0xff]
  %v1111 = vld [vmem:[%s1109 + $0x8] sm:$0xff]
  %v1112 = vld [vmem:[%s1109 + $0x10] sm:$0xff]
  %v1113 = vld [vmem:[%s1109 + $0x18] sm:$0xff]
  %v1114 = vld [vmem:[%s1109 + $0x20] sm:$0xff]
  %v1115 = vld [vmem:[%s1109 + $0x28] sm:$0xff]
  %v1116 = vld [vmem:[%s1109 + $0x30] sm:$0xff]
  %v1117 = vld [vmem:[%s1109 + $0x38] sm:$0xff]
  %v1118 = vld [vmem:[%s1109 + $0x40] sm:$0xff]
  %v1119 = vld [vmem:[%s1109 + $0x48] sm:$0xff]
  %v1120 = vld [vmem:[%s1109 + $0x50] sm:$0xff]
  %v1121 = vld [vmem:[%s1109 + $0x58] sm:$0xff]
  %v1122 = vld [vmem:[%s1109 + $0x60] sm:$0xff]
  %v1123 = vld [vmem:[%s1109 + $0x68] sm:$0xff]
  %v1124 = vld [vmem:[%s1109 + $0x70] sm:$0xff]
  %v1125 = vld [vmem:[%s1109 + $0x78] sm:$0xff]
  %v1126 = vld [vmem:[%s1109 + $0x80] sm:$0xff]
  %v1127 = vld [vmem:[%s1109 + $0x88] sm:$0xff]
  %v1128 = vld [vmem:[%s1109 + $0x90] sm:$0xff]
  %v1129 = vld [vmem:[%s1109 + $0x98] sm:$0xff]
  %v1130 = vld [vmem:[%s1109 + $0xa0] sm:$0xff]
  %v1131 = vld [vmem:[%s1109 + $0xa8] sm:$0xff]
  %v1132 = vld [vmem:[%s1109 + $0xb0] sm:$0xff]
  %v1133 = vld [vmem:[%s1109 + $0xb8] sm:$0xff]
  %v1134 = vld [vmem:[%s1109 + $0xc0] sm:$0xff]
  %v1135 = vld [vmem:[%s1109 + $0xc8] sm:$0xff]
  %v1136 = vld [vmem:[%s1109 + $0xd0] sm:$0xff]
  %v1137 = vld [vmem:[%s1109 + $0xd8] sm:$0xff]
  %v1138 = vld [vmem:[%s1109 + $0xe0] sm:$0xff]
  %v1139 = vld [vmem:[%s1109 + $0xe8] sm:$0xff]
  %v1140 = vld [vmem:[%s1109 + $0xf0] sm:$0xff]
  %v1141 = vld [vmem:[%s1109 + $0xf8] sm:$0xff]
  %v1142 = vld [vmem:[%s1109 + $0x100] sm:$0xff]
  %v1143 = vld [vmem:[%s1109 + $0x108] sm:$0xff]
  %v1144 = vld [vmem:[%s1109 + $0x110] sm:$0xff]
  %v1145 = vld [vmem:[%s1109 + $0x118] sm:$0xff]
  %v1146 = vld [vmem:[%s1109 + $0x120] sm:$0x3]
  %v1147 = vld [vmem:[%s1109 + $0x128] sm:$0x3]
  %v1148 = vld [vmem:[%s1109 + $0x130] sm:$0x3]
  %v1150 = vsel %vm896, %v1112, 0
  %v1153 = vsel %vm896, %v1115, 0
  %v1156 = vsel %vm896, %v1118, 0
  %v1159 = vsel %vm896, %v1121, 0
  %v1162 = vsel %vm896, %v1124, 0
  %v1165 = vsel %vm896, %v1127, 0
  %v1168 = vsel %vm896, %v1130, 0
  %v1171 = vsel %vm896, %v1133, 0
  %v1174 = vsel %vm896, %v1136, 0
  %v1177 = vsel %vm896, %v1139, 0
  %v1180 = vsel %vm896, %v1142, 0
  %v1183 = vsel %vm896, %v1145, 0
  %v1186 = vsel %vm896, %v1148, 0
  %1188 = vmatpush.msra.mxu0 %v829
  %1189 = vmatpush.msra.mxu0 %v828
  %1190 = vmatpush.msra.mxu0 %v827
  %1191 = vmatpush.msra.mxu0 %v826
  %1192 = vmatpush.msra.mxu0 %v825
  %1193 = vmatpush.msra.mxu0 %v824
  %1194 = vmatpush.msra.mxu0 %v823
  %1195 = vmatpush.msra.mxu0 %v822
  %1196 = vmatpush.msra.mxu0 %v821
  %1197 = vmatpush.msra.mxu0 %v820
  %1198 = vmatpush.msra.mxu0 %v819
  %1199 = vmatpush.msra.mxu0 %v818
  %1200 = vmatpush.msra.mxu0 %v817
  %1201 = vmatpush.msra.mxu0 %v816
  %1202 = vmatpush.msra.mxu0 %v815
  %1203 = vmatpush.msra.mxu0 %v814
  %1204 = vmatmul.f32.gmra.mxu0 %v1110
  %v1205 = vpop.f32.mrf.mxu0
  %v1206 = vadd.f32 0.0, %v1205
  %1207 = vmatmul.f32.gmra.mxu0 %v1113
  %v1208 = vpop.f32.mrf.mxu0
  %v1209 = vadd.f32 0.0, %v1208
  %1210 = vmatmul.f32.gmra.mxu0 %v1116
  %v1211 = vpop.f32.mrf.mxu0
  %v1212 = vadd.f32 0.0, %v1211
  %1213 = vmatmul.f32.gmra.mxu0 %v1119
  %v1214 = vpop.f32.mrf.mxu0
  %v1215 = vadd.f32 0.0, %v1214
  %1216 = vmatmul.f32.gmra.mxu0 %v1122
  %v1217 = vpop.f32.mrf.mxu0
  %v1218 = vadd.f32 0.0, %v1217
  %1219 = vmatmul.f32.gmra.mxu0 %v1125
  %v1220 = vpop.f32.mrf.mxu0
  %v1221 = vadd.f32 0.0, %v1220
  %1222 = vmatmul.f32.gmra.mxu0 %v1128
  %v1223 = vpop.f32.mrf.mxu0
  %v1224 = vadd.f32 0.0, %v1223
  %1225 = vmatmul.f32.gmra.mxu0 %v1131
  %v1226 = vpop.f32.mrf.mxu0
  %v1227 = vadd.f32 0.0, %v1226
  %1228 = vmatmul.f32.gmra.mxu0 %v1134
  %v1229 = vpop.f32.mrf.mxu0
  %v1230 = vadd.f32 0.0, %v1229
  %1231 = vmatmul.f32.gmra.mxu0 %v1137
  %v1232 = vpop.f32.mrf.mxu0
  %v1233 = vadd.f32 0.0, %v1232
  %1234 = vmatmul.f32.gmra.mxu0 %v1140
  %v1235 = vpop.f32.mrf.mxu0
  %v1236 = vadd.f32 0.0, %v1235
  %1237 = vmatmul.f32.gmra.mxu0 %v1143
  %v1238 = vpop.f32.mrf.mxu0
  %v1239 = vadd.f32 0.0, %v1238
  %1240 = vmatmul.f32.gmra.mxu0 %v1146
  %v1241 = vpop.f32.mrf.mxu0
  %v1242 = vadd.f32 0.0, %v1241
  %1243 = vdwg.mxu0
  %1244 = vmatpush.msra.mxu0 %v845
  %1245 = vmatpush.msra.mxu0 %v844
  %1246 = vmatpush.msra.mxu0 %v843
  %1247 = vmatpush.msra.mxu0 %v842
  %1248 = vmatpush.msra.mxu0 %v841
  %1249 = vmatpush.msra.mxu0 %v840
  %1250 = vmatpush.msra.mxu0 %v839
  %1251 = vmatpush.msra.mxu0 %v838
  %1252 = vmatpush.msra.mxu0 %v837
  %1253 = vmatpush.msra.mxu0 %v836
  %1254 = vmatpush.msra.mxu0 %v835
  %1255 = vmatpush.msra.mxu0 %v834
  %1256 = vmatpush.msra.mxu0 %v833
  %1257 = vmatpush.msra.mxu0 %v832
  %1258 = vmatpush.msra.mxu0 %v831
  %1259 = vmatpush.msra.mxu0 %v830
  %1260 = vmatmul.f32.gmra.mxu0 %v1111
  %v1261 = vpop.f32.mrf.mxu0
  %v1262 = vadd.f32 %v1206, %v1261
  %1263 = vmatmul.f32.gmra.mxu0 %v1114
  %v1264 = vpop.f32.mrf.mxu0
  %v1265 = vadd.f32 %v1209, %v1264
  %1266 = vmatmul.f32.gmra.mxu0 %v1117
  %v1267 = vpop.f32.mrf.mxu0
  %v1268 = vadd.f32 %v1212, %v1267
  %1269 = vmatmul.f32.gmra.mxu0 %v1120
  %v1270 = vpop.f32.mrf.mxu0
  %v1271 = vadd.f32 %v1215, %v1270
  %1272 = vmatmul.f32.gmra.mxu0 %v1123
  %v1273 = vpop.f32.mrf.mxu0
  %v1274 = vadd.f32 %v1218, %v1273
  %1275 = vmatmul.f32.gmra.mxu0 %v1126
  %v1276 = vpop.f32.mrf.mxu0
  %v1277 = vadd.f32 %v1221, %v1276
  %1278 = vmatmul.f32.gmra.mxu0 %v1129
  %v1279 = vpop.f32.mrf.mxu0
  %v1280 = vadd.f32 %v1224, %v1279
  %1281 = vmatmul.f32.gmra.mxu0 %v1132
  %v1282 = vpop.f32.mrf.mxu0
  %v1283 = vadd.f32 %v1227, %v1282
  %1284 = vmatmul.f32.gmra.mxu0 %v1135
  %v1285 = vpop.f32.mrf.mxu0
  %v1286 = vadd.f32 %v1230, %v1285
  %1287 = vmatmul.f32.gmra.mxu0 %v1138
  %v1288 = vpop.f32.mrf.mxu0
  %v1289 = vadd.f32 %v1233, %v1288
  %1290 = vmatmul.f32.gmra.mxu0 %v1141
  %v1291 = vpop.f32.mrf.mxu0
  %v1292 = vadd.f32 %v1236, %v1291
  %1293 = vmatmul.f32.gmra.mxu0 %v1144
  %v1294 = vpop.f32.mrf.mxu0
  %v1295 = vadd.f32 %v1239, %v1294
  %1296 = vmatmul.f32.gmra.mxu0 %v1147
  %v1297 = vpop.f32.mrf.mxu0
  %v1298 = vadd.f32 %v1242, %v1297
  %1299 = vdwg.mxu0
  %1300 = vmatpush.msra.mxu0 0.0
  %1301 = vmatpush.msra.mxu0 0.0
  %1302 = vmatpush.msra.mxu0 0.0
  %1303 = vmatpush.msra.mxu0 0.0
  %1304 = vmatpush.msra.mxu0 0.0
  %1305 = vmatpush.msra.mxu0 %v938
  %1306 = vmatpush.msra.mxu0 %v855
  %1307 = vmatpush.msra.mxu0 %v854
  %1308 = vmatpush.msra.mxu0 %v853
  %1309 = vmatpush.msra.mxu0 %v852
  %1310 = vmatpush.msra.mxu0 %v851
  %1311 = vmatpush.msra.mxu0 %v850
  %1312 = vmatpush.msra.mxu0 %v849
  %1313 = vmatpush.msra.mxu0 %v848
  %1314 = vmatpush.msra.mxu0 %v847
  %1315 = vmatpush.msra.mxu0 %v846
  %1316 = vmatmul.f32.gmra.mxu0 %v1150
  %v1317 = vpop.f32.mrf.mxu0
  %v1318 = vadd.f32 %v1262, %v1317
  %1319 = vmatmul.f32.gmra.mxu0 %v1153
  %v1320 = vpop.f32.mrf.mxu0
  %v1321 = vadd.f32 %v1265, %v1320
  %1322 = vmatmul.f32.gmra.mxu0 %v1156
  %v1323 = vpop.f32.mrf.mxu0
  %v1324 = vadd.f32 %v1268, %v1323
  %1325 = vmatmul.f32.gmra.mxu0 %v1159
  %v1326 = vpop.f32.mrf.mxu0
  %v1327 = vadd.f32 %v1271, %v1326
  %1328 = vmatmul.f32.gmra.mxu0 %v1162
  %v1329 = vpop.f32.mrf.mxu0
  %v1330 = vadd.f32 %v1274, %v1329
  %1331 = vmatmul.f32.gmra.mxu0 %v1165
  %v1332 = vpop.f32.mrf.mxu0
  %v1333 = vadd.f32 %v1277, %v1332
  %1334 = vmatmul.f32.gmra.mxu0 %v1168
  %v1335 = vpop.f32.mrf.mxu0
  %v1336 = vadd.f32 %v1280, %v1335
  %1337 = vmatmul.f32.gmra.mxu0 %v1171
  %v1338 = vpop.f32.mrf.mxu0
  %v1339 = vadd.f32 %v1283, %v1338
  %1340 = vmatmul.f32.gmra.mxu0 %v1174
  %v1341 = vpop.f32.mrf.mxu0
  %v1342 = vadd.f32 %v1286, %v1341
  %1343 = vmatmul.f32.gmra.mxu0 %v1177
  %v1344 = vpop.f32.mrf.mxu0
  %v1345 = vadd.f32 %v1289, %v1344
  %1346 = vmatmul.f32.gmra.mxu0 %v1180
  %v1347 = vpop.f32.mrf.mxu0
  %v1348 = vadd.f32 %v1292, %v1347
  %1349 = vmatmul.f32.gmra.mxu0 %v1183
  %v1350 = vpop.f32.mrf.mxu0
  %v1351 = vadd.f32 %v1295, %v1350
  %1352 = vmatmul.f32.gmra.mxu0 %v1186
  %v1353 = vpop.f32.mrf.mxu0
  %v1354 = vadd.f32 %v1298, %v1353
  %1355 = vdwg.mxu0
  %s1356 = scalar_lea.vmem %s5, 4
  %v1357 = vld [vmem:[%s1356] sm:$0xf]
  %v1359 = vsel %vm389, %v1318, 0
  %v1362 = vsel %vm389, %v1321, 0
  %v1365 = vsel %vm389, %v1324, 0
  %v1368 = vsel %vm389, %v1327, 0
  %v1371 = vsel %vm389, %v1330, 0
  %v1374 = vsel %vm389, %v1333, 0
  %v1377 = vsel %vm389, %v1336, 0
  %v1380 = vsel %vm389, %v1339, 0
  %v1383 = vsel %vm389, %v1342, 0
  %v1386 = vsel %vm389, %v1345, 0
  %v1389 = vsel %vm389, %v1348, 0
  %v1392 = vsel %vm389, %v1351, 0
  %v1395 = vsel %vm389, %v1354, 0
  %vm1397 = vcmask 1043456
  %v1399 = vsel %vm1397, %v1357, 0
  %1401 = vmatpush.msra.mxu0 0.0
  %1402 = vmatpush.msra.mxu0 0.0
  %1403 = vmatpush.msra.mxu0 0.0
  %1404 = vmatpush.msra.mxu0 0.0
  %1405 = vmatpush.msra.mxu0 0.0
  %1406 = vmatpush.msra.mxu0 0.0
  %1407 = vmatpush.msra.mxu0 0.0
  %1408 = vmatpush.msra.mxu0 0.0
  %1409 = vmatpush.msra.mxu0 0.0
  %1410 = vmatpush.msra.mxu0 0.0
  %1411 = vmatpush.msra.mxu0 0.0
  %1412 = vmatpush.msra.mxu0 0.0
  %1413 = vmatpush.msra.mxu0 0.0
  %1414 = vmatpush.msra.mxu0 0.0
  %1415 = vmatpush.msra.mxu0 0.0
  %1416 = vmatpush.msra.mxu0 %v1399
  %1417 = vmatmul.f32.gmra.mxu0 %v1359
  %v1418 = vpop.f32.mrf.mxu0
  %v1419 = vadd.f32 0.0, %v1418
  %1420 = vmatmul.f32.gmra.mxu0 %v1362
  %v1421 = vpop.f32.mrf.mxu0
  %v1422 = vadd.f32 0.0, %v1421
  %1423 = vmatmul.f32.gmra.mxu0 %v1365
  %v1424 = vpop.f32.mrf.mxu0
  %v1425 = vadd.f32 0.0, %v1424
  %1426 = vmatmul.f32.gmra.mxu0 %v1368
  %v1427 = vpop.f32.mrf.mxu0
  %v1428 = vadd.f32 0.0, %v1427
  %1429 = vmatmul.f32.gmra.mxu0 %v1371
  %v1430 = vpop.f32.mrf.mxu0
  %v1431 = vadd.f32 0.0, %v1430
  %1432 = vmatmul.f32.gmra.mxu0 %v1374
  %v1433 = vpop.f32.mrf.mxu0
  %v1434 = vadd.f32 0.0, %v1433
  %1435 = vmatmul.f32.gmra.mxu0 %v1377
  %v1436 = vpop.f32.mrf.mxu0
  %v1437 = vadd.f32 0.0, %v1436
  %1438 = vmatmul.f32.gmra.mxu0 %v1380
  %v1439 = vpop.f32.mrf.mxu0
  %v1440 = vadd.f32 0.0, %v1439
  %1441 = vmatmul.f32.gmra.mxu0 %v1383
  %v1442 = vpop.f32.mrf.mxu0
  %v1443 = vadd.f32 0.0, %v1442
  %1444 = vmatmul.f32.gmra.mxu0 %v1386
  %v1445 = vpop.f32.mrf.mxu0
  %v1446 = vadd.f32 0.0, %v1445
  %1447 = vmatmul.f32.gmra.mxu0 %v1389
  %v1448 = vpop.f32.mrf.mxu0
  %v1449 = vadd.f32 0.0, %v1448
  %1450 = vmatmul.f32.gmra.mxu0 %v1392
  %v1451 = vpop.f32.mrf.mxu0
  %v1452 = vadd.f32 0.0, %v1451
  %1453 = vmatmul.f32.gmra.mxu0 %v1395
  %v1454 = vpop.f32.mrf.mxu0
  %v1455 = vadd.f32 0.0, %v1454
  %1456 = vdwg.mxu0
  %v1458 = vsel %vm389, %v1070, 0
  %v1461 = vsel %vm389, %v1073, 0
  %v1464 = vsel %vm389, %v1076, 0
  %v1467 = vsel %vm389, %v1079, 0
  %v1470 = vsel %vm389, %v1082, 0
  %v1473 = vsel %vm389, %v1085, 0
  %v1476 = vsel %vm389, %v1088, 0
  %v1479 = vsel %vm389, %v1091, 0
  %v1482 = vsel %vm389, %v1094, 0
  %v1485 = vsel %vm389, %v1097, 0
  %v1488 = vsel %vm389, %v1100, 0
  %v1491 = vsel %vm389, %v1103, 0
  %v1494 = vsel %vm389, %v1106, 0
  %v1497 = vsel %vm1397, %v1108, 0
  %1499 = vmatpush.msra.mxu0 0.0
  %1500 = vmatpush.msra.mxu0 0.0
  %1501 = vmatpush.msra.mxu0 0.0
  %1502 = vmatpush.msra.mxu0 0.0
  %1503 = vmatpush.msra.mxu0 0.0
  %1504 = vmatpush.msra.mxu0 0.0
  %1505 = vmatpush.msra.mxu0 0.0
  %1506 = vmatpush.msra.mxu0 0.0
  %1507 = vmatpush.msra.mxu0 0.0
  %1508 = vmatpush.msra.mxu0 0.0
  %1509 = vmatpush.msra.mxu0 0.0
  %1510 = vmatpush.msra.mxu0 0.0
  %1511 = vmatpush.msra.mxu0 0.0
  %1512 = vmatpush.msra.mxu0 0.0
  %1513 = vmatpush.msra.mxu0 0.0
  %1514 = vmatpush.msra.mxu0 %v1497
  %1515 = vmatmul.f32.gmra.mxu0 %v1458
  %v1516 = vpop.f32.mrf.mxu0
  %v1517 = vadd.f32 %v1419, %v1516
  %1518 = vmatmul.f32.gmra.mxu0 %v1461
  %v1519 = vpop.f32.mrf.mxu0
  %v1520 = vadd.f32 %v1422, %v1519
  %1521 = vmatmul.f32.gmra.mxu0 %v1464
  %v1522 = vpop.f32.mrf.mxu0
  %v1523 = vadd.f32 %v1425, %v1522
  %1524 = vmatmul.f32.gmra.mxu0 %v1467
  %v1525 = vpop.f32.mrf.mxu0
  %v1526 = vadd.f32 %v1428, %v1525
  %1527 = vmatmul.f32.gmra.mxu0 %v1470
  %v1528 = vpop.f32.mrf.mxu0
  %v1529 = vadd.f32 %v1431, %v1528
  %1530 = vmatmul.f32.gmra.mxu0 %v1473
  %v1531 = vpop.f32.mrf.mxu0
  %v1532 = vadd.f32 %v1434, %v1531
  %1533 = vmatmul.f32.gmra.mxu0 %v1476
  %v1534 = vpop.f32.mrf.mxu0
  %v1535 = vadd.f32 %v1437, %v1534
  %1536 = vmatmul.f32.gmra.mxu0 %v1479
  %v1537 = vpop.f32.mrf.mxu0
  %v1538 = vadd.f32 %v1440, %v1537
  %1539 = vmatmul.f32.gmra.mxu0 %v1482
  %v1540 = vpop.f32.mrf.mxu0
  %v1541 = vadd.f32 %v1443, %v1540
  %1542 = vmatmul.f32.gmra.mxu0 %v1485
  %v1543 = vpop.f32.mrf.mxu0
  %v1544 = vadd.f32 %v1446, %v1543
  %1545 = vmatmul.f32.gmra.mxu0 %v1488
  %v1546 = vpop.f32.mrf.mxu0
  %v1547 = vadd.f32 %v1449, %v1546
  %1548 = vmatmul.f32.gmra.mxu0 %v1491
  %v1549 = vpop.f32.mrf.mxu0
  %v1550 = vadd.f32 %v1452, %v1549
  %1551 = vmatmul.f32.gmra.mxu0 %v1494
  %v1552 = vpop.f32.mrf.mxu0
  %v1553 = vadd.f32 %v1455, %v1552
  %1554 = vdwg.mxu0
  %s1555 = scalar_lea.vmem %s4, 624
  %v1556 = vld [vmem:[%s1555] sm:$0xff]
  %v1557 = vld [vmem:[%s1555 + $0x8] sm:$0xff]
  %v1558 = vld [vmem:[%s1555 + $0x10] sm:$0xff]
  %v1559 = vld [vmem:[%s1555 + $0x18] sm:$0xff]
  %v1560 = vld [vmem:[%s1555 + $0x20] sm:$0xff]
  %v1561 = vld [vmem:[%s1555 + $0x28] sm:$0xff]
  %v1562 = vld [vmem:[%s1555 + $0x30] sm:$0xff]
  %v1563 = vld [vmem:[%s1555 + $0x38] sm:$0xff]
  %v1564 = vld [vmem:[%s1555 + $0x40] sm:$0xff]
  %v1565 = vld [vmem:[%s1555 + $0x48] sm:$0xff]
  %v1566 = vld [vmem:[%s1555 + $0x50] sm:$0xff]
  %v1567 = vld [vmem:[%s1555 + $0x58] sm:$0xff]
  %v1568 = vld [vmem:[%s1555 + $0x60] sm:$0xff]
  %v1569 = vld [vmem:[%s1555 + $0x68] sm:$0xff]
  %v1570 = vld [vmem:[%s1555 + $0x70] sm:$0xff]
  %v1571 = vld [vmem:[%s1555 + $0x78] sm:$0xff]
  %v1572 = vld [vmem:[%s1555 + $0x80] sm:$0xff]
  %v1573 = vld [vmem:[%s1555 + $0x88] sm:$0xff]
  %v1574 = vld [vmem:[%s1555 + $0x90] sm:$0xff]
  %v1575 = vld [vmem:[%s1555 + $0x98] sm:$0xff]
  %v1576 = vld [vmem:[%s1555 + $0xa0] sm:$0xff]
  %v1577 = vld [vmem:[%s1555 + $0xa8] sm:$0xff]
  %v1578 = vld [vmem:[%s1555 + $0xb0] sm:$0xff]
  %v1579 = vld [vmem:[%s1555 + $0xb8] sm:$0xff]
  %v1580 = vld [vmem:[%s1555 + $0xc0] sm:$0xff]
  %v1581 = vld [vmem:[%s1555 + $0xc8] sm:$0xff]
  %v1582 = vld [vmem:[%s1555 + $0xd0] sm:$0xff]
  %v1583 = vld [vmem:[%s1555 + $0xd8] sm:$0xff]
  %v1584 = vld [vmem:[%s1555 + $0xe0] sm:$0xff]
  %v1585 = vld [vmem:[%s1555 + $0xe8] sm:$0xff]
  %v1586 = vld [vmem:[%s1555 + $0xf0] sm:$0xff]
  %v1587 = vld [vmem:[%s1555 + $0xf8] sm:$0xff]
  %v1588 = vld [vmem:[%s1555 + $0x100] sm:$0xff]
  %v1589 = vld [vmem:[%s1555 + $0x108] sm:$0xff]
  %v1590 = vld [vmem:[%s1555 + $0x110] sm:$0xff]
  %v1591 = vld [vmem:[%s1555 + $0x118] sm:$0xff]
  %v1592 = vld [vmem:[%s1555 + $0x120] sm:$0x3]
  %v1593 = vld [vmem:[%s1555 + $0x128] sm:$0x3]
  %v1594 = vld [vmem:[%s1555 + $0x130] sm:$0x3]
  %v1596 = vsel %vm896, %v1558, 0
  %v1599 = vsel %vm896, %v1561, 0
  %v1602 = vsel %vm896, %v1564, 0
  %v1605 = vsel %vm896, %v1567, 0
  %v1608 = vsel %vm896, %v1570, 0
  %v1611 = vsel %vm896, %v1573, 0
  %v1614 = vsel %vm896, %v1576, 0
  %v1617 = vsel %vm896, %v1579, 0
  %v1620 = vsel %vm896, %v1582, 0
  %v1623 = vsel %vm896, %v1585, 0
  %v1626 = vsel %vm896, %v1588, 0
  %v1629 = vsel %vm896, %v1591, 0
  %v1632 = vsel %vm896, %v1594, 0
  %1634 = vmatpush.msra.mxu0 %v829
  %1635 = vmatpush.msra.mxu0 %v828
  %1636 = vmatpush.msra.mxu0 %v827
  %1637 = vmatpush.msra.mxu0 %v826
  %1638 = vmatpush.msra.mxu0 %v825
  %1639 = vmatpush.msra.mxu0 %v824
  %1640 = vmatpush.msra.mxu0 %v823
  %1641 = vmatpush.msra.mxu0 %v822
  %1642 = vmatpush.msra.mxu0 %v821
  %1643 = vmatpush.msra.mxu0 %v820
  %1644 = vmatpush.msra.mxu0 %v819
  %1645 = vmatpush.msra.mxu0 %v818
  %1646 = vmatpush.msra.mxu0 %v817
  %1647 = vmatpush.msra.mxu0 %v816
  %1648 = vmatpush.msra.mxu0 %v815
  %1649 = vmatpush.msra.mxu0 %v814
  %1650 = vmatmul.f32.gmra.mxu0 %v1556
  %v1651 = vpop.f32.mrf.mxu0
  %v1652 = vadd.f32 0.0, %v1651
  %1653 = vmatmul.f32.gmra.mxu0 %v1559
  %v1654 = vpop.f32.mrf.mxu0
  %v1655 = vadd.f32 0.0, %v1654
  %1656 = vmatmul.f32.gmra.mxu0 %v1562
  %v1657 = vpop.f32.mrf.mxu0
  %v1658 = vadd.f32 0.0, %v1657
  %1659 = vmatmul.f32.gmra.mxu0 %v1565
  %v1660 = vpop.f32.mrf.mxu0
  %v1661 = vadd.f32 0.0, %v1660
  %1662 = vmatmul.f32.gmra.mxu0 %v1568
  %v1663 = vpop.f32.mrf.mxu0
  %v1664 = vadd.f32 0.0, %v1663
  %1665 = vmatmul.f32.gmra.mxu0 %v1571
  %v1666 = vpop.f32.mrf.mxu0
  %v1667 = vadd.f32 0.0, %v1666
  %1668 = vmatmul.f32.gmra.mxu0 %v1574
  %v1669 = vpop.f32.mrf.mxu0
  %v1670 = vadd.f32 0.0, %v1669
  %1671 = vmatmul.f32.gmra.mxu0 %v1577
  %v1672 = vpop.f32.mrf.mxu0
  %v1673 = vadd.f32 0.0, %v1672
  %1674 = vmatmul.f32.gmra.mxu0 %v1580
  %v1675 = vpop.f32.mrf.mxu0
  %v1676 = vadd.f32 0.0, %v1675
  %1677 = vmatmul.f32.gmra.mxu0 %v1583
  %v1678 = vpop.f32.mrf.mxu0
  %v1679 = vadd.f32 0.0, %v1678
  %1680 = vmatmul.f32.gmra.mxu0 %v1586
  %v1681 = vpop.f32.mrf.mxu0
  %v1682 = vadd.f32 0.0, %v1681
  %1683 = vmatmul.f32.gmra.mxu0 %v1589
  %v1684 = vpop.f32.mrf.mxu0
  %v1685 = vadd.f32 0.0, %v1684
  %1686 = vmatmul.f32.gmra.mxu0 %v1592
  %v1687 = vpop.f32.mrf.mxu0
  %v1688 = vadd.f32 0.0, %v1687
  %1689 = vdwg.mxu0
  %1690 = vmatpush.msra.mxu0 %v845
  %1691 = vmatpush.msra.mxu0 %v844
  %1692 = vmatpush.msra.mxu0 %v843
  %1693 = vmatpush.msra.mxu0 %v842
  %1694 = vmatpush.msra.mxu0 %v841
  %1695 = vmatpush.msra.mxu0 %v840
  %1696 = vmatpush.msra.mxu0 %v839
  %1697 = vmatpush.msra.mxu0 %v838
  %1698 = vmatpush.msra.mxu0 %v837
  %1699 = vmatpush.msra.mxu0 %v836
  %1700 = vmatpush.msra.mxu0 %v835
  %1701 = vmatpush.msra.mxu0 %v834
  %1702 = vmatpush.msra.mxu0 %v833
  %1703 = vmatpush.msra.mxu0 %v832
  %1704 = vmatpush.msra.mxu0 %v831
  %1705 = vmatpush.msra.mxu0 %v830
  %1706 = vmatmul.f32.gmra.mxu0 %v1557
  %v1707 = vpop.f32.mrf.mxu0
  %v1708 = vadd.f32 %v1652, %v1707
  %1709 = vmatmul.f32.gmra.mxu0 %v1560
  %v1710 = vpop.f32.mrf.mxu0
  %v1711 = vadd.f32 %v1655, %v1710
  %1712 = vmatmul.f32.gmra.mxu0 %v1563
  %v1713 = vpop.f32.mrf.mxu0
  %v1714 = vadd.f32 %v1658, %v1713
  %1715 = vmatmul.f32.gmra.mxu0 %v1566
  %v1716 = vpop.f32.mrf.mxu0
  %v1717 = vadd.f32 %v1661, %v1716
  %1718 = vmatmul.f32.gmra.mxu0 %v1569
  %v1719 = vpop.f32.mrf.mxu0
  %v1720 = vadd.f32 %v1664, %v1719
  %1721 = vmatmul.f32.gmra.mxu0 %v1572
  %v1722 = vpop.f32.mrf.mxu0
  %v1723 = vadd.f32 %v1667, %v1722
  %1724 = vmatmul.f32.gmra.mxu0 %v1575
  %v1725 = vpop.f32.mrf.mxu0
  %v1726 = vadd.f32 %v1670, %v1725
  %1727 = vmatmul.f32.gmra.mxu0 %v1578
  %v1728 = vpop.f32.mrf.mxu0
  %v1729 = vadd.f32 %v1673, %v1728
  %1730 = vmatmul.f32.gmra.mxu0 %v1581
  %v1731 = vpop.f32.mrf.mxu0
  %v1732 = vadd.f32 %v1676, %v1731
  %1733 = vmatmul.f32.gmra.mxu0 %v1584
  %v1734 = vpop.f32.mrf.mxu0
  %v1735 = vadd.f32 %v1679, %v1734
  %1736 = vmatmul.f32.gmra.mxu0 %v1587
  %v1737 = vpop.f32.mrf.mxu0
  %v1738 = vadd.f32 %v1682, %v1737
  %1739 = vmatmul.f32.gmra.mxu0 %v1590
  %v1740 = vpop.f32.mrf.mxu0
  %v1741 = vadd.f32 %v1685, %v1740
  %1742 = vmatmul.f32.gmra.mxu0 %v1593
  %v1743 = vpop.f32.mrf.mxu0
  %v1744 = vadd.f32 %v1688, %v1743
  %1745 = vdwg.mxu0
  %1746 = vmatpush.msra.mxu0 0.0
  %1747 = vmatpush.msra.mxu0 0.0
  %1748 = vmatpush.msra.mxu0 0.0
  %1749 = vmatpush.msra.mxu0 0.0
  %1750 = vmatpush.msra.mxu0 0.0
  %1751 = vmatpush.msra.mxu0 %v938
  %1752 = vmatpush.msra.mxu0 %v855
  %1753 = vmatpush.msra.mxu0 %v854
  %1754 = vmatpush.msra.mxu0 %v853
  %1755 = vmatpush.msra.mxu0 %v852
  %1756 = vmatpush.msra.mxu0 %v851
  %1757 = vmatpush.msra.mxu0 %v850
  %1758 = vmatpush.msra.mxu0 %v849
  %1759 = vmatpush.msra.mxu0 %v848
  %1760 = vmatpush.msra.mxu0 %v847
  %1761 = vmatpush.msra.mxu0 %v846
  %1762 = vmatmul.f32.gmra.mxu0 %v1596
  %v1763 = vpop.f32.mrf.mxu0
  %v1764 = vadd.f32 %v1708, %v1763
  %1765 = vmatmul.f32.gmra.mxu0 %v1599
  %v1766 = vpop.f32.mrf.mxu0
  %v1767 = vadd.f32 %v1711, %v1766
  %1768 = vmatmul.f32.gmra.mxu0 %v1602
  %v1769 = vpop.f32.mrf.mxu0
  %v1770 = vadd.f32 %v1714, %v1769
  %1771 = vmatmul.f32.gmra.mxu0 %v1605
  %v1772 = vpop.f32.mrf.mxu0
  %v1773 = vadd.f32 %v1717, %v1772
  %1774 = vmatmul.f32.gmra.mxu0 %v1608
  %v1775 = vpop.f32.mrf.mxu0
  %v1776 = vadd.f32 %v1720, %v1775
  %1777 = vmatmul.f32.gmra.mxu0 %v1611
  %v1778 = vpop.f32.mrf.mxu0
  %v1779 = vadd.f32 %v1723, %v1778
  %1780 = vmatmul.f32.gmra.mxu0 %v1614
  %v1781 = vpop.f32.mrf.mxu0
  %v1782 = vadd.f32 %v1726, %v1781
  %1783 = vmatmul.f32.gmra.mxu0 %v1617
  %v1784 = vpop.f32.mrf.mxu0
  %v1785 = vadd.f32 %v1729, %v1784
  %1786 = vmatmul.f32.gmra.mxu0 %v1620
  %v1787 = vpop.f32.mrf.mxu0
  %v1788 = vadd.f32 %v1732, %v1787
  %1789 = vmatmul.f32.gmra.mxu0 %v1623
  %v1790 = vpop.f32.mrf.mxu0
  %v1791 = vadd.f32 %v1735, %v1790
  %1792 = vmatmul.f32.gmra.mxu0 %v1626
  %v1793 = vpop.f32.mrf.mxu0
  %v1794 = vadd.f32 %v1738, %v1793
  %1795 = vmatmul.f32.gmra.mxu0 %v1629
  %v1796 = vpop.f32.mrf.mxu0
  %v1797 = vadd.f32 %v1741, %v1796
  %1798 = vmatmul.f32.gmra.mxu0 %v1632
  %v1799 = vpop.f32.mrf.mxu0
  %v1800 = vadd.f32 %v1744, %v1799
  %1801 = vdwg.mxu0
  %s1802 = scalar_lea.vmem %s5, 8
  %v1803 = vld [vmem:[%s1802] sm:$0xf]
  %v1805 = vsel %vm389, %v1764, 0
  %v1808 = vsel %vm389, %v1767, 0
  %v1811 = vsel %vm389, %v1770, 0
  %v1814 = vsel %vm389, %v1773, 0
  %v1817 = vsel %vm389, %v1776, 0
  %v1820 = vsel %vm389, %v1779, 0
  %v1823 = vsel %vm389, %v1782, 0
  %v1826 = vsel %vm389, %v1785, 0
  %v1829 = vsel %vm389, %v1788, 0
  %v1832 = vsel %vm389, %v1791, 0
  %v1835 = vsel %vm389, %v1794, 0
  %v1838 = vsel %vm389, %v1797, 0
  %v1841 = vsel %vm389, %v1800, 0
  %v1844 = vsel %vm1397, %v1803, 0
  %1846 = vmatpush.msra.mxu0 0.0
  %1847 = vmatpush.msra.mxu0 0.0
  %1848 = vmatpush.msra.mxu0 0.0
  %1849 = vmatpush.msra.mxu0 0.0
  %1850 = vmatpush.msra.mxu0 0.0
  %1851 = vmatpush.msra.mxu0 0.0
  %1852 = vmatpush.msra.mxu0 0.0
  %1853 = vmatpush.msra.mxu0 0.0
  %1854 = vmatpush.msra.mxu0 0.0
  %1855 = vmatpush.msra.mxu0 0.0
  %1856 = vmatpush.msra.mxu0 0.0
  %1857 = vmatpush.msra.mxu0 0.0
  %1858 = vmatpush.msra.mxu0 0.0
  %1859 = vmatpush.msra.mxu0 0.0
  %1860 = vmatpush.msra.mxu0 0.0
  %1861 = vmatpush.msra.mxu0 %v1844
  %1862 = vmatmul.f32.gmra.mxu0 %v1805
  %v1863 = vpop.f32.mrf.mxu0
  %v1864 = vadd.f32 0.0, %v1863
  %1865 = vmatmul.f32.gmra.mxu0 %v1808
  %v1866 = vpop.f32.mrf.mxu0
  %v1867 = vadd.f32 0.0, %v1866
  %1868 = vmatmul.f32.gmra.mxu0 %v1811
  %v1869 = vpop.f32.mrf.mxu0
  %v1870 = vadd.f32 0.0, %v1869
  %1871 = vmatmul.f32.gmra.mxu0 %v1814
  %v1872 = vpop.f32.mrf.mxu0
  %v1873 = vadd.f32 0.0, %v1872
  %1874 = vmatmul.f32.gmra.mxu0 %v1817
  %v1875 = vpop.f32.mrf.mxu0
  %v1876 = vadd.f32 0.0, %v1875
  %1877 = vmatmul.f32.gmra.mxu0 %v1820
  %v1878 = vpop.f32.mrf.mxu0
  %v1879 = vadd.f32 0.0, %v1878
  %1880 = vmatmul.f32.gmra.mxu0 %v1823
  %v1881 = vpop.f32.mrf.mxu0
  %v1882 = vadd.f32 0.0, %v1881
  %1883 = vmatmul.f32.gmra.mxu0 %v1826
  %v1884 = vpop.f32.mrf.mxu0
  %v1885 = vadd.f32 0.0, %v1884
  %1886 = vmatmul.f32.gmra.mxu0 %v1829
  %v1887 = vpop.f32.mrf.mxu0
  %v1888 = vadd.f32 0.0, %v1887
  %1889 = vmatmul.f32.gmra.mxu0 %v1832
  %v1890 = vpop.f32.mrf.mxu0
  %v1891 = vadd.f32 0.0, %v1890
  %1892 = vmatmul.f32.gmra.mxu0 %v1835
  %v1893 = vpop.f32.mrf.mxu0
  %v1894 = vadd.f32 0.0, %v1893
  %1895 = vmatmul.f32.gmra.mxu0 %v1838
  %v1896 = vpop.f32.mrf.mxu0
  %v1897 = vadd.f32 0.0, %v1896
  %1898 = vmatmul.f32.gmra.mxu0 %v1841
  %v1899 = vpop.f32.mrf.mxu0
  %v1900 = vadd.f32 0.0, %v1899
  %1901 = vdwg.mxu0
  %v1902 = vadd.f32 %v1517, %v1864
  %v1903 = vadd.f32 %v1520, %v1867
  %v1904 = vadd.f32 %v1523, %v1870
  %v1905 = vadd.f32 %v1526, %v1873
  %v1906 = vadd.f32 %v1529, %v1876
  %v1907 = vadd.f32 %v1532, %v1879
  %v1908 = vadd.f32 %v1535, %v1882
  %v1909 = vadd.f32 %v1538, %v1885
  %v1910 = vadd.f32 %v1541, %v1888
  %v1911 = vadd.f32 %v1544, %v1891
  %v1912 = vadd.f32 %v1547, %v1894
  %v1913 = vadd.f32 %v1550, %v1897
  %v1914 = vadd.f32 %v1553, %v1900
  %s1915 = scalar_lea.vmem %s4, 936
  %v1916 = vld [vmem:[%s1915] sm:$0xff]
  %v1917 = vld [vmem:[%s1915 + $0x8] sm:$0xff]
  %v1918 = vld [vmem:[%s1915 + $0x10] sm:$0xff]
  %v1919 = vld [vmem:[%s1915 + $0x18] sm:$0xff]
  %v1920 = vld [vmem:[%s1915 + $0x20] sm:$0xff]
  %v1921 = vld [vmem:[%s1915 + $0x28] sm:$0xff]
  %v1922 = vld [vmem:[%s1915 + $0x30] sm:$0xff]
  %v1923 = vld [vmem:[%s1915 + $0x38] sm:$0xff]
  %v1924 = vld [vmem:[%s1915 + $0x40] sm:$0xff]
  %v1925 = vld [vmem:[%s1915 + $0x48] sm:$0xff]
  %v1926 = vld [vmem:[%s1915 + $0x50] sm:$0xff]
  %v1927 = vld [vmem:[%s1915 + $0x58] sm:$0xff]
  %v1928 = vld [vmem:[%s1915 + $0x60] sm:$0xff]
  %v1929 = vld [vmem:[%s1915 + $0x68] sm:$0xff]
  %v1930 = vld [vmem:[%s1915 + $0x70] sm:$0xff]
  %v1931 = vld [vmem:[%s1915 + $0x78] sm:$0xff]
  %v1932 = vld [vmem:[%s1915 + $0x80] sm:$0xff]
  %v1933 = vld [vmem:[%s1915 + $0x88] sm:$0xff]
  %v1934 = vld [vmem:[%s1915 + $0x90] sm:$0xff]
  %v1935 = vld [vmem:[%s1915 + $0x98] sm:$0xff]
  %v1936 = vld [vmem:[%s1915 + $0xa0] sm:$0xff]
  %v1937 = vld [vmem:[%s1915 + $0xa8] sm:$0xff]
  %v1938 = vld [vmem:[%s1915 + $0xb0] sm:$0xff]
  %v1939 = vld [vmem:[%s1915 + $0xb8] sm:$0xff]
  %v1940 = vld [vmem:[%s1915 + $0xc0] sm:$0xff]
  %v1941 = vld [vmem:[%s1915 + $0xc8] sm:$0xff]
  %v1942 = vld [vmem:[%s1915 + $0xd0] sm:$0xff]
  %v1943 = vld [vmem:[%s1915 + $0xd8] sm:$0xff]
  %v1944 = vld [vmem:[%s1915 + $0xe0] sm:$0xff]
  %v1945 = vld [vmem:[%s1915 + $0xe8] sm:$0xff]
  %v1946 = vld [vmem:[%s1915 + $0xf0] sm:$0xff]
  %v1947 = vld [vmem:[%s1915 + $0xf8] sm:$0xff]
  %v1948 = vld [vmem:[%s1915 + $0x100] sm:$0xff]
  %v1949 = vld [vmem:[%s1915 + $0x108] sm:$0xff]
  %v1950 = vld [vmem:[%s1915 + $0x110] sm:$0xff]
  %v1951 = vld [vmem:[%s1915 + $0x118] sm:$0xff]
  %v1952 = vld [vmem:[%s1915 + $0x120] sm:$0x3]
  %v1953 = vld [vmem:[%s1915 + $0x128] sm:$0x3]
  %v1954 = vld [vmem:[%s1915 + $0x130] sm:$0x3]
  %v1956 = vsel %vm896, %v1918, 0
  %v1959 = vsel %vm896, %v1921, 0
  %v1962 = vsel %vm896, %v1924, 0
  %v1965 = vsel %vm896, %v1927, 0
  %v1968 = vsel %vm896, %v1930, 0
  %v1971 = vsel %vm896, %v1933, 0
  %v1974 = vsel %vm896, %v1936, 0
  %v1977 = vsel %vm896, %v1939, 0
  %v1980 = vsel %vm896, %v1942, 0
  %v1983 = vsel %vm896, %v1945, 0
  %v1986 = vsel %vm896, %v1948, 0
  %v1989 = vsel %vm896, %v1951, 0
  %v1992 = vsel %vm896, %v1954, 0
  %1994 = vmatpush.msra.mxu0 %v829
  %1995 = vmatpush.msra.mxu0 %v828
  %1996 = vmatpush.msra.mxu0 %v827
  %1997 = vmatpush.msra.mxu0 %v826
  %1998 = vmatpush.msra.mxu0 %v825
  %1999 = vmatpush.msra.mxu0 %v824
  %2000 = vmatpush.msra.mxu0 %v823
  %2001 = vmatpush.msra.mxu0 %v822
  %2002 = vmatpush.msra.mxu0 %v821
  %2003 = vmatpush.msra.mxu0 %v820
  %2004 = vmatpush.msra.mxu0 %v819
  %2005 = vmatpush.msra.mxu0 %v818
  %2006 = vmatpush.msra.mxu0 %v817
  %2007 = vmatpush.msra.mxu0 %v816
  %2008 = vmatpush.msra.mxu0 %v815
  %2009 = vmatpush.msra.mxu0 %v814
  %2010 = vmatmul.f32.gmra.mxu0 %v1916
  %v2011 = vpop.f32.mrf.mxu0
  %v2012 = vadd.f32 0.0, %v2011
  %2013 = vmatmul.f32.gmra.mxu0 %v1919
  %v2014 = vpop.f32.mrf.mxu0
  %v2015 = vadd.f32 0.0, %v2014
  %2016 = vmatmul.f32.gmra.mxu0 %v1922
  %v2017 = vpop.f32.mrf.mxu0
  %v2018 = vadd.f32 0.0, %v2017
  %2019 = vmatmul.f32.gmra.mxu0 %v1925
  %v2020 = vpop.f32.mrf.mxu0
  %v2021 = vadd.f32 0.0, %v2020
  %2022 = vmatmul.f32.gmra.mxu0 %v1928
  %v2023 = vpop.f32.mrf.mxu0
  %v2024 = vadd.f32 0.0, %v2023
  %2025 = vmatmul.f32.gmra.mxu0 %v1931
  %v2026 = vpop.f32.mrf.mxu0
  %v2027 = vadd.f32 0.0, %v2026
  %2028 = vmatmul.f32.gmra.mxu0 %v1934
  %v2029 = vpop.f32.mrf.mxu0
  %v2030 = vadd.f32 0.0, %v2029
  %2031 = vmatmul.f32.gmra.mxu0 %v1937
  %v2032 = vpop.f32.mrf.mxu0
  %v2033 = vadd.f32 0.0, %v2032
  %2034 = vmatmul.f32.gmra.mxu0 %v1940
  %v2035 = vpop.f32.mrf.mxu0
  %v2036 = vadd.f32 0.0, %v2035
  %2037 = vmatmul.f32.gmra.mxu0 %v1943
  %v2038 = vpop.f32.mrf.mxu0
  %v2039 = vadd.f32 0.0, %v2038
  %2040 = vmatmul.f32.gmra.mxu0 %v1946
  %v2041 = vpop.f32.mrf.mxu0
  %v2042 = vadd.f32 0.0, %v2041
  %2043 = vmatmul.f32.gmra.mxu0 %v1949
  %v2044 = vpop.f32.mrf.mxu0
  %v2045 = vadd.f32 0.0, %v2044
  %2046 = vmatmul.f32.gmra.mxu0 %v1952
  %v2047 = vpop.f32.mrf.mxu0
  %v2048 = vadd.f32 0.0, %v2047
  %2049 = vdwg.mxu0
  %2050 = vmatpush.msra.mxu0 %v845
  %2051 = vmatpush.msra.mxu0 %v844
  %2052 = vmatpush.msra.mxu0 %v843
  %2053 = vmatpush.msra.mxu0 %v842
  %2054 = vmatpush.msra.mxu0 %v841
  %2055 = vmatpush.msra.mxu0 %v840
  %2056 = vmatpush.msra.mxu0 %v839
  %2057 = vmatpush.msra.mxu0 %v838
  %2058 = vmatpush.msra.mxu0 %v837
  %2059 = vmatpush.msra.mxu0 %v836
  %2060 = vmatpush.msra.mxu0 %v835
  %2061 = vmatpush.msra.mxu0 %v834
  %2062 = vmatpush.msra.mxu0 %v833
  %2063 = vmatpush.msra.mxu0 %v832
  %2064 = vmatpush.msra.mxu0 %v831
  %2065 = vmatpush.msra.mxu0 %v830
  %2066 = vmatmul.f32.gmra.mxu0 %v1917
  %v2067 = vpop.f32.mrf.mxu0
  %v2068 = vadd.f32 %v2012, %v2067
  %2069 = vmatmul.f32.gmra.mxu0 %v1920
  %v2070 = vpop.f32.mrf.mxu0
  %v2071 = vadd.f32 %v2015, %v2070
  %2072 = vmatmul.f32.gmra.mxu0 %v1923
  %v2073 = vpop.f32.mrf.mxu0
  %v2074 = vadd.f32 %v2018, %v2073
  %2075 = vmatmul.f32.gmra.mxu0 %v1926
  %v2076 = vpop.f32.mrf.mxu0
  %v2077 = vadd.f32 %v2021, %v2076
  %2078 = vmatmul.f32.gmra.mxu0 %v1929
  %v2079 = vpop.f32.mrf.mxu0
  %v2080 = vadd.f32 %v2024, %v2079
  %2081 = vmatmul.f32.gmra.mxu0 %v1932
  %v2082 = vpop.f32.mrf.mxu0
  %v2083 = vadd.f32 %v2027, %v2082
  %2084 = vmatmul.f32.gmra.mxu0 %v1935
  %v2085 = vpop.f32.mrf.mxu0
  %v2086 = vadd.f32 %v2030, %v2085
  %2087 = vmatmul.f32.gmra.mxu0 %v1938
  %v2088 = vpop.f32.mrf.mxu0
  %v2089 = vadd.f32 %v2033, %v2088
  %2090 = vmatmul.f32.gmra.mxu0 %v1941
  %v2091 = vpop.f32.mrf.mxu0
  %v2092 = vadd.f32 %v2036, %v2091
  %2093 = vmatmul.f32.gmra.mxu0 %v1944
  %v2094 = vpop.f32.mrf.mxu0
  %v2095 = vadd.f32 %v2039, %v2094
  %2096 = vmatmul.f32.gmra.mxu0 %v1947
  %v2097 = vpop.f32.mrf.mxu0
  %v2098 = vadd.f32 %v2042, %v2097
  %2099 = vmatmul.f32.gmra.mxu0 %v1950
  %v2100 = vpop.f32.mrf.mxu0
  %v2101 = vadd.f32 %v2045, %v2100
  %2102 = vmatmul.f32.gmra.mxu0 %v1953
  %v2103 = vpop.f32.mrf.mxu0
  %v2104 = vadd.f32 %v2048, %v2103
  %2105 = vdwg.mxu0
  %2106 = vmatpush.msra.mxu0 0.0
  %2107 = vmatpush.msra.mxu0 0.0
  %2108 = vmatpush.msra.mxu0 0.0
  %2109 = vmatpush.msra.mxu0 0.0
  %2110 = vmatpush.msra.mxu0 0.0
  %2111 = vmatpush.msra.mxu0 %v938
  %2112 = vmatpush.msra.mxu0 %v855
  %2113 = vmatpush.msra.mxu0 %v854
  %2114 = vmatpush.msra.mxu0 %v853
  %2115 = vmatpush.msra.mxu0 %v852
  %2116 = vmatpush.msra.mxu0 %v851
  %2117 = vmatpush.msra.mxu0 %v850
  %2118 = vmatpush.msra.mxu0 %v849
  %2119 = vmatpush.msra.mxu0 %v848
  %2120 = vmatpush.msra.mxu0 %v847
  %2121 = vmatpush.msra.mxu0 %v846
  %2122 = vmatmul.f32.gmra.mxu0 %v1956
  %v2123 = vpop.f32.mrf.mxu0
  %v2124 = vadd.f32 %v2068, %v2123
  %2125 = vmatmul.f32.gmra.mxu0 %v1959
  %v2126 = vpop.f32.mrf.mxu0
  %v2127 = vadd.f32 %v2071, %v2126
  %2128 = vmatmul.f32.gmra.mxu0 %v1962
  %v2129 = vpop.f32.mrf.mxu0
  %v2130 = vadd.f32 %v2074, %v2129
  %2131 = vmatmul.f32.gmra.mxu0 %v1965
  %v2132 = vpop.f32.mrf.mxu0
  %v2133 = vadd.f32 %v2077, %v2132
  %2134 = vmatmul.f32.gmra.mxu0 %v1968
  %v2135 = vpop.f32.mrf.mxu0
  %v2136 = vadd.f32 %v2080, %v2135
  %2137 = vmatmul.f32.gmra.mxu0 %v1971
  %v2138 = vpop.f32.mrf.mxu0
  %v2139 = vadd.f32 %v2083, %v2138
  %2140 = vmatmul.f32.gmra.mxu0 %v1974
  %v2141 = vpop.f32.mrf.mxu0
  %v2142 = vadd.f32 %v2086, %v2141
  %2143 = vmatmul.f32.gmra.mxu0 %v1977
  %v2144 = vpop.f32.mrf.mxu0
  %v2145 = vadd.f32 %v2089, %v2144
  %2146 = vmatmul.f32.gmra.mxu0 %v1980
  %v2147 = vpop.f32.mrf.mxu0
  %v2148 = vadd.f32 %v2092, %v2147
  %2149 = vmatmul.f32.gmra.mxu0 %v1983
  %v2150 = vpop.f32.mrf.mxu0
  %v2151 = vadd.f32 %v2095, %v2150
  %2152 = vmatmul.f32.gmra.mxu0 %v1986
  %v2153 = vpop.f32.mrf.mxu0
  %v2154 = vadd.f32 %v2098, %v2153
  %2155 = vmatmul.f32.gmra.mxu0 %v1989
  %v2156 = vpop.f32.mrf.mxu0
  %v2157 = vadd.f32 %v2101, %v2156
  %2158 = vmatmul.f32.gmra.mxu0 %v1992
  %v2159 = vpop.f32.mrf.mxu0
  %v2160 = vadd.f32 %v2104, %v2159
  %2161 = vdwg.mxu0
  %s2162 = scalar_lea.vmem %s5, 12
  %v2163 = vld [vmem:[%s2162] sm:$0xf]
  %v2165 = vsel %vm389, %v2124, 0
  %v2168 = vsel %vm389, %v2127, 0
  %v2171 = vsel %vm389, %v2130, 0
  %v2174 = vsel %vm389, %v2133, 0
  %v2177 = vsel %vm389, %v2136, 0
  %v2180 = vsel %vm389, %v2139, 0
  %v2183 = vsel %vm389, %v2142, 0
  %v2186 = vsel %vm389, %v2145, 0
  %v2189 = vsel %vm389, %v2148, 0
  %v2192 = vsel %vm389, %v2151, 0
  %v2195 = vsel %vm389, %v2154, 0
  %v2198 = vsel %vm389, %v2157, 0
  %v2201 = vsel %vm389, %v2160, 0
  %v2204 = vsel %vm1397, %v2163, 0
  %2206 = vmatpush.msra.mxu0 0.0
  %2207 = vmatpush.msra.mxu0 0.0
  %2208 = vmatpush.msra.mxu0 0.0
  %2209 = vmatpush.msra.mxu0 0.0
  %2210 = vmatpush.msra.mxu0 0.0
  %2211 = vmatpush.msra.mxu0 0.0
  %2212 = vmatpush.msra.mxu0 0.0
  %2213 = vmatpush.msra.mxu0 0.0
  %2214 = vmatpush.msra.mxu0 0.0
  %2215 = vmatpush.msra.mxu0 0.0
  %2216 = vmatpush.msra.mxu0 0.0
  %2217 = vmatpush.msra.mxu0 0.0
  %2218 = vmatpush.msra.mxu0 0.0
  %2219 = vmatpush.msra.mxu0 0.0
  %2220 = vmatpush.msra.mxu0 0.0
  %2221 = vmatpush.msra.mxu0 %v2204
  %2222 = vmatmul.f32.gmra.mxu0 %v2165
  %v2223 = vpop.f32.mrf.mxu0
  %v2224 = vadd.f32 0.0, %v2223
  %2225 = vmatmul.f32.gmra.mxu0 %v2168
  %v2226 = vpop.f32.mrf.mxu0
  %v2227 = vadd.f32 0.0, %v2226
  %2228 = vmatmul.f32.gmra.mxu0 %v2171
  %v2229 = vpop.f32.mrf.mxu0
  %v2230 = vadd.f32 0.0, %v2229
  %2231 = vmatmul.f32.gmra.mxu0 %v2174
  %v2232 = vpop.f32.mrf.mxu0
  %v2233 = vadd.f32 0.0, %v2232
  %2234 = vmatmul.f32.gmra.mxu0 %v2177
  %v2235 = vpop.f32.mrf.mxu0
  %v2236 = vadd.f32 0.0, %v2235
  %2237 = vmatmul.f32.gmra.mxu0 %v2180
  %v2238 = vpop.f32.mrf.mxu0
  %v2239 = vadd.f32 0.0, %v2238
  %2240 = vmatmul.f32.gmra.mxu0 %v2183
  %v2241 = vpop.f32.mrf.mxu0
  %v2242 = vadd.f32 0.0, %v2241
  %2243 = vmatmul.f32.gmra.mxu0 %v2186
  %v2244 = vpop.f32.mrf.mxu0
  %v2245 = vadd.f32 0.0, %v2244
  %2246 = vmatmul.f32.gmra.mxu0 %v2189
  %v2247 = vpop.f32.mrf.mxu0
  %v2248 = vadd.f32 0.0, %v2247
  %2249 = vmatmul.f32.gmra.mxu0 %v2192
  %v2250 = vpop.f32.mrf.mxu0
  %v2251 = vadd.f32 0.0, %v2250
  %2252 = vmatmul.f32.gmra.mxu0 %v2195
  %v2253 = vpop.f32.mrf.mxu0
  %v2254 = vadd.f32 0.0, %v2253
  %2255 = vmatmul.f32.gmra.mxu0 %v2198
  %v2256 = vpop.f32.mrf.mxu0
  %v2257 = vadd.f32 0.0, %v2256
  %2258 = vmatmul.f32.gmra.mxu0 %v2201
  %v2259 = vpop.f32.mrf.mxu0
  %v2260 = vadd.f32 0.0, %v2259
  %2261 = vdwg.mxu0
  %v2262 = vadd.f32 %v1902, %v2224
  %v2263 = vadd.f32 %v1903, %v2227
  %v2264 = vadd.f32 %v1904, %v2230
  %v2265 = vadd.f32 %v1905, %v2233
  %v2266 = vadd.f32 %v1906, %v2236
  %v2267 = vadd.f32 %v1907, %v2239
  %v2268 = vadd.f32 %v1908, %v2242
  %v2269 = vadd.f32 %v1909, %v2245
  %v2270 = vadd.f32 %v1910, %v2248
  %v2271 = vadd.f32 %v1911, %v2251
  %v2272 = vadd.f32 %v1912, %v2254
  %v2273 = vadd.f32 %v1913, %v2257
  %v2274 = vadd.f32 %v1914, %v2260
  %s2275 = scalar_lea.vmem %s4, 1248
  %v2276 = vld [vmem:[%s2275] sm:$0xff]
  %v2277 = vld [vmem:[%s2275 + $0x8] sm:$0xff]
  %v2278 = vld [vmem:[%s2275 + $0x10] sm:$0xff]
  %v2279 = vld [vmem:[%s2275 + $0x18] sm:$0xff]
  %v2280 = vld [vmem:[%s2275 + $0x20] sm:$0xff]
  %v2281 = vld [vmem:[%s2275 + $0x28] sm:$0xff]
  %v2282 = vld [vmem:[%s2275 + $0x30] sm:$0xff]
  %v2283 = vld [vmem:[%s2275 + $0x38] sm:$0xff]
  %v2284 = vld [vmem:[%s2275 + $0x40] sm:$0xff]
  %v2285 = vld [vmem:[%s2275 + $0x48] sm:$0xff]
  %v2286 = vld [vmem:[%s2275 + $0x50] sm:$0xff]
  %v2287 = vld [vmem:[%s2275 + $0x58] sm:$0xff]
  %v2288 = vld [vmem:[%s2275 + $0x60] sm:$0xff]
  %v2289 = vld [vmem:[%s2275 + $0x68] sm:$0xff]
  %v2290 = vld [vmem:[%s2275 + $0x70] sm:$0xff]
  %v2291 = vld [vmem:[%s2275 + $0x78] sm:$0xff]
  %v2292 = vld [vmem:[%s2275 + $0x80] sm:$0xff]
  %v2293 = vld [vmem:[%s2275 + $0x88] sm:$0xff]
  %v2294 = vld [vmem:[%s2275 + $0x90] sm:$0xff]
  %v2295 = vld [vmem:[%s2275 + $0x98] sm:$0xff]
  %v2296 = vld [vmem:[%s2275 + $0xa0] sm:$0xff]
  %v2297 = vld [vmem:[%s2275 + $0xa8] sm:$0xff]
  %v2298 = vld [vmem:[%s2275 + $0xb0] sm:$0xff]
  %v2299 = vld [vmem:[%s2275 + $0xb8] sm:$0xff]
  %v2300 = vld [vmem:[%s2275 + $0xc0] sm:$0xff]
  %v2301 = vld [vmem:[%s2275 + $0xc8] sm:$0xff]
  %v2302 = vld [vmem:[%s2275 + $0xd0] sm:$0xff]
  %v2303 = vld [vmem:[%s2275 + $0xd8] sm:$0xff]
  %v2304 = vld [vmem:[%s2275 + $0xe0] sm:$0xff]
  %v2305 = vld [vmem:[%s2275 + $0xe8] sm:$0xff]
  %v2306 = vld [vmem:[%s2275 + $0xf0] sm:$0xff]
  %v2307 = vld [vmem:[%s2275 + $0xf8] sm:$0xff]
  %v2308 = vld [vmem:[%s2275 + $0x100] sm:$0xff]
  %v2309 = vld [vmem:[%s2275 + $0x108] sm:$0xff]
  %v2310 = vld [vmem:[%s2275 + $0x110] sm:$0xff]
  %v2311 = vld [vmem:[%s2275 + $0x118] sm:$0xff]
  %v2312 = vld [vmem:[%s2275 + $0x120] sm:$0x3]
  %v2313 = vld [vmem:[%s2275 + $0x128] sm:$0x3]
  %v2314 = vld [vmem:[%s2275 + $0x130] sm:$0x3]
  %v2316 = vsel %vm896, %v2278, 0
  %v2319 = vsel %vm896, %v2281, 0
  %v2322 = vsel %vm896, %v2284, 0
  %v2325 = vsel %vm896, %v2287, 0
  %v2328 = vsel %vm896, %v2290, 0
  %v2331 = vsel %vm896, %v2293, 0
  %v2334 = vsel %vm896, %v2296, 0
  %v2337 = vsel %vm896, %v2299, 0
  %v2340 = vsel %vm896, %v2302, 0
  %v2343 = vsel %vm896, %v2305, 0
  %v2346 = vsel %vm896, %v2308, 0
  %v2349 = vsel %vm896, %v2311, 0
  %v2352 = vsel %vm896, %v2314, 0
  %2354 = vmatpush.msra.mxu0 %v829
  %2355 = vmatpush.msra.mxu0 %v828
  %2356 = vmatpush.msra.mxu0 %v827
  %2357 = vmatpush.msra.mxu0 %v826
  %2358 = vmatpush.msra.mxu0 %v825
  %2359 = vmatpush.msra.mxu0 %v824
  %2360 = vmatpush.msra.mxu0 %v823
  %2361 = vmatpush.msra.mxu0 %v822
  %2362 = vmatpush.msra.mxu0 %v821
  %2363 = vmatpush.msra.mxu0 %v820
  %2364 = vmatpush.msra.mxu0 %v819
  %2365 = vmatpush.msra.mxu0 %v818
  %2366 = vmatpush.msra.mxu0 %v817
  %2367 = vmatpush.msra.mxu0 %v816
  %2368 = vmatpush.msra.mxu0 %v815
  %2369 = vmatpush.msra.mxu0 %v814
  %2370 = vmatmul.f32.gmra.mxu0 %v2276
  %v2371 = vpop.f32.mrf.mxu0
  %v2372 = vadd.f32 0.0, %v2371
  %2373 = vmatmul.f32.gmra.mxu0 %v2279
  %v2374 = vpop.f32.mrf.mxu0
  %v2375 = vadd.f32 0.0, %v2374
  %2376 = vmatmul.f32.gmra.mxu0 %v2282
  %v2377 = vpop.f32.mrf.mxu0
  %v2378 = vadd.f32 0.0, %v2377
  %2379 = vmatmul.f32.gmra.mxu0 %v2285
  %v2380 = vpop.f32.mrf.mxu0
  %v2381 = vadd.f32 0.0, %v2380
  %2382 = vmatmul.f32.gmra.mxu0 %v2288
  %v2383 = vpop.f32.mrf.mxu0
  %v2384 = vadd.f32 0.0, %v2383
  %2385 = vmatmul.f32.gmra.mxu0 %v2291
  %v2386 = vpop.f32.mrf.mxu0
  %v2387 = vadd.f32 0.0, %v2386
  %2388 = vmatmul.f32.gmra.mxu0 %v2294
  %v2389 = vpop.f32.mrf.mxu0
  %v2390 = vadd.f32 0.0, %v2389
  %2391 = vmatmul.f32.gmra.mxu0 %v2297
  %v2392 = vpop.f32.mrf.mxu0
  %v2393 = vadd.f32 0.0, %v2392
  %2394 = vmatmul.f32.gmra.mxu0 %v2300
  %v2395 = vpop.f32.mrf.mxu0
  %v2396 = vadd.f32 0.0, %v2395
  %2397 = vmatmul.f32.gmra.mxu0 %v2303
  %v2398 = vpop.f32.mrf.mxu0
  %v2399 = vadd.f32 0.0, %v2398
  %2400 = vmatmul.f32.gmra.mxu0 %v2306
  %v2401 = vpop.f32.mrf.mxu0
  %v2402 = vadd.f32 0.0, %v2401
  %2403 = vmatmul.f32.gmra.mxu0 %v2309
  %v2404 = vpop.f32.mrf.mxu0
  %v2405 = vadd.f32 0.0, %v2404
  %2406 = vmatmul.f32.gmra.mxu0 %v2312
  %v2407 = vpop.f32.mrf.mxu0
  %v2408 = vadd.f32 0.0, %v2407
  %2409 = vdwg.mxu0
  %2410 = vmatpush.msra.mxu0 %v845
  %2411 = vmatpush.msra.mxu0 %v844
  %2412 = vmatpush.msra.mxu0 %v843
  %2413 = vmatpush.msra.mxu0 %v842
  %2414 = vmatpush.msra.mxu0 %v841
  %2415 = vmatpush.msra.mxu0 %v840
  %2416 = vmatpush.msra.mxu0 %v839
  %2417 = vmatpush.msra.mxu0 %v838
  %2418 = vmatpush.msra.mxu0 %v837
  %2419 = vmatpush.msra.mxu0 %v836
  %2420 = vmatpush.msra.mxu0 %v835
  %2421 = vmatpush.msra.mxu0 %v834
  %2422 = vmatpush.msra.mxu0 %v833
  %2423 = vmatpush.msra.mxu0 %v832
  %2424 = vmatpush.msra.mxu0 %v831
  %2425 = vmatpush.msra.mxu0 %v830
  %2426 = vmatmul.f32.gmra.mxu0 %v2277
  %v2427 = vpop.f32.mrf.mxu0
  %v2428 = vadd.f32 %v2372, %v2427
  %2429 = vmatmul.f32.gmra.mxu0 %v2280
  %v2430 = vpop.f32.mrf.mxu0
  %v2431 = vadd.f32 %v2375, %v2430
  %2432 = vmatmul.f32.gmra.mxu0 %v2283
  %v2433 = vpop.f32.mrf.mxu0
  %v2434 = vadd.f32 %v2378, %v2433
  %2435 = vmatmul.f32.gmra.mxu0 %v2286
  %v2436 = vpop.f32.mrf.mxu0
  %v2437 = vadd.f32 %v2381, %v2436
  %2438 = vmatmul.f32.gmra.mxu0 %v2289
  %v2439 = vpop.f32.mrf.mxu0
  %v2440 = vadd.f32 %v2384, %v2439
  %2441 = vmatmul.f32.gmra.mxu0 %v2292
  %v2442 = vpop.f32.mrf.mxu0
  %v2443 = vadd.f32 %v2387, %v2442
  %2444 = vmatmul.f32.gmra.mxu0 %v2295
  %v2445 = vpop.f32.mrf.mxu0
  %v2446 = vadd.f32 %v2390, %v2445
  %2447 = vmatmul.f32.gmra.mxu0 %v2298
  %v2448 = vpop.f32.mrf.mxu0
  %v2449 = vadd.f32 %v2393, %v2448
  %2450 = vmatmul.f32.gmra.mxu0 %v2301
  %v2451 = vpop.f32.mrf.mxu0
  %v2452 = vadd.f32 %v2396, %v2451
  %2453 = vmatmul.f32.gmra.mxu0 %v2304
  %v2454 = vpop.f32.mrf.mxu0
  %v2455 = vadd.f32 %v2399, %v2454
  %2456 = vmatmul.f32.gmra.mxu0 %v2307
  %v2457 = vpop.f32.mrf.mxu0
  %v2458 = vadd.f32 %v2402, %v2457
  %2459 = vmatmul.f32.gmra.mxu0 %v2310
  %v2460 = vpop.f32.mrf.mxu0
  %v2461 = vadd.f32 %v2405, %v2460
  %2462 = vmatmul.f32.gmra.mxu0 %v2313
  %v2463 = vpop.f32.mrf.mxu0
  %v2464 = vadd.f32 %v2408, %v2463
  %2465 = vdwg.mxu0
  %2466 = vmatpush.msra.mxu0 0.0
  %2467 = vmatpush.msra.mxu0 0.0
  %2468 = vmatpush.msra.mxu0 0.0
  %2469 = vmatpush.msra.mxu0 0.0
  %2470 = vmatpush.msra.mxu0 0.0
  %2471 = vmatpush.msra.mxu0 %v938
  %2472 = vmatpush.msra.mxu0 %v855
  %2473 = vmatpush.msra.mxu0 %v854
  %2474 = vmatpush.msra.mxu0 %v853
  %2475 = vmatpush.msra.mxu0 %v852
  %2476 = vmatpush.msra.mxu0 %v851
  %2477 = vmatpush.msra.mxu0 %v850
  %2478 = vmatpush.msra.mxu0 %v849
  %2479 = vmatpush.msra.mxu0 %v848
  %2480 = vmatpush.msra.mxu0 %v847
  %2481 = vmatpush.msra.mxu0 %v846
  %2482 = vmatmul.f32.gmra.mxu0 %v2316
  %v2483 = vpop.f32.mrf.mxu0
  %v2484 = vadd.f32 %v2428, %v2483
  %2485 = vmatmul.f32.gmra.mxu0 %v2319
  %v2486 = vpop.f32.mrf.mxu0
  %v2487 = vadd.f32 %v2431, %v2486
  %2488 = vmatmul.f32.gmra.mxu0 %v2322
  %v2489 = vpop.f32.mrf.mxu0
  %v2490 = vadd.f32 %v2434, %v2489
  %2491 = vmatmul.f32.gmra.mxu0 %v2325
  %v2492 = vpop.f32.mrf.mxu0
  %v2493 = vadd.f32 %v2437, %v2492
  %2494 = vmatmul.f32.gmra.mxu0 %v2328
  %v2495 = vpop.f32.mrf.mxu0
  %v2496 = vadd.f32 %v2440, %v2495
  %2497 = vmatmul.f32.gmra.mxu0 %v2331
  %v2498 = vpop.f32.mrf.mxu0
  %v2499 = vadd.f32 %v2443, %v2498
  %2500 = vmatmul.f32.gmra.mxu0 %v2334
  %v2501 = vpop.f32.mrf.mxu0
  %v2502 = vadd.f32 %v2446, %v2501
  %2503 = vmatmul.f32.gmra.mxu0 %v2337
  %v2504 = vpop.f32.mrf.mxu0
  %v2505 = vadd.f32 %v2449, %v2504
  %2506 = vmatmul.f32.gmra.mxu0 %v2340
  %v2507 = vpop.f32.mrf.mxu0
  %v2508 = vadd.f32 %v2452, %v2507
  %2509 = vmatmul.f32.gmra.mxu0 %v2343
  %v2510 = vpop.f32.mrf.mxu0
  %v2511 = vadd.f32 %v2455, %v2510
  %2512 = vmatmul.f32.gmra.mxu0 %v2346
  %v2513 = vpop.f32.mrf.mxu0
  %v2514 = vadd.f32 %v2458, %v2513
  %2515 = vmatmul.f32.gmra.mxu0 %v2349
  %v2516 = vpop.f32.mrf.mxu0
  %v2517 = vadd.f32 %v2461, %v2516
  %2518 = vmatmul.f32.gmra.mxu0 %v2352
  %v2519 = vpop.f32.mrf.mxu0
  %v2520 = vadd.f32 %v2464, %v2519
  %2521 = vdwg.mxu0
  %s2522 = scalar_lea.vmem %s5, 16
  %v2523 = vld [vmem:[%s2522] sm:$0xf]
  %v2525 = vsel %vm389, %v2484, 0
  %v2528 = vsel %vm389, %v2487, 0
  %v2531 = vsel %vm389, %v2490, 0
  %v2534 = vsel %vm389, %v2493, 0
  %v2537 = vsel %vm389, %v2496, 0
  %v2540 = vsel %vm389, %v2499, 0
  %v2543 = vsel %vm389, %v2502, 0
  %v2546 = vsel %vm389, %v2505, 0
  %v2549 = vsel %vm389, %v2508, 0
  %v2552 = vsel %vm389, %v2511, 0
  %v2555 = vsel %vm389, %v2514, 0
  %v2558 = vsel %vm389, %v2517, 0
  %v2561 = vsel %vm389, %v2520, 0
  %v2564 = vsel %vm1397, %v2523, 0
  %2566 = vmatpush.msra.mxu0 0.0
  %2567 = vmatpush.msra.mxu0 0.0
  %2568 = vmatpush.msra.mxu0 0.0
  %2569 = vmatpush.msra.mxu0 0.0
  %2570 = vmatpush.msra.mxu0 0.0
  %2571 = vmatpush.msra.mxu0 0.0
  %2572 = vmatpush.msra.mxu0 0.0
  %2573 = vmatpush.msra.mxu0 0.0
  %2574 = vmatpush.msra.mxu0 0.0
  %2575 = vmatpush.msra.mxu0 0.0
  %2576 = vmatpush.msra.mxu0 0.0
  %2577 = vmatpush.msra.mxu0 0.0
  %2578 = vmatpush.msra.mxu0 0.0
  %2579 = vmatpush.msra.mxu0 0.0
  %2580 = vmatpush.msra.mxu0 0.0
  %2581 = vmatpush.msra.mxu0 %v2564
  %2582 = vmatmul.f32.gmra.mxu0 %v2525
  %v2583 = vpop.f32.mrf.mxu0
  %v2584 = vadd.f32 0.0, %v2583
  %2585 = vmatmul.f32.gmra.mxu0 %v2528
  %v2586 = vpop.f32.mrf.mxu0
  %v2587 = vadd.f32 0.0, %v2586
  %2588 = vmatmul.f32.gmra.mxu0 %v2531
  %v2589 = vpop.f32.mrf.mxu0
  %v2590 = vadd.f32 0.0, %v2589
  %2591 = vmatmul.f32.gmra.mxu0 %v2534
  %v2592 = vpop.f32.mrf.mxu0
  %v2593 = vadd.f32 0.0, %v2592
  %2594 = vmatmul.f32.gmra.mxu0 %v2537
  %v2595 = vpop.f32.mrf.mxu0
  %v2596 = vadd.f32 0.0, %v2595
  %2597 = vmatmul.f32.gmra.mxu0 %v2540
  %v2598 = vpop.f32.mrf.mxu0
  %v2599 = vadd.f32 0.0, %v2598
  %2600 = vmatmul.f32.gmra.mxu0 %v2543
  %v2601 = vpop.f32.mrf.mxu0
  %v2602 = vadd.f32 0.0, %v2601
  %2603 = vmatmul.f32.gmra.mxu0 %v2546
  %v2604 = vpop.f32.mrf.mxu0
  %v2605 = vadd.f32 0.0, %v2604
  %2606 = vmatmul.f32.gmra.mxu0 %v2549
  %v2607 = vpop.f32.mrf.mxu0
  %v2608 = vadd.f32 0.0, %v2607
  %2609 = vmatmul.f32.gmra.mxu0 %v2552
  %v2610 = vpop.f32.mrf.mxu0
  %v2611 = vadd.f32 0.0, %v2610
  %2612 = vmatmul.f32.gmra.mxu0 %v2555
  %v2613 = vpop.f32.mrf.mxu0
  %v2614 = vadd.f32 0.0, %v2613
  %2615 = vmatmul.f32.gmra.mxu0 %v2558
  %v2616 = vpop.f32.mrf.mxu0
  %v2617 = vadd.f32 0.0, %v2616
  %2618 = vmatmul.f32.gmra.mxu0 %v2561
  %v2619 = vpop.f32.mrf.mxu0
  %v2620 = vadd.f32 0.0, %v2619
  %2621 = vdwg.mxu0
  %v2622 = vadd.f32 %v2262, %v2584
  %v2623 = vadd.f32 %v2263, %v2587
  %v2624 = vadd.f32 %v2264, %v2590
  %v2625 = vadd.f32 %v2265, %v2593
  %v2626 = vadd.f32 %v2266, %v2596
  %v2627 = vadd.f32 %v2267, %v2599
  %v2628 = vadd.f32 %v2268, %v2602
  %v2629 = vadd.f32 %v2269, %v2605
  %v2630 = vadd.f32 %v2270, %v2608
  %v2631 = vadd.f32 %v2271, %v2611
  %v2632 = vadd.f32 %v2272, %v2614
  %v2633 = vadd.f32 %v2273, %v2617
  %v2634 = vadd.f32 %v2274, %v2620
  %s2635 = scalar_lea.vmem %s4, 1560
  %v2636 = vld [vmem:[%s2635] sm:$0xff]
  %v2637 = vld [vmem:[%s2635 + $0x8] sm:$0xff]
  %v2638 = vld [vmem:[%s2635 + $0x10] sm:$0xff]
  %v2639 = vld [vmem:[%s2635 + $0x18] sm:$0xff]
  %v2640 = vld [vmem:[%s2635 + $0x20] sm:$0xff]
  %v2641 = vld [vmem:[%s2635 + $0x28] sm:$0xff]
  %v2642 = vld [vmem:[%s2635 + $0x30] sm:$0xff]
  %v2643 = vld [vmem:[%s2635 + $0x38] sm:$0xff]
  %v2644 = vld [vmem:[%s2635 + $0x40] sm:$0xff]
  %v2645 = vld [vmem:[%s2635 + $0x48] sm:$0xff]
  %v2646 = vld [vmem:[%s2635 + $0x50] sm:$0xff]
  %v2647 = vld [vmem:[%s2635 + $0x58] sm:$0xff]
  %v2648 = vld [vmem:[%s2635 + $0x60] sm:$0xff]
  %v2649 = vld [vmem:[%s2635 + $0x68] sm:$0xff]
  %v2650 = vld [vmem:[%s2635 + $0x70] sm:$0xff]
  %v2651 = vld [vmem:[%s2635 + $0x78] sm:$0xff]
  %v2652 = vld [vmem:[%s2635 + $0x80] sm:$0xff]
  %v2653 = vld [vmem:[%s2635 + $0x88] sm:$0xff]
  %v2654 = vld [vmem:[%s2635 + $0x90] sm:$0xff]
  %v2655 = vld [vmem:[%s2635 + $0x98] sm:$0xff]
  %v2656 = vld [vmem:[%s2635 + $0xa0] sm:$0xff]
  %v2657 = vld [vmem:[%s2635 + $0xa8] sm:$0xff]
  %v2658 = vld [vmem:[%s2635 + $0xb0] sm:$0xff]
  %v2659 = vld [vmem:[%s2635 + $0xb8] sm:$0xff]
  %v2660 = vld [vmem:[%s2635 + $0xc0] sm:$0xff]
  %v2661 = vld [vmem:[%s2635 + $0xc8] sm:$0xff]
  %v2662 = vld [vmem:[%s2635 + $0xd0] sm:$0xff]
  %v2663 = vld [vmem:[%s2635 + $0xd8] sm:$0xff]
  %v2664 = vld [vmem:[%s2635 + $0xe0] sm:$0xff]
  %v2665 = vld [vmem:[%s2635 + $0xe8] sm:$0xff]
  %v2666 = vld [vmem:[%s2635 + $0xf0] sm:$0xff]
  %v2667 = vld [vmem:[%s2635 + $0xf8] sm:$0xff]
  %v2668 = vld [vmem:[%s2635 + $0x100] sm:$0xff]
  %v2669 = vld [vmem:[%s2635 + $0x108] sm:$0xff]
  %v2670 = vld [vmem:[%s2635 + $0x110] sm:$0xff]
  %v2671 = vld [vmem:[%s2635 + $0x118] sm:$0xff]
  %v2672 = vld [vmem:[%s2635 + $0x120] sm:$0x3]
  %v2673 = vld [vmem:[%s2635 + $0x128] sm:$0x3]
  %v2674 = vld [vmem:[%s2635 + $0x130] sm:$0x3]
  %v2676 = vsel %vm896, %v2638, 0
  %v2679 = vsel %vm896, %v2641, 0
  %v2682 = vsel %vm896, %v2644, 0
  %v2685 = vsel %vm896, %v2647, 0
  %v2688 = vsel %vm896, %v2650, 0
  %v2691 = vsel %vm896, %v2653, 0
  %v2694 = vsel %vm896, %v2656, 0
  %v2697 = vsel %vm896, %v2659, 0
  %v2700 = vsel %vm896, %v2662, 0
  %v2703 = vsel %vm896, %v2665, 0
  %v2706 = vsel %vm896, %v2668, 0
  %v2709 = vsel %vm896, %v2671, 0
  %v2712 = vsel %vm896, %v2674, 0
  %2714 = vmatpush.msra.mxu0 %v829
  %2715 = vmatpush.msra.mxu0 %v828
  %2716 = vmatpush.msra.mxu0 %v827
  %2717 = vmatpush.msra.mxu0 %v826
  %2718 = vmatpush.msra.mxu0 %v825
  %2719 = vmatpush.msra.mxu0 %v824
  %2720 = vmatpush.msra.mxu0 %v823
  %2721 = vmatpush.msra.mxu0 %v822
  %2722 = vmatpush.msra.mxu0 %v821
  %2723 = vmatpush.msra.mxu0 %v820
  %2724 = vmatpush.msra.mxu0 %v819
  %2725 = vmatpush.msra.mxu0 %v818
  %2726 = vmatpush.msra.mxu0 %v817
  %2727 = vmatpush.msra.mxu0 %v816
  %2728 = vmatpush.msra.mxu0 %v815
  %2729 = vmatpush.msra.mxu0 %v814
  %2730 = vmatmul.f32.gmra.mxu0 %v2636
  %v2731 = vpop.f32.mrf.mxu0
  %v2732 = vadd.f32 0.0, %v2731
  %2733 = vmatmul.f32.gmra.mxu0 %v2639
  %v2734 = vpop.f32.mrf.mxu0
  %v2735 = vadd.f32 0.0, %v2734
  %2736 = vmatmul.f32.gmra.mxu0 %v2642
  %v2737 = vpop.f32.mrf.mxu0
  %v2738 = vadd.f32 0.0, %v2737
  %2739 = vmatmul.f32.gmra.mxu0 %v2645
  %v2740 = vpop.f32.mrf.mxu0
  %v2741 = vadd.f32 0.0, %v2740
  %2742 = vmatmul.f32.gmra.mxu0 %v2648
  %v2743 = vpop.f32.mrf.mxu0
  %v2744 = vadd.f32 0.0, %v2743
  %2745 = vmatmul.f32.gmra.mxu0 %v2651
  %v2746 = vpop.f32.mrf.mxu0
  %v2747 = vadd.f32 0.0, %v2746
  %2748 = vmatmul.f32.gmra.mxu0 %v2654
  %v2749 = vpop.f32.mrf.mxu0
  %v2750 = vadd.f32 0.0, %v2749
  %2751 = vmatmul.f32.gmra.mxu0 %v2657
  %v2752 = vpop.f32.mrf.mxu0
  %v2753 = vadd.f32 0.0, %v2752
  %2754 = vmatmul.f32.gmra.mxu0 %v2660
  %v2755 = vpop.f32.mrf.mxu0
  %v2756 = vadd.f32 0.0, %v2755
  %2757 = vmatmul.f32.gmra.mxu0 %v2663
  %v2758 = vpop.f32.mrf.mxu0
  %v2759 = vadd.f32 0.0, %v2758
  %2760 = vmatmul.f32.gmra.mxu0 %v2666
  %v2761 = vpop.f32.mrf.mxu0
  %v2762 = vadd.f32 0.0, %v2761
  %2763 = vmatmul.f32.gmra.mxu0 %v2669
  %v2764 = vpop.f32.mrf.mxu0
  %v2765 = vadd.f32 0.0, %v2764
  %2766 = vmatmul.f32.gmra.mxu0 %v2672
  %v2767 = vpop.f32.mrf.mxu0
  %v2768 = vadd.f32 0.0, %v2767
  %2769 = vdwg.mxu0
  %2770 = vmatpush.msra.mxu0 %v845
  %2771 = vmatpush.msra.mxu0 %v844
  %2772 = vmatpush.msra.mxu0 %v843
  %2773 = vmatpush.msra.mxu0 %v842
  %2774 = vmatpush.msra.mxu0 %v841
  %2775 = vmatpush.msra.mxu0 %v840
  %2776 = vmatpush.msra.mxu0 %v839
  %2777 = vmatpush.msra.mxu0 %v838
  %2778 = vmatpush.msra.mxu0 %v837
  %2779 = vmatpush.msra.mxu0 %v836
  %2780 = vmatpush.msra.mxu0 %v835
  %2781 = vmatpush.msra.mxu0 %v834
  %2782 = vmatpush.msra.mxu0 %v833
  %2783 = vmatpush.msra.mxu0 %v832
  %2784 = vmatpush.msra.mxu0 %v831
  %2785 = vmatpush.msra.mxu0 %v830
  %2786 = vmatmul.f32.gmra.mxu0 %v2637
  %v2787 = vpop.f32.mrf.mxu0
  %v2788 = vadd.f32 %v2732, %v2787
  %2789 = vmatmul.f32.gmra.mxu0 %v2640
  %v2790 = vpop.f32.mrf.mxu0
  %v2791 = vadd.f32 %v2735, %v2790
  %2792 = vmatmul.f32.gmra.mxu0 %v2643
  %v2793 = vpop.f32.mrf.mxu0
  %v2794 = vadd.f32 %v2738, %v2793
  %2795 = vmatmul.f32.gmra.mxu0 %v2646
  %v2796 = vpop.f32.mrf.mxu0
  %v2797 = vadd.f32 %v2741, %v2796
  %2798 = vmatmul.f32.gmra.mxu0 %v2649
  %v2799 = vpop.f32.mrf.mxu0
  %v2800 = vadd.f32 %v2744, %v2799
  %2801 = vmatmul.f32.gmra.mxu0 %v2652
  %v2802 = vpop.f32.mrf.mxu0
  %v2803 = vadd.f32 %v2747, %v2802
  %2804 = vmatmul.f32.gmra.mxu0 %v2655
  %v2805 = vpop.f32.mrf.mxu0
  %v2806 = vadd.f32 %v2750, %v2805
  %2807 = vmatmul.f32.gmra.mxu0 %v2658
  %v2808 = vpop.f32.mrf.mxu0
  %v2809 = vadd.f32 %v2753, %v2808
  %2810 = vmatmul.f32.gmra.mxu0 %v2661
  %v2811 = vpop.f32.mrf.mxu0
  %v2812 = vadd.f32 %v2756, %v2811
  %2813 = vmatmul.f32.gmra.mxu0 %v2664
  %v2814 = vpop.f32.mrf.mxu0
  %v2815 = vadd.f32 %v2759, %v2814
  %2816 = vmatmul.f32.gmra.mxu0 %v2667
  %v2817 = vpop.f32.mrf.mxu0
  %v2818 = vadd.f32 %v2762, %v2817
  %2819 = vmatmul.f32.gmra.mxu0 %v2670
  %v2820 = vpop.f32.mrf.mxu0
  %v2821 = vadd.f32 %v2765, %v2820
  %2822 = vmatmul.f32.gmra.mxu0 %v2673
  %v2823 = vpop.f32.mrf.mxu0
  %v2824 = vadd.f32 %v2768, %v2823
  %2825 = vdwg.mxu0
  %2826 = vmatpush.msra.mxu0 0.0
  %2827 = vmatpush.msra.mxu0 0.0
  %2828 = vmatpush.msra.mxu0 0.0
  %2829 = vmatpush.msra.mxu0 0.0
  %2830 = vmatpush.msra.mxu0 0.0
  %2831 = vmatpush.msra.mxu0 %v938
  %2832 = vmatpush.msra.mxu0 %v855
  %2833 = vmatpush.msra.mxu0 %v854
  %2834 = vmatpush.msra.mxu0 %v853
  %2835 = vmatpush.msra.mxu0 %v852
  %2836 = vmatpush.msra.mxu0 %v851
  %2837 = vmatpush.msra.mxu0 %v850
  %2838 = vmatpush.msra.mxu0 %v849
  %2839 = vmatpush.msra.mxu0 %v848
  %2840 = vmatpush.msra.mxu0 %v847
  %2841 = vmatpush.msra.mxu0 %v846
  %2842 = vmatmul.f32.gmra.mxu0 %v2676
  %v2843 = vpop.f32.mrf.mxu0
  %v2844 = vadd.f32 %v2788, %v2843
  %2845 = vmatmul.f32.gmra.mxu0 %v2679
  %v2846 = vpop.f32.mrf.mxu0
  %v2847 = vadd.f32 %v2791, %v2846
  %2848 = vmatmul.f32.gmra.mxu0 %v2682
  %v2849 = vpop.f32.mrf.mxu0
  %v2850 = vadd.f32 %v2794, %v2849
  %2851 = vmatmul.f32.gmra.mxu0 %v2685
  %v2852 = vpop.f32.mrf.mxu0
  %v2853 = vadd.f32 %v2797, %v2852
  %2854 = vmatmul.f32.gmra.mxu0 %v2688
  %v2855 = vpop.f32.mrf.mxu0
  %v2856 = vadd.f32 %v2800, %v2855
  %2857 = vmatmul.f32.gmra.mxu0 %v2691
  %v2858 = vpop.f32.mrf.mxu0
  %v2859 = vadd.f32 %v2803, %v2858
  %2860 = vmatmul.f32.gmra.mxu0 %v2694
  %v2861 = vpop.f32.mrf.mxu0
  %v2862 = vadd.f32 %v2806, %v2861
  %2863 = vmatmul.f32.gmra.mxu0 %v2697
  %v2864 = vpop.f32.mrf.mxu0
  %v2865 = vadd.f32 %v2809, %v2864
  %2866 = vmatmul.f32.gmra.mxu0 %v2700
  %v2867 = vpop.f32.mrf.mxu0
  %v2868 = vadd.f32 %v2812, %v2867
  %2869 = vmatmul.f32.gmra.mxu0 %v2703
  %v2870 = vpop.f32.mrf.mxu0
  %v2871 = vadd.f32 %v2815, %v2870
  %2872 = vmatmul.f32.gmra.mxu0 %v2706
  %v2873 = vpop.f32.mrf.mxu0
  %v2874 = vadd.f32 %v2818, %v2873
  %2875 = vmatmul.f32.gmra.mxu0 %v2709
  %v2876 = vpop.f32.mrf.mxu0
  %v2877 = vadd.f32 %v2821, %v2876
  %2878 = vmatmul.f32.gmra.mxu0 %v2712
  %v2879 = vpop.f32.mrf.mxu0
  %v2880 = vadd.f32 %v2824, %v2879
  %2881 = vdwg.mxu0
  %s2882 = scalar_lea.vmem %s5, 20
  %v2883 = vld [vmem:[%s2882] sm:$0xf]
  %v2885 = vsel %vm389, %v2844, 0
  %v2888 = vsel %vm389, %v2847, 0
  %v2891 = vsel %vm389, %v2850, 0
  %v2894 = vsel %vm389, %v2853, 0
  %v2897 = vsel %vm389, %v2856, 0
  %v2900 = vsel %vm389, %v2859, 0
  %v2903 = vsel %vm389, %v2862, 0
  %v2906 = vsel %vm389, %v2865, 0
  %v2909 = vsel %vm389, %v2868, 0
  %v2912 = vsel %vm389, %v2871, 0
  %v2915 = vsel %vm389, %v2874, 0
  %v2918 = vsel %vm389, %v2877, 0
  %v2921 = vsel %vm389, %v2880, 0
  %v2924 = vsel %vm1397, %v2883, 0
  %2926 = vmatpush.msra.mxu0 0.0
  %2927 = vmatpush.msra.mxu0 0.0
  %2928 = vmatpush.msra.mxu0 0.0
  %2929 = vmatpush.msra.mxu0 0.0
  %2930 = vmatpush.msra.mxu0 0.0
  %2931 = vmatpush.msra.mxu0 0.0
  %2932 = vmatpush.msra.mxu0 0.0
  %2933 = vmatpush.msra.mxu0 0.0
  %2934 = vmatpush.msra.mxu0 0.0
  %2935 = vmatpush.msra.mxu0 0.0
  %2936 = vmatpush.msra.mxu0 0.0
  %2937 = vmatpush.msra.mxu0 0.0
  %2938 = vmatpush.msra.mxu0 0.0
  %2939 = vmatpush.msra.mxu0 0.0
  %2940 = vmatpush.msra.mxu0 0.0
  %2941 = vmatpush.msra.mxu0 %v2924
  %2942 = vmatmul.f32.gmra.mxu0 %v2885
  %v2943 = vpop.f32.mrf.mxu0
  %v2944 = vadd.f32 0.0, %v2943
  %2945 = vmatmul.f32.gmra.mxu0 %v2888
  %v2946 = vpop.f32.mrf.mxu0
  %v2947 = vadd.f32 0.0, %v2946
  %2948 = vmatmul.f32.gmra.mxu0 %v2891
  %v2949 = vpop.f32.mrf.mxu0
  %v2950 = vadd.f32 0.0, %v2949
  %2951 = vmatmul.f32.gmra.mxu0 %v2894
  %v2952 = vpop.f32.mrf.mxu0
  %v2953 = vadd.f32 0.0, %v2952
  %2954 = vmatmul.f32.gmra.mxu0 %v2897
  %v2955 = vpop.f32.mrf.mxu0
  %v2956 = vadd.f32 0.0, %v2955
  %2957 = vmatmul.f32.gmra.mxu0 %v2900
  %v2958 = vpop.f32.mrf.mxu0
  %v2959 = vadd.f32 0.0, %v2958
  %2960 = vmatmul.f32.gmra.mxu0 %v2903
  %v2961 = vpop.f32.mrf.mxu0
  %v2962 = vadd.f32 0.0, %v2961
  %2963 = vmatmul.f32.gmra.mxu0 %v2906
  %v2964 = vpop.f32.mrf.mxu0
  %v2965 = vadd.f32 0.0, %v2964
  %2966 = vmatmul.f32.gmra.mxu0 %v2909
  %v2967 = vpop.f32.mrf.mxu0
  %v2968 = vadd.f32 0.0, %v2967
  %2969 = vmatmul.f32.gmra.mxu0 %v2912
  %v2970 = vpop.f32.mrf.mxu0
  %v2971 = vadd.f32 0.0, %v2970
  %2972 = vmatmul.f32.gmra.mxu0 %v2915
  %v2973 = vpop.f32.mrf.mxu0
  %v2974 = vadd.f32 0.0, %v2973
  %2975 = vmatmul.f32.gmra.mxu0 %v2918
  %v2976 = vpop.f32.mrf.mxu0
  %v2977 = vadd.f32 0.0, %v2976
  %2978 = vmatmul.f32.gmra.mxu0 %v2921
  %v2979 = vpop.f32.mrf.mxu0
  %v2980 = vadd.f32 0.0, %v2979
  %2981 = vdwg.mxu0
  %v2982 = vadd.f32 %v2622, %v2944
  %v2983 = vadd.f32 %v2623, %v2947
  %v2984 = vadd.f32 %v2624, %v2950
  %v2985 = vadd.f32 %v2625, %v2953
  %v2986 = vadd.f32 %v2626, %v2956
  %v2987 = vadd.f32 %v2627, %v2959
  %v2988 = vadd.f32 %v2628, %v2962
  %v2989 = vadd.f32 %v2629, %v2965
  %v2990 = vadd.f32 %v2630, %v2968
  %v2991 = vadd.f32 %v2631, %v2971
  %v2992 = vadd.f32 %v2632, %v2974
  %v2993 = vadd.f32 %v2633, %v2977
  %v2994 = vadd.f32 %v2634, %v2980
  %s2995 = scalar_lea.vmem %s4, 1872
  %v2996 = vld [vmem:[%s2995] sm:$0xff]
  %v2997 = vld [vmem:[%s2995 + $0x8] sm:$0xff]
  %v2998 = vld [vmem:[%s2995 + $0x10] sm:$0xff]
  %v2999 = vld [vmem:[%s2995 + $0x18] sm:$0xff]
  %v3000 = vld [vmem:[%s2995 + $0x20] sm:$0xff]
  %v3001 = vld [vmem:[%s2995 + $0x28] sm:$0xff]
  %v3002 = vld [vmem:[%s2995 + $0x30] sm:$0xff]
  %v3003 = vld [vmem:[%s2995 + $0x38] sm:$0xff]
  %v3004 = vld [vmem:[%s2995 + $0x40] sm:$0xff]
  %v3005 = vld [vmem:[%s2995 + $0x48] sm:$0xff]
  %v3006 = vld [vmem:[%s2995 + $0x50] sm:$0xff]
  %v3007 = vld [vmem:[%s2995 + $0x58] sm:$0xff]
  %v3008 = vld [vmem:[%s2995 + $0x60] sm:$0xff]
  %v3009 = vld [vmem:[%s2995 + $0x68] sm:$0xff]
  %v3010 = vld [vmem:[%s2995 + $0x70] sm:$0xff]
  %v3011 = vld [vmem:[%s2995 + $0x78] sm:$0xff]
  %v3012 = vld [vmem:[%s2995 + $0x80] sm:$0xff]
  %v3013 = vld [vmem:[%s2995 + $0x88] sm:$0xff]
  %v3014 = vld [vmem:[%s2995 + $0x90] sm:$0xff]
  %v3015 = vld [vmem:[%s2995 + $0x98] sm:$0xff]
  %v3016 = vld [vmem:[%s2995 + $0xa0] sm:$0xff]
  %v3017 = vld [vmem:[%s2995 + $0xa8] sm:$0xff]
  %v3018 = vld [vmem:[%s2995 + $0xb0] sm:$0xff]
  %v3019 = vld [vmem:[%s2995 + $0xb8] sm:$0xff]
  %v3020 = vld [vmem:[%s2995 + $0xc0] sm:$0xff]
  %v3021 = vld [vmem:[%s2995 + $0xc8] sm:$0xff]
  %v3022 = vld [vmem:[%s2995 + $0xd0] sm:$0xff]
  %v3023 = vld [vmem:[%s2995 + $0xd8] sm:$0xff]
  %v3024 = vld [vmem:[%s2995 + $0xe0] sm:$0xff]
  %v3025 = vld [vmem:[%s2995 + $0xe8] sm:$0xff]
  %v3026 = vld [vmem:[%s2995 + $0xf0] sm:$0xff]
  %v3027 = vld [vmem:[%s2995 + $0xf8] sm:$0xff]
  %v3028 = vld [vmem:[%s2995 + $0x100] sm:$0xff]
  %v3029 = vld [vmem:[%s2995 + $0x108] sm:$0xff]
  %v3030 = vld [vmem:[%s2995 + $0x110] sm:$0xff]
  %v3031 = vld [vmem:[%s2995 + $0x118] sm:$0xff]
  %v3032 = vld [vmem:[%s2995 + $0x120] sm:$0x3]
  %v3033 = vld [vmem:[%s2995 + $0x128] sm:$0x3]
  %v3034 = vld [vmem:[%s2995 + $0x130] sm:$0x3]
  %v3036 = vsel %vm896, %v2998, 0
  %v3039 = vsel %vm896, %v3001, 0
  %v3042 = vsel %vm896, %v3004, 0
  %v3045 = vsel %vm896, %v3007, 0
  %v3048 = vsel %vm896, %v3010, 0
  %v3051 = vsel %vm896, %v3013, 0
  %v3054 = vsel %vm896, %v3016, 0
  %v3057 = vsel %vm896, %v3019, 0
  %v3060 = vsel %vm896, %v3022, 0
  %v3063 = vsel %vm896, %v3025, 0
  %v3066 = vsel %vm896, %v3028, 0
  %v3069 = vsel %vm896, %v3031, 0
  %v3072 = vsel %vm896, %v3034, 0
  %3074 = vmatpush.msra.mxu0 %v829
  %3075 = vmatpush.msra.mxu0 %v828
  %3076 = vmatpush.msra.mxu0 %v827
  %3077 = vmatpush.msra.mxu0 %v826
  %3078 = vmatpush.msra.mxu0 %v825
  %3079 = vmatpush.msra.mxu0 %v824
  %3080 = vmatpush.msra.mxu0 %v823
  %3081 = vmatpush.msra.mxu0 %v822
  %3082 = vmatpush.msra.mxu0 %v821
  %3083 = vmatpush.msra.mxu0 %v820
  %3084 = vmatpush.msra.mxu0 %v819
  %3085 = vmatpush.msra.mxu0 %v818
  %3086 = vmatpush.msra.mxu0 %v817
  %3087 = vmatpush.msra.mxu0 %v816
  %3088 = vmatpush.msra.mxu0 %v815
  %3089 = vmatpush.msra.mxu0 %v814
  %3090 = vmatmul.f32.gmra.mxu0 %v2996
  %v3091 = vpop.f32.mrf.mxu0
  %v3092 = vadd.f32 0.0, %v3091
  %3093 = vmatmul.f32.gmra.mxu0 %v2999
  %v3094 = vpop.f32.mrf.mxu0
  %v3095 = vadd.f32 0.0, %v3094
  %3096 = vmatmul.f32.gmra.mxu0 %v3002
  %v3097 = vpop.f32.mrf.mxu0
  %v3098 = vadd.f32 0.0, %v3097
  %3099 = vmatmul.f32.gmra.mxu0 %v3005
  %v3100 = vpop.f32.mrf.mxu0
  %v3101 = vadd.f32 0.0, %v3100
  %3102 = vmatmul.f32.gmra.mxu0 %v3008
  %v3103 = vpop.f32.mrf.mxu0
  %v3104 = vadd.f32 0.0, %v3103
  %3105 = vmatmul.f32.gmra.mxu0 %v3011
  %v3106 = vpop.f32.mrf.mxu0
  %v3107 = vadd.f32 0.0, %v3106
  %3108 = vmatmul.f32.gmra.mxu0 %v3014
  %v3109 = vpop.f32.mrf.mxu0
  %v3110 = vadd.f32 0.0, %v3109
  %3111 = vmatmul.f32.gmra.mxu0 %v3017
  %v3112 = vpop.f32.mrf.mxu0
  %v3113 = vadd.f32 0.0, %v3112
  %3114 = vmatmul.f32.gmra.mxu0 %v3020
  %v3115 = vpop.f32.mrf.mxu0
  %v3116 = vadd.f32 0.0, %v3115
  %3117 = vmatmul.f32.gmra.mxu0 %v3023
  %v3118 = vpop.f32.mrf.mxu0
  %v3119 = vadd.f32 0.0, %v3118
  %3120 = vmatmul.f32.gmra.mxu0 %v3026
  %v3121 = vpop.f32.mrf.mxu0
  %v3122 = vadd.f32 0.0, %v3121
  %3123 = vmatmul.f32.gmra.mxu0 %v3029
  %v3124 = vpop.f32.mrf.mxu0
  %v3125 = vadd.f32 0.0, %v3124
  %3126 = vmatmul.f32.gmra.mxu0 %v3032
  %v3127 = vpop.f32.mrf.mxu0
  %v3128 = vadd.f32 0.0, %v3127
  %3129 = vdwg.mxu0
  %3130 = vmatpush.msra.mxu0 %v845
  %3131 = vmatpush.msra.mxu0 %v844
  %3132 = vmatpush.msra.mxu0 %v843
  %3133 = vmatpush.msra.mxu0 %v842
  %3134 = vmatpush.msra.mxu0 %v841
  %3135 = vmatpush.msra.mxu0 %v840
  %3136 = vmatpush.msra.mxu0 %v839
  %3137 = vmatpush.msra.mxu0 %v838
  %3138 = vmatpush.msra.mxu0 %v837
  %3139 = vmatpush.msra.mxu0 %v836
  %3140 = vmatpush.msra.mxu0 %v835
  %3141 = vmatpush.msra.mxu0 %v834
  %3142 = vmatpush.msra.mxu0 %v833
  %3143 = vmatpush.msra.mxu0 %v832
  %3144 = vmatpush.msra.mxu0 %v831
  %3145 = vmatpush.msra.mxu0 %v830
  %3146 = vmatmul.f32.gmra.mxu0 %v2997
  %v3147 = vpop.f32.mrf.mxu0
  %v3148 = vadd.f32 %v3092, %v3147
  %3149 = vmatmul.f32.gmra.mxu0 %v3000
  %v3150 = vpop.f32.mrf.mxu0
  %v3151 = vadd.f32 %v3095, %v3150
  %3152 = vmatmul.f32.gmra.mxu0 %v3003
  %v3153 = vpop.f32.mrf.mxu0
  %v3154 = vadd.f32 %v3098, %v3153
  %3155 = vmatmul.f32.gmra.mxu0 %v3006
  %v3156 = vpop.f32.mrf.mxu0
  %v3157 = vadd.f32 %v3101, %v3156
  %3158 = vmatmul.f32.gmra.mxu0 %v3009
  %v3159 = vpop.f32.mrf.mxu0
  %v3160 = vadd.f32 %v3104, %v3159
  %3161 = vmatmul.f32.gmra.mxu0 %v3012
  %v3162 = vpop.f32.mrf.mxu0
  %v3163 = vadd.f32 %v3107, %v3162
  %3164 = vmatmul.f32.gmra.mxu0 %v3015
  %v3165 = vpop.f32.mrf.mxu0
  %v3166 = vadd.f32 %v3110, %v3165
  %3167 = vmatmul.f32.gmra.mxu0 %v3018
  %v3168 = vpop.f32.mrf.mxu0
  %v3169 = vadd.f32 %v3113, %v3168
  %3170 = vmatmul.f32.gmra.mxu0 %v3021
  %v3171 = vpop.f32.mrf.mxu0
  %v3172 = vadd.f32 %v3116, %v3171
  %3173 = vmatmul.f32.gmra.mxu0 %v3024
  %v3174 = vpop.f32.mrf.mxu0
  %v3175 = vadd.f32 %v3119, %v3174
  %3176 = vmatmul.f32.gmra.mxu0 %v3027
  %v3177 = vpop.f32.mrf.mxu0
  %v3178 = vadd.f32 %v3122, %v3177
  %3179 = vmatmul.f32.gmra.mxu0 %v3030
  %v3180 = vpop.f32.mrf.mxu0
  %v3181 = vadd.f32 %v3125, %v3180
  %3182 = vmatmul.f32.gmra.mxu0 %v3033
  %v3183 = vpop.f32.mrf.mxu0
  %v3184 = vadd.f32 %v3128, %v3183
  %3185 = vdwg.mxu0
  %3186 = vmatpush.msra.mxu0 0.0
  %3187 = vmatpush.msra.mxu0 0.0
  %3188 = vmatpush.msra.mxu0 0.0
  %3189 = vmatpush.msra.mxu0 0.0
  %3190 = vmatpush.msra.mxu0 0.0
  %3191 = vmatpush.msra.mxu0 %v938
  %3192 = vmatpush.msra.mxu0 %v855
  %3193 = vmatpush.msra.mxu0 %v854
  %3194 = vmatpush.msra.mxu0 %v853
  %3195 = vmatpush.msra.mxu0 %v852
  %3196 = vmatpush.msra.mxu0 %v851
  %3197 = vmatpush.msra.mxu0 %v850
  %3198 = vmatpush.msra.mxu0 %v849
  %3199 = vmatpush.msra.mxu0 %v848
  %3200 = vmatpush.msra.mxu0 %v847
  %3201 = vmatpush.msra.mxu0 %v846
  %3202 = vmatmul.f32.gmra.mxu0 %v3036
  %v3203 = vpop.f32.mrf.mxu0
  %v3204 = vadd.f32 %v3148, %v3203
  %3205 = vmatmul.f32.gmra.mxu0 %v3039
  %v3206 = vpop.f32.mrf.mxu0
  %v3207 = vadd.f32 %v3151, %v3206
  %3208 = vmatmul.f32.gmra.mxu0 %v3042
  %v3209 = vpop.f32.mrf.mxu0
  %v3210 = vadd.f32 %v3154, %v3209
  %3211 = vmatmul.f32.gmra.mxu0 %v3045
  %v3212 = vpop.f32.mrf.mxu0
  %v3213 = vadd.f32 %v3157, %v3212
  %3214 = vmatmul.f32.gmra.mxu0 %v3048
  %v3215 = vpop.f32.mrf.mxu0
  %v3216 = vadd.f32 %v3160, %v3215
  %3217 = vmatmul.f32.gmra.mxu0 %v3051
  %v3218 = vpop.f32.mrf.mxu0
  %v3219 = vadd.f32 %v3163, %v3218
  %3220 = vmatmul.f32.gmra.mxu0 %v3054
  %v3221 = vpop.f32.mrf.mxu0
  %v3222 = vadd.f32 %v3166, %v3221
  %3223 = vmatmul.f32.gmra.mxu0 %v3057
  %v3224 = vpop.f32.mrf.mxu0
  %v3225 = vadd.f32 %v3169, %v3224
  %3226 = vmatmul.f32.gmra.mxu0 %v3060
  %v3227 = vpop.f32.mrf.mxu0
  %v3228 = vadd.f32 %v3172, %v3227
  %3229 = vmatmul.f32.gmra.mxu0 %v3063
  %v3230 = vpop.f32.mrf.mxu0
  %v3231 = vadd.f32 %v3175, %v3230
  %3232 = vmatmul.f32.gmra.mxu0 %v3066
  %v3233 = vpop.f32.mrf.mxu0
  %v3234 = vadd.f32 %v3178, %v3233
  %3235 = vmatmul.f32.gmra.mxu0 %v3069
  %v3236 = vpop.f32.mrf.mxu0
  %v3237 = vadd.f32 %v3181, %v3236
  %3238 = vmatmul.f32.gmra.mxu0 %v3072
  %v3239 = vpop.f32.mrf.mxu0
  %v3240 = vadd.f32 %v3184, %v3239
  %3241 = vdwg.mxu0
  %s3242 = scalar_lea.vmem %s5, 24
  %v3243 = vld [vmem:[%s3242] sm:$0xf]
  %v3245 = vsel %vm389, %v3204, 0
  %v3248 = vsel %vm389, %v3207, 0
  %v3251 = vsel %vm389, %v3210, 0
  %v3254 = vsel %vm389, %v3213, 0
  %v3257 = vsel %vm389, %v3216, 0
  %v3260 = vsel %vm389, %v3219, 0
  %v3263 = vsel %vm389, %v3222, 0
  %v3266 = vsel %vm389, %v3225, 0
  %v3269 = vsel %vm389, %v3228, 0
  %v3272 = vsel %vm389, %v3231, 0
  %v3275 = vsel %vm389, %v3234, 0
  %v3278 = vsel %vm389, %v3237, 0
  %v3281 = vsel %vm389, %v3240, 0
  %v3284 = vsel %vm1397, %v3243, 0
  %3286 = vmatpush.msra.mxu0 0.0
  %3287 = vmatpush.msra.mxu0 0.0
  %3288 = vmatpush.msra.mxu0 0.0
  %3289 = vmatpush.msra.mxu0 0.0
  %3290 = vmatpush.msra.mxu0 0.0
  %3291 = vmatpush.msra.mxu0 0.0
  %3292 = vmatpush.msra.mxu0 0.0
  %3293 = vmatpush.msra.mxu0 0.0
  %3294 = vmatpush.msra.mxu0 0.0
  %3295 = vmatpush.msra.mxu0 0.0
  %3296 = vmatpush.msra.mxu0 0.0
  %3297 = vmatpush.msra.mxu0 0.0
  %3298 = vmatpush.msra.mxu0 0.0
  %3299 = vmatpush.msra.mxu0 0.0
  %3300 = vmatpush.msra.mxu0 0.0
  %3301 = vmatpush.msra.mxu0 %v3284
  %3302 = vmatmul.f32.gmra.mxu0 %v3245
  %v3303 = vpop.f32.mrf.mxu0
  %v3304 = vadd.f32 0.0, %v3303
  %3305 = vmatmul.f32.gmra.mxu0 %v3248
  %v3306 = vpop.f32.mrf.mxu0
  %v3307 = vadd.f32 0.0, %v3306
  %3308 = vmatmul.f32.gmra.mxu0 %v3251
  %v3309 = vpop.f32.mrf.mxu0
  %v3310 = vadd.f32 0.0, %v3309
  %3311 = vmatmul.f32.gmra.mxu0 %v3254
  %v3312 = vpop.f32.mrf.mxu0
  %v3313 = vadd.f32 0.0, %v3312
  %3314 = vmatmul.f32.gmra.mxu0 %v3257
  %v3315 = vpop.f32.mrf.mxu0
  %v3316 = vadd.f32 0.0, %v3315
  %3317 = vmatmul.f32.gmra.mxu0 %v3260
  %v3318 = vpop.f32.mrf.mxu0
  %v3319 = vadd.f32 0.0, %v3318
  %3320 = vmatmul.f32.gmra.mxu0 %v3263
  %v3321 = vpop.f32.mrf.mxu0
  %v3322 = vadd.f32 0.0, %v3321
  %3323 = vmatmul.f32.gmra.mxu0 %v3266
  %v3324 = vpop.f32.mrf.mxu0
  %v3325 = vadd.f32 0.0, %v3324
  %3326 = vmatmul.f32.gmra.mxu0 %v3269
  %v3327 = vpop.f32.mrf.mxu0
  %v3328 = vadd.f32 0.0, %v3327
  %3329 = vmatmul.f32.gmra.mxu0 %v3272
  %v3330 = vpop.f32.mrf.mxu0
  %v3331 = vadd.f32 0.0, %v3330
  %3332 = vmatmul.f32.gmra.mxu0 %v3275
  %v3333 = vpop.f32.mrf.mxu0
  %v3334 = vadd.f32 0.0, %v3333
  %3335 = vmatmul.f32.gmra.mxu0 %v3278
  %v3336 = vpop.f32.mrf.mxu0
  %v3337 = vadd.f32 0.0, %v3336
  %3338 = vmatmul.f32.gmra.mxu0 %v3281
  %v3339 = vpop.f32.mrf.mxu0
  %v3340 = vadd.f32 0.0, %v3339
  %3341 = vdwg.mxu0
  %v3342 = vadd.f32 %v2982, %v3304
  %v3343 = vadd.f32 %v2983, %v3307
  %v3344 = vadd.f32 %v2984, %v3310
  %v3345 = vadd.f32 %v2985, %v3313
  %v3346 = vadd.f32 %v2986, %v3316
  %v3347 = vadd.f32 %v2987, %v3319
  %v3348 = vadd.f32 %v2988, %v3322
  %v3349 = vadd.f32 %v2989, %v3325
  %v3350 = vadd.f32 %v2990, %v3328
  %v3351 = vadd.f32 %v2991, %v3331
  %v3352 = vadd.f32 %v2992, %v3334
  %v3353 = vadd.f32 %v2993, %v3337
  %v3354 = vadd.f32 %v2994, %v3340
  %s3355 = scalar_lea.vmem %s4, 2184
  %v3356 = vld [vmem:[%s3355] sm:$0xff]
  %v3357 = vld [vmem:[%s3355 + $0x8] sm:$0xff]
  %v3358 = vld [vmem:[%s3355 + $0x10] sm:$0xff]
  %v3359 = vld [vmem:[%s3355 + $0x18] sm:$0xff]
  %v3360 = vld [vmem:[%s3355 + $0x20] sm:$0xff]
  %v3361 = vld [vmem:[%s3355 + $0x28] sm:$0xff]
  %v3362 = vld [vmem:[%s3355 + $0x30] sm:$0xff]
  %v3363 = vld [vmem:[%s3355 + $0x38] sm:$0xff]
  %v3364 = vld [vmem:[%s3355 + $0x40] sm:$0xff]
  %v3365 = vld [vmem:[%s3355 + $0x48] sm:$0xff]
  %v3366 = vld [vmem:[%s3355 + $0x50] sm:$0xff]
  %v3367 = vld [vmem:[%s3355 + $0x58] sm:$0xff]
  %v3368 = vld [vmem:[%s3355 + $0x60] sm:$0xff]
  %v3369 = vld [vmem:[%s3355 + $0x68] sm:$0xff]
  %v3370 = vld [vmem:[%s3355 + $0x70] sm:$0xff]
  %v3371 = vld [vmem:[%s3355 + $0x78] sm:$0xff]
  %v3372 = vld [vmem:[%s3355 + $0x80] sm:$0xff]
  %v3373 = vld [vmem:[%s3355 + $0x88] sm:$0xff]
  %v3374 = vld [vmem:[%s3355 + $0x90] sm:$0xff]
  %v3375 = vld [vmem:[%s3355 + $0x98] sm:$0xff]
  %v3376 = vld [vmem:[%s3355 + $0xa0] sm:$0xff]
  %v3377 = vld [vmem:[%s3355 + $0xa8] sm:$0xff]
  %v3378 = vld [vmem:[%s3355 + $0xb0] sm:$0xff]
  %v3379 = vld [vmem:[%s3355 + $0xb8] sm:$0xff]
  %v3380 = vld [vmem:[%s3355 + $0xc0] sm:$0xff]
  %v3381 = vld [vmem:[%s3355 + $0xc8] sm:$0xff]
  %v3382 = vld [vmem:[%s3355 + $0xd0] sm:$0xff]
  %v3383 = vld [vmem:[%s3355 + $0xd8] sm:$0xff]
  %v3384 = vld [vmem:[%s3355 + $0xe0] sm:$0xff]
  %v3385 = vld [vmem:[%s3355 + $0xe8] sm:$0xff]
  %v3386 = vld [vmem:[%s3355 + $0xf0] sm:$0xff]
  %v3387 = vld [vmem:[%s3355 + $0xf8] sm:$0xff]
  %v3388 = vld [vmem:[%s3355 + $0x100] sm:$0xff]
  %v3389 = vld [vmem:[%s3355 + $0x108] sm:$0xff]
  %v3390 = vld [vmem:[%s3355 + $0x110] sm:$0xff]
  %v3391 = vld [vmem:[%s3355 + $0x118] sm:$0xff]
  %v3392 = vld [vmem:[%s3355 + $0x120] sm:$0x3]
  %v3393 = vld [vmem:[%s3355 + $0x128] sm:$0x3]
  %v3394 = vld [vmem:[%s3355 + $0x130] sm:$0x3]
  %v3396 = vsel %vm896, %v3358, 0
  %v3399 = vsel %vm896, %v3361, 0
  %v3402 = vsel %vm896, %v3364, 0
  %v3405 = vsel %vm896, %v3367, 0
  %v3408 = vsel %vm896, %v3370, 0
  %v3411 = vsel %vm896, %v3373, 0
  %v3414 = vsel %vm896, %v3376, 0
  %v3417 = vsel %vm896, %v3379, 0
  %v3420 = vsel %vm896, %v3382, 0
  %v3423 = vsel %vm896, %v3385, 0
  %v3426 = vsel %vm896, %v3388, 0
  %v3429 = vsel %vm896, %v3391, 0
  %v3432 = vsel %vm896, %v3394, 0
  %3434 = vmatpush.msra.mxu0 %v829
  %3435 = vmatpush.msra.mxu0 %v828
  %3436 = vmatpush.msra.mxu0 %v827
  %3437 = vmatpush.msra.mxu0 %v826
  %3438 = vmatpush.msra.mxu0 %v825
  %3439 = vmatpush.msra.mxu0 %v824
  %3440 = vmatpush.msra.mxu0 %v823
  %3441 = vmatpush.msra.mxu0 %v822
  %3442 = vmatpush.msra.mxu0 %v821
  %3443 = vmatpush.msra.mxu0 %v820
  %3444 = vmatpush.msra.mxu0 %v819
  %3445 = vmatpush.msra.mxu0 %v818
  %3446 = vmatpush.msra.mxu0 %v817
  %3447 = vmatpush.msra.mxu0 %v816
  %3448 = vmatpush.msra.mxu0 %v815
  %3449 = vmatpush.msra.mxu0 %v814
  %3450 = vmatmul.f32.gmra.mxu0 %v3356
  %v3451 = vpop.f32.mrf.mxu0
  %v3452 = vadd.f32 0.0, %v3451
  %3453 = vmatmul.f32.gmra.mxu0 %v3359
  %v3454 = vpop.f32.mrf.mxu0
  %v3455 = vadd.f32 0.0, %v3454
  %3456 = vmatmul.f32.gmra.mxu0 %v3362
  %v3457 = vpop.f32.mrf.mxu0
  %v3458 = vadd.f32 0.0, %v3457
  %3459 = vmatmul.f32.gmra.mxu0 %v3365
  %v3460 = vpop.f32.mrf.mxu0
  %v3461 = vadd.f32 0.0, %v3460
  %3462 = vmatmul.f32.gmra.mxu0 %v3368
  %v3463 = vpop.f32.mrf.mxu0
  %v3464 = vadd.f32 0.0, %v3463
  %3465 = vmatmul.f32.gmra.mxu0 %v3371
  %v3466 = vpop.f32.mrf.mxu0
  %v3467 = vadd.f32 0.0, %v3466
  %3468 = vmatmul.f32.gmra.mxu0 %v3374
  %v3469 = vpop.f32.mrf.mxu0
  %v3470 = vadd.f32 0.0, %v3469
  %3471 = vmatmul.f32.gmra.mxu0 %v3377
  %v3472 = vpop.f32.mrf.mxu0
  %v3473 = vadd.f32 0.0, %v3472
  %3474 = vmatmul.f32.gmra.mxu0 %v3380
  %v3475 = vpop.f32.mrf.mxu0
  %v3476 = vadd.f32 0.0, %v3475
  %3477 = vmatmul.f32.gmra.mxu0 %v3383
  %v3478 = vpop.f32.mrf.mxu0
  %v3479 = vadd.f32 0.0, %v3478
  %3480 = vmatmul.f32.gmra.mxu0 %v3386
  %v3481 = vpop.f32.mrf.mxu0
  %v3482 = vadd.f32 0.0, %v3481
  %3483 = vmatmul.f32.gmra.mxu0 %v3389
  %v3484 = vpop.f32.mrf.mxu0
  %v3485 = vadd.f32 0.0, %v3484
  %3486 = vmatmul.f32.gmra.mxu0 %v3392
  %v3487 = vpop.f32.mrf.mxu0
  %v3488 = vadd.f32 0.0, %v3487
  %3489 = vdwg.mxu0
  %3490 = vmatpush.msra.mxu0 %v845
  %3491 = vmatpush.msra.mxu0 %v844
  %3492 = vmatpush.msra.mxu0 %v843
  %3493 = vmatpush.msra.mxu0 %v842
  %3494 = vmatpush.msra.mxu0 %v841
  %3495 = vmatpush.msra.mxu0 %v840
  %3496 = vmatpush.msra.mxu0 %v839
  %3497 = vmatpush.msra.mxu0 %v838
  %3498 = vmatpush.msra.mxu0 %v837
  %3499 = vmatpush.msra.mxu0 %v836
  %3500 = vmatpush.msra.mxu0 %v835
  %3501 = vmatpush.msra.mxu0 %v834
  %3502 = vmatpush.msra.mxu0 %v833
  %3503 = vmatpush.msra.mxu0 %v832
  %3504 = vmatpush.msra.mxu0 %v831
  %3505 = vmatpush.msra.mxu0 %v830
  %3506 = vmatmul.f32.gmra.mxu0 %v3357
  %v3507 = vpop.f32.mrf.mxu0
  %v3508 = vadd.f32 %v3452, %v3507
  %3509 = vmatmul.f32.gmra.mxu0 %v3360
  %v3510 = vpop.f32.mrf.mxu0
  %v3511 = vadd.f32 %v3455, %v3510
  %3512 = vmatmul.f32.gmra.mxu0 %v3363
  %v3513 = vpop.f32.mrf.mxu0
  %v3514 = vadd.f32 %v3458, %v3513
  %3515 = vmatmul.f32.gmra.mxu0 %v3366
  %v3516 = vpop.f32.mrf.mxu0
  %v3517 = vadd.f32 %v3461, %v3516
  %3518 = vmatmul.f32.gmra.mxu0 %v3369
  %v3519 = vpop.f32.mrf.mxu0
  %v3520 = vadd.f32 %v3464, %v3519
  %3521 = vmatmul.f32.gmra.mxu0 %v3372
  %v3522 = vpop.f32.mrf.mxu0
  %v3523 = vadd.f32 %v3467, %v3522
  %3524 = vmatmul.f32.gmra.mxu0 %v3375
  %v3525 = vpop.f32.mrf.mxu0
  %v3526 = vadd.f32 %v3470, %v3525
  %3527 = vmatmul.f32.gmra.mxu0 %v3378
  %v3528 = vpop.f32.mrf.mxu0
  %v3529 = vadd.f32 %v3473, %v3528
  %3530 = vmatmul.f32.gmra.mxu0 %v3381
  %v3531 = vpop.f32.mrf.mxu0
  %v3532 = vadd.f32 %v3476, %v3531
  %3533 = vmatmul.f32.gmra.mxu0 %v3384
  %v3534 = vpop.f32.mrf.mxu0
  %v3535 = vadd.f32 %v3479, %v3534
  %3536 = vmatmul.f32.gmra.mxu0 %v3387
  %v3537 = vpop.f32.mrf.mxu0
  %v3538 = vadd.f32 %v3482, %v3537
  %3539 = vmatmul.f32.gmra.mxu0 %v3390
  %v3540 = vpop.f32.mrf.mxu0
  %v3541 = vadd.f32 %v3485, %v3540
  %3542 = vmatmul.f32.gmra.mxu0 %v3393
  %v3543 = vpop.f32.mrf.mxu0
  %v3544 = vadd.f32 %v3488, %v3543
  %3545 = vdwg.mxu0
  %3546 = vmatpush.msra.mxu0 0.0
  %3547 = vmatpush.msra.mxu0 0.0
  %3548 = vmatpush.msra.mxu0 0.0
  %3549 = vmatpush.msra.mxu0 0.0
  %3550 = vmatpush.msra.mxu0 0.0
  %3551 = vmatpush.msra.mxu0 %v938
  %3552 = vmatpush.msra.mxu0 %v855
  %3553 = vmatpush.msra.mxu0 %v854
  %3554 = vmatpush.msra.mxu0 %v853
  %3555 = vmatpush.msra.mxu0 %v852
  %3556 = vmatpush.msra.mxu0 %v851
  %3557 = vmatpush.msra.mxu0 %v850
  %3558 = vmatpush.msra.mxu0 %v849
  %3559 = vmatpush.msra.mxu0 %v848
  %3560 = vmatpush.msra.mxu0 %v847
  %3561 = vmatpush.msra.mxu0 %v846
  %3562 = vmatmul.f32.gmra.mxu0 %v3396
  %v3563 = vpop.f32.mrf.mxu0
  %v3564 = vadd.f32 %v3508, %v3563
  %3565 = vmatmul.f32.gmra.mxu0 %v3399
  %v3566 = vpop.f32.mrf.mxu0
  %v3567 = vadd.f32 %v3511, %v3566
  %3568 = vmatmul.f32.gmra.mxu0 %v3402
  %v3569 = vpop.f32.mrf.mxu0
  %v3570 = vadd.f32 %v3514, %v3569
  %3571 = vmatmul.f32.gmra.mxu0 %v3405
  %v3572 = vpop.f32.mrf.mxu0
  %v3573 = vadd.f32 %v3517, %v3572
  %3574 = vmatmul.f32.gmra.mxu0 %v3408
  %v3575 = vpop.f32.mrf.mxu0
  %v3576 = vadd.f32 %v3520, %v3575
  %3577 = vmatmul.f32.gmra.mxu0 %v3411
  %v3578 = vpop.f32.mrf.mxu0
  %v3579 = vadd.f32 %v3523, %v3578
  %3580 = vmatmul.f32.gmra.mxu0 %v3414
  %v3581 = vpop.f32.mrf.mxu0
  %v3582 = vadd.f32 %v3526, %v3581
  %3583 = vmatmul.f32.gmra.mxu0 %v3417
  %v3584 = vpop.f32.mrf.mxu0
  %v3585 = vadd.f32 %v3529, %v3584
  %3586 = vmatmul.f32.gmra.mxu0 %v3420
  %v3587 = vpop.f32.mrf.mxu0
  %v3588 = vadd.f32 %v3532, %v3587
  %3589 = vmatmul.f32.gmra.mxu0 %v3423
  %v3590 = vpop.f32.mrf.mxu0
  %v3591 = vadd.f32 %v3535, %v3590
  %3592 = vmatmul.f32.gmra.mxu0 %v3426
  %v3593 = vpop.f32.mrf.mxu0
  %v3594 = vadd.f32 %v3538, %v3593
  %3595 = vmatmul.f32.gmra.mxu0 %v3429
  %v3596 = vpop.f32.mrf.mxu0
  %v3597 = vadd.f32 %v3541, %v3596
  %3598 = vmatmul.f32.gmra.mxu0 %v3432
  %v3599 = vpop.f32.mrf.mxu0
  %v3600 = vadd.f32 %v3544, %v3599
  %3601 = vdwg.mxu0
  %s3602 = scalar_lea.vmem %s5, 28
  %v3603 = vld [vmem:[%s3602] sm:$0xf]
  %v3605 = vsel %vm389, %v3564, 0
  %v3608 = vsel %vm389, %v3567, 0
  %v3611 = vsel %vm389, %v3570, 0
  %v3614 = vsel %vm389, %v3573, 0
  %v3617 = vsel %vm389, %v3576, 0
  %v3620 = vsel %vm389, %v3579, 0
  %v3623 = vsel %vm389, %v3582, 0
  %v3626 = vsel %vm389, %v3585, 0
  %v3629 = vsel %vm389, %v3588, 0
  %v3632 = vsel %vm389, %v3591, 0
  %v3635 = vsel %vm389, %v3594, 0
  %v3638 = vsel %vm389, %v3597, 0
  %v3641 = vsel %vm389, %v3600, 0
  %v3644 = vsel %vm1397, %v3603, 0
  %3646 = vmatpush.msra.mxu0 0.0
  %3647 = vmatpush.msra.mxu0 0.0
  %3648 = vmatpush.msra.mxu0 0.0
  %3649 = vmatpush.msra.mxu0 0.0
  %3650 = vmatpush.msra.mxu0 0.0
  %3651 = vmatpush.msra.mxu0 0.0
  %3652 = vmatpush.msra.mxu0 0.0
  %3653 = vmatpush.msra.mxu0 0.0
  %3654 = vmatpush.msra.mxu0 0.0
  %3655 = vmatpush.msra.mxu0 0.0
  %3656 = vmatpush.msra.mxu0 0.0
  %3657 = vmatpush.msra.mxu0 0.0
  %3658 = vmatpush.msra.mxu0 0.0
  %3659 = vmatpush.msra.mxu0 0.0
  %3660 = vmatpush.msra.mxu0 0.0
  %3661 = vmatpush.msra.mxu0 %v3644
  %3662 = vmatmul.f32.gmra.mxu0 %v3605
  %v3663 = vpop.f32.mrf.mxu0
  %v3664 = vadd.f32 0.0, %v3663
  %3665 = vmatmul.f32.gmra.mxu0 %v3608
  %v3666 = vpop.f32.mrf.mxu0
  %v3667 = vadd.f32 0.0, %v3666
  %3668 = vmatmul.f32.gmra.mxu0 %v3611
  %v3669 = vpop.f32.mrf.mxu0
  %v3670 = vadd.f32 0.0, %v3669
  %3671 = vmatmul.f32.gmra.mxu0 %v3614
  %v3672 = vpop.f32.mrf.mxu0
  %v3673 = vadd.f32 0.0, %v3672
  %3674 = vmatmul.f32.gmra.mxu0 %v3617
  %v3675 = vpop.f32.mrf.mxu0
  %v3676 = vadd.f32 0.0, %v3675
  %3677 = vmatmul.f32.gmra.mxu0 %v3620
  %v3678 = vpop.f32.mrf.mxu0
  %v3679 = vadd.f32 0.0, %v3678
  %3680 = vmatmul.f32.gmra.mxu0 %v3623
  %v3681 = vpop.f32.mrf.mxu0
  %v3682 = vadd.f32 0.0, %v3681
  %3683 = vmatmul.f32.gmra.mxu0 %v3626
  %v3684 = vpop.f32.mrf.mxu0
  %v3685 = vadd.f32 0.0, %v3684
  %3686 = vmatmul.f32.gmra.mxu0 %v3629
  %v3687 = vpop.f32.mrf.mxu0
  %v3688 = vadd.f32 0.0, %v3687
  %3689 = vmatmul.f32.gmra.mxu0 %v3632
  %v3690 = vpop.f32.mrf.mxu0
  %v3691 = vadd.f32 0.0, %v3690
  %3692 = vmatmul.f32.gmra.mxu0 %v3635
  %v3693 = vpop.f32.mrf.mxu0
  %v3694 = vadd.f32 0.0, %v3693
  %3695 = vmatmul.f32.gmra.mxu0 %v3638
  %v3696 = vpop.f32.mrf.mxu0
  %v3697 = vadd.f32 0.0, %v3696
  %3698 = vmatmul.f32.gmra.mxu0 %v3641
  %v3699 = vpop.f32.mrf.mxu0
  %v3700 = vadd.f32 0.0, %v3699
  %3701 = vdwg.mxu0
  %v3702 = vadd.f32 %v3342, %v3664
  %v3703 = vadd.f32 %v3343, %v3667
  %v3704 = vadd.f32 %v3344, %v3670
  %v3705 = vadd.f32 %v3345, %v3673
  %v3706 = vadd.f32 %v3346, %v3676
  %v3707 = vadd.f32 %v3347, %v3679
  %v3708 = vadd.f32 %v3348, %v3682
  %v3709 = vadd.f32 %v3349, %v3685
  %v3710 = vadd.f32 %v3350, %v3688
  %v3711 = vadd.f32 %v3351, %v3691
  %v3712 = vadd.f32 %v3352, %v3694
  %v3713 = vadd.f32 %v3353, %v3697
  %v3714 = vadd.f32 %v3354, %v3700
  %s3715 = scalar_lea.vmem %s4, 2496
  %v3716 = vld [vmem:[%s3715] sm:$0xff]
  %v3717 = vld [vmem:[%s3715 + $0x8] sm:$0xff]
  %v3718 = vld [vmem:[%s3715 + $0x10] sm:$0xff]
  %v3719 = vld [vmem:[%s3715 + $0x18] sm:$0xff]
  %v3720 = vld [vmem:[%s3715 + $0x20] sm:$0xff]
  %v3721 = vld [vmem:[%s3715 + $0x28] sm:$0xff]
  %v3722 = vld [vmem:[%s3715 + $0x30] sm:$0xff]
  %v3723 = vld [vmem:[%s3715 + $0x38] sm:$0xff]
  %v3724 = vld [vmem:[%s3715 + $0x40] sm:$0xff]
  %v3725 = vld [vmem:[%s3715 + $0x48] sm:$0xff]
  %v3726 = vld [vmem:[%s3715 + $0x50] sm:$0xff]
  %v3727 = vld [vmem:[%s3715 + $0x58] sm:$0xff]
  %v3728 = vld [vmem:[%s3715 + $0x60] sm:$0xff]
  %v3729 = vld [vmem:[%s3715 + $0x68] sm:$0xff]
  %v3730 = vld [vmem:[%s3715 + $0x70] sm:$0xff]
  %v3731 = vld [vmem:[%s3715 + $0x78] sm:$0xff]
  %v3732 = vld [vmem:[%s3715 + $0x80] sm:$0xff]
  %v3733 = vld [vmem:[%s3715 + $0x88] sm:$0xff]
  %v3734 = vld [vmem:[%s3715 + $0x90] sm:$0xff]
  %v3735 = vld [vmem:[%s3715 + $0x98] sm:$0xff]
  %v3736 = vld [vmem:[%s3715 + $0xa0] sm:$0xff]
  %v3737 = vld [vmem:[%s3715 + $0xa8] sm:$0xff]
  %v3738 = vld [vmem:[%s3715 + $0xb0] sm:$0xff]
  %v3739 = vld [vmem:[%s3715 + $0xb8] sm:$0xff]
  %v3740 = vld [vmem:[%s3715 + $0xc0] sm:$0xff]
  %v3741 = vld [vmem:[%s3715 + $0xc8] sm:$0xff]
  %v3742 = vld [vmem:[%s3715 + $0xd0] sm:$0xff]
  %v3743 = vld [vmem:[%s3715 + $0xd8] sm:$0xff]
  %v3744 = vld [vmem:[%s3715 + $0xe0] sm:$0xff]
  %v3745 = vld [vmem:[%s3715 + $0xe8] sm:$0xff]
  %v3746 = vld [vmem:[%s3715 + $0xf0] sm:$0xff]
  %v3747 = vld [vmem:[%s3715 + $0xf8] sm:$0xff]
  %v3748 = vld [vmem:[%s3715 + $0x100] sm:$0xff]
  %v3749 = vld [vmem:[%s3715 + $0x108] sm:$0xff]
  %v3750 = vld [vmem:[%s3715 + $0x110] sm:$0xff]
  %v3751 = vld [vmem:[%s3715 + $0x118] sm:$0xff]
  %v3752 = vld [vmem:[%s3715 + $0x120] sm:$0x3]
  %v3753 = vld [vmem:[%s3715 + $0x128] sm:$0x3]
  %v3754 = vld [vmem:[%s3715 + $0x130] sm:$0x3]
  %v3756 = vsel %vm896, %v3718, 0
  %v3759 = vsel %vm896, %v3721, 0
  %v3762 = vsel %vm896, %v3724, 0
  %v3765 = vsel %vm896, %v3727, 0
  %v3768 = vsel %vm896, %v3730, 0
  %v3771 = vsel %vm896, %v3733, 0
  %v3774 = vsel %vm896, %v3736, 0
  %v3777 = vsel %vm896, %v3739, 0
  %v3780 = vsel %vm896, %v3742, 0
  %v3783 = vsel %vm896, %v3745, 0
  %v3786 = vsel %vm896, %v3748, 0
  %v3789 = vsel %vm896, %v3751, 0
  %v3792 = vsel %vm896, %v3754, 0
  %3794 = vmatpush.msra.mxu0 %v829
  %3795 = vmatpush.msra.mxu0 %v828
  %3796 = vmatpush.msra.mxu0 %v827
  %3797 = vmatpush.msra.mxu0 %v826
  %3798 = vmatpush.msra.mxu0 %v825
  %3799 = vmatpush.msra.mxu0 %v824
  %3800 = vmatpush.msra.mxu0 %v823
  %3801 = vmatpush.msra.mxu0 %v822
  %3802 = vmatpush.msra.mxu0 %v821
  %3803 = vmatpush.msra.mxu0 %v820
  %3804 = vmatpush.msra.mxu0 %v819
  %3805 = vmatpush.msra.mxu0 %v818
  %3806 = vmatpush.msra.mxu0 %v817
  %3807 = vmatpush.msra.mxu0 %v816
  %3808 = vmatpush.msra.mxu0 %v815
  %3809 = vmatpush.msra.mxu0 %v814
  %3810 = vmatmul.f32.gmra.mxu0 %v3716
  %v3811 = vpop.f32.mrf.mxu0
  %v3812 = vadd.f32 0.0, %v3811
  %3813 = vmatmul.f32.gmra.mxu0 %v3719
  %v3814 = vpop.f32.mrf.mxu0
  %v3815 = vadd.f32 0.0, %v3814
  %3816 = vmatmul.f32.gmra.mxu0 %v3722
  %v3817 = vpop.f32.mrf.mxu0
  %v3818 = vadd.f32 0.0, %v3817
  %3819 = vmatmul.f32.gmra.mxu0 %v3725
  %v3820 = vpop.f32.mrf.mxu0
  %v3821 = vadd.f32 0.0, %v3820
  %3822 = vmatmul.f32.gmra.mxu0 %v3728
  %v3823 = vpop.f32.mrf.mxu0
  %v3824 = vadd.f32 0.0, %v3823
  %3825 = vmatmul.f32.gmra.mxu0 %v3731
  %v3826 = vpop.f32.mrf.mxu0
  %v3827 = vadd.f32 0.0, %v3826
  %3828 = vmatmul.f32.gmra.mxu0 %v3734
  %v3829 = vpop.f32.mrf.mxu0
  %v3830 = vadd.f32 0.0, %v3829
  %3831 = vmatmul.f32.gmra.mxu0 %v3737
  %v3832 = vpop.f32.mrf.mxu0
  %v3833 = vadd.f32 0.0, %v3832
  %3834 = vmatmul.f32.gmra.mxu0 %v3740
  %v3835 = vpop.f32.mrf.mxu0
  %v3836 = vadd.f32 0.0, %v3835
  %3837 = vmatmul.f32.gmra.mxu0 %v3743
  %v3838 = vpop.f32.mrf.mxu0
  %v3839 = vadd.f32 0.0, %v3838
  %3840 = vmatmul.f32.gmra.mxu0 %v3746
  %v3841 = vpop.f32.mrf.mxu0
  %v3842 = vadd.f32 0.0, %v3841
  %3843 = vmatmul.f32.gmra.mxu0 %v3749
  %v3844 = vpop.f32.mrf.mxu0
  %v3845 = vadd.f32 0.0, %v3844
  %3846 = vmatmul.f32.gmra.mxu0 %v3752
  %v3847 = vpop.f32.mrf.mxu0
  %v3848 = vadd.f32 0.0, %v3847
  %3849 = vdwg.mxu0
  %3850 = vmatpush.msra.mxu0 %v845
  %3851 = vmatpush.msra.mxu0 %v844
  %3852 = vmatpush.msra.mxu0 %v843
  %3853 = vmatpush.msra.mxu0 %v842
  %3854 = vmatpush.msra.mxu0 %v841
  %3855 = vmatpush.msra.mxu0 %v840
  %3856 = vmatpush.msra.mxu0 %v839
  %3857 = vmatpush.msra.mxu0 %v838
  %3858 = vmatpush.msra.mxu0 %v837
  %3859 = vmatpush.msra.mxu0 %v836
  %3860 = vmatpush.msra.mxu0 %v835
  %3861 = vmatpush.msra.mxu0 %v834
  %3862 = vmatpush.msra.mxu0 %v833
  %3863 = vmatpush.msra.mxu0 %v832
  %3864 = vmatpush.msra.mxu0 %v831
  %3865 = vmatpush.msra.mxu0 %v830
  %3866 = vmatmul.f32.gmra.mxu0 %v3717
  %v3867 = vpop.f32.mrf.mxu0
  %v3868 = vadd.f32 %v3812, %v3867
  %3869 = vmatmul.f32.gmra.mxu0 %v3720
  %v3870 = vpop.f32.mrf.mxu0
  %v3871 = vadd.f32 %v3815, %v3870
  %3872 = vmatmul.f32.gmra.mxu0 %v3723
  %v3873 = vpop.f32.mrf.mxu0
  %v3874 = vadd.f32 %v3818, %v3873
  %3875 = vmatmul.f32.gmra.mxu0 %v3726
  %v3876 = vpop.f32.mrf.mxu0
  %v3877 = vadd.f32 %v3821, %v3876
  %3878 = vmatmul.f32.gmra.mxu0 %v3729
  %v3879 = vpop.f32.mrf.mxu0
  %v3880 = vadd.f32 %v3824, %v3879
  %3881 = vmatmul.f32.gmra.mxu0 %v3732
  %v3882 = vpop.f32.mrf.mxu0
  %v3883 = vadd.f32 %v3827, %v3882
  %3884 = vmatmul.f32.gmra.mxu0 %v3735
  %v3885 = vpop.f32.mrf.mxu0
  %v3886 = vadd.f32 %v3830, %v3885
  %3887 = vmatmul.f32.gmra.mxu0 %v3738
  %v3888 = vpop.f32.mrf.mxu0
  %v3889 = vadd.f32 %v3833, %v3888
  %3890 = vmatmul.f32.gmra.mxu0 %v3741
  %v3891 = vpop.f32.mrf.mxu0
  %v3892 = vadd.f32 %v3836, %v3891
  %3893 = vmatmul.f32.gmra.mxu0 %v3744
  %v3894 = vpop.f32.mrf.mxu0
  %v3895 = vadd.f32 %v3839, %v3894
  %3896 = vmatmul.f32.gmra.mxu0 %v3747
  %v3897 = vpop.f32.mrf.mxu0
  %v3898 = vadd.f32 %v3842, %v3897
  %3899 = vmatmul.f32.gmra.mxu0 %v3750
  %v3900 = vpop.f32.mrf.mxu0
  %v3901 = vadd.f32 %v3845, %v3900
  %3902 = vmatmul.f32.gmra.mxu0 %v3753
  %v3903 = vpop.f32.mrf.mxu0
  %v3904 = vadd.f32 %v3848, %v3903
  %3905 = vdwg.mxu0
  %3906 = vmatpush.msra.mxu0 0.0
  %3907 = vmatpush.msra.mxu0 0.0
  %3908 = vmatpush.msra.mxu0 0.0
  %3909 = vmatpush.msra.mxu0 0.0
  %3910 = vmatpush.msra.mxu0 0.0
  %3911 = vmatpush.msra.mxu0 %v938
  %3912 = vmatpush.msra.mxu0 %v855
  %3913 = vmatpush.msra.mxu0 %v854
  %3914 = vmatpush.msra.mxu0 %v853
  %3915 = vmatpush.msra.mxu0 %v852
  %3916 = vmatpush.msra.mxu0 %v851
  %3917 = vmatpush.msra.mxu0 %v850
  %3918 = vmatpush.msra.mxu0 %v849
  %3919 = vmatpush.msra.mxu0 %v848
  %3920 = vmatpush.msra.mxu0 %v847
  %3921 = vmatpush.msra.mxu0 %v846
  %3922 = vmatmul.f32.gmra.mxu0 %v3756
  %v3923 = vpop.f32.mrf.mxu0
  %v3924 = vadd.f32 %v3868, %v3923
  %3925 = vmatmul.f32.gmra.mxu0 %v3759
  %v3926 = vpop.f32.mrf.mxu0
  %v3927 = vadd.f32 %v3871, %v3926
  %3928 = vmatmul.f32.gmra.mxu0 %v3762
  %v3929 = vpop.f32.mrf.mxu0
  %v3930 = vadd.f32 %v3874, %v3929
  %3931 = vmatmul.f32.gmra.mxu0 %v3765
  %v3932 = vpop.f32.mrf.mxu0
  %v3933 = vadd.f32 %v3877, %v3932
  %3934 = vmatmul.f32.gmra.mxu0 %v3768
  %v3935 = vpop.f32.mrf.mxu0
  %v3936 = vadd.f32 %v3880, %v3935
  %3937 = vmatmul.f32.gmra.mxu0 %v3771
  %v3938 = vpop.f32.mrf.mxu0
  %v3939 = vadd.f32 %v3883, %v3938
  %3940 = vmatmul.f32.gmra.mxu0 %v3774
  %v3941 = vpop.f32.mrf.mxu0
  %v3942 = vadd.f32 %v3886, %v3941
  %3943 = vmatmul.f32.gmra.mxu0 %v3777
  %v3944 = vpop.f32.mrf.mxu0
  %v3945 = vadd.f32 %v3889, %v3944
  %3946 = vmatmul.f32.gmra.mxu0 %v3780
  %v3947 = vpop.f32.mrf.mxu0
  %v3948 = vadd.f32 %v3892, %v3947
  %3949 = vmatmul.f32.gmra.mxu0 %v3783
  %v3950 = vpop.f32.mrf.mxu0
  %v3951 = vadd.f32 %v3895, %v3950
  %3952 = vmatmul.f32.gmra.mxu0 %v3786
  %v3953 = vpop.f32.mrf.mxu0
  %v3954 = vadd.f32 %v3898, %v3953
  %3955 = vmatmul.f32.gmra.mxu0 %v3789
  %v3956 = vpop.f32.mrf.mxu0
  %v3957 = vadd.f32 %v3901, %v3956
  %3958 = vmatmul.f32.gmra.mxu0 %v3792
  %v3959 = vpop.f32.mrf.mxu0
  %v3960 = vadd.f32 %v3904, %v3959
  %3961 = vdwg.mxu0
  %s3962 = scalar_lea.vmem %s5, 32
  %v3963 = vld [vmem:[%s3962] sm:$0xf]
  %v3965 = vsel %vm389, %v3924, 0
  %v3968 = vsel %vm389, %v3927, 0
  %v3971 = vsel %vm389, %v3930, 0
  %v3974 = vsel %vm389, %v3933, 0
  %v3977 = vsel %vm389, %v3936, 0
  %v3980 = vsel %vm389, %v3939, 0
  %v3983 = vsel %vm389, %v3942, 0
  %v3986 = vsel %vm389, %v3945, 0
  %v3989 = vsel %vm389, %v3948, 0
  %v3992 = vsel %vm389, %v3951, 0
  %v3995 = vsel %vm389, %v3954, 0
  %v3998 = vsel %vm389, %v3957, 0
  %v4001 = vsel %vm389, %v3960, 0
  %v4004 = vsel %vm1397, %v3963, 0
  %4006 = vmatpush.msra.mxu0 0.0
  %4007 = vmatpush.msra.mxu0 0.0
  %4008 = vmatpush.msra.mxu0 0.0
  %4009 = vmatpush.msra.mxu0 0.0
  %4010 = vmatpush.msra.mxu0 0.0
  %4011 = vmatpush.msra.mxu0 0.0
  %4012 = vmatpush.msra.mxu0 0.0
  %4013 = vmatpush.msra.mxu0 0.0
  %4014 = vmatpush.msra.mxu0 0.0
  %4015 = vmatpush.msra.mxu0 0.0
  %4016 = vmatpush.msra.mxu0 0.0
  %4017 = vmatpush.msra.mxu0 0.0
  %4018 = vmatpush.msra.mxu0 0.0
  %4019 = vmatpush.msra.mxu0 0.0
  %4020 = vmatpush.msra.mxu0 0.0
  %4021 = vmatpush.msra.mxu0 %v4004
  %4022 = vmatmul.f32.gmra.mxu0 %v3965
  %v4023 = vpop.f32.mrf.mxu0
  %v4024 = vadd.f32 0.0, %v4023
  %4025 = vmatmul.f32.gmra.mxu0 %v3968
  %v4026 = vpop.f32.mrf.mxu0
  %v4027 = vadd.f32 0.0, %v4026
  %4028 = vmatmul.f32.gmra.mxu0 %v3971
  %v4029 = vpop.f32.mrf.mxu0
  %v4030 = vadd.f32 0.0, %v4029
  %4031 = vmatmul.f32.gmra.mxu0 %v3974
  %v4032 = vpop.f32.mrf.mxu0
  %v4033 = vadd.f32 0.0, %v4032
  %4034 = vmatmul.f32.gmra.mxu0 %v3977
  %v4035 = vpop.f32.mrf.mxu0
  %v4036 = vadd.f32 0.0, %v4035
  %4037 = vmatmul.f32.gmra.mxu0 %v3980
  %v4038 = vpop.f32.mrf.mxu0
  %v4039 = vadd.f32 0.0, %v4038
  %4040 = vmatmul.f32.gmra.mxu0 %v3983
  %v4041 = vpop.f32.mrf.mxu0
  %v4042 = vadd.f32 0.0, %v4041
  %4043 = vmatmul.f32.gmra.mxu0 %v3986
  %v4044 = vpop.f32.mrf.mxu0
  %v4045 = vadd.f32 0.0, %v4044
  %4046 = vmatmul.f32.gmra.mxu0 %v3989
  %v4047 = vpop.f32.mrf.mxu0
  %v4048 = vadd.f32 0.0, %v4047
  %4049 = vmatmul.f32.gmra.mxu0 %v3992
  %v4050 = vpop.f32.mrf.mxu0
  %v4051 = vadd.f32 0.0, %v4050
  %4052 = vmatmul.f32.gmra.mxu0 %v3995
  %v4053 = vpop.f32.mrf.mxu0
  %v4054 = vadd.f32 0.0, %v4053
  %4055 = vmatmul.f32.gmra.mxu0 %v3998
  %v4056 = vpop.f32.mrf.mxu0
  %v4057 = vadd.f32 0.0, %v4056
  %4058 = vmatmul.f32.gmra.mxu0 %v4001
  %v4059 = vpop.f32.mrf.mxu0
  %v4060 = vadd.f32 0.0, %v4059
  %4061 = vdwg.mxu0
  %v4062 = vadd.f32 %v3702, %v4024
  %v4063 = vadd.f32 %v3703, %v4027
  %v4064 = vadd.f32 %v3704, %v4030
  %v4065 = vadd.f32 %v3705, %v4033
  %v4066 = vadd.f32 %v3706, %v4036
  %v4067 = vadd.f32 %v3707, %v4039
  %v4068 = vadd.f32 %v3708, %v4042
  %v4069 = vadd.f32 %v3709, %v4045
  %v4070 = vadd.f32 %v3710, %v4048
  %v4071 = vadd.f32 %v3711, %v4051
  %v4072 = vadd.f32 %v3712, %v4054
  %v4073 = vadd.f32 %v3713, %v4057
  %v4074 = vadd.f32 %v3714, %v4060
  %v4075 = vld [vmem:[%s6] sm:$0x1]
  %v4076 = vld [vmem:[%s7] sm:$0x1]
  %vm4077 = vcmask 64512
  %v4078 = vsel %vm4077, %v4062, 0.0
  %v4079 = vsel %vm4077, %v4063, 0.0
  %v4080 = vadd.f32 %v4078, %v4079
  %v4081 = vsel %vm4077, %v4064, 0.0
  %v4082 = vadd.f32 %v4080, %v4081
  %v4083 = vsel %vm4077, %v4065, 0.0
  %v4084 = vadd.f32 %v4082, %v4083
  %v4085 = vsel %vm4077, %v4066, 0.0
  %v4086 = vadd.f32 %v4084, %v4085
  %v4087 = vsel %vm4077, %v4067, 0.0
  %v4088 = vadd.f32 %v4086, %v4087
  %v4089 = vsel %vm4077, %v4068, 0.0
  %v4090 = vadd.f32 %v4088, %v4089
  %v4091 = vsel %vm4077, %v4069, 0.0
  %v4092 = vadd.f32 %v4090, %v4091
  %v4093 = vsel %vm4077, %v4070, 0.0
  %v4094 = vadd.f32 %v4092, %v4093
  %v4095 = vsel %vm4077, %v4071, 0.0
  %v4096 = vadd.f32 %v4094, %v4095
  %v4097 = vsel %vm4077, %v4072, 0.0
  %v4098 = vadd.f32 %v4096, %v4097
  %v4099 = vsel %vm4077, %v4073, 0.0
  %v4100 = vadd.f32 %v4098, %v4099
  %vm4101 = vcmask 58368
  %v4102 = vsel %vm4101, %v4074, 0.0
  %v4103 = vadd.f32 %v4100, %v4102
  %v4104 = vrot.slane %v4103, 4
  %v4105 = vadd.f32 %v4103, %v4104
  %v4106 = vrot.slane %v4105, 2
  %v4107 = vadd.f32 %v4105, %v4106
  %v4108 = vrot.slane %v4107, 1
  %v4109 = vadd.f32 %v4107, %v4108
  %v4110 = vrcp.pop 98.0
  %v4111 = vmul.f32 98.0, %v4110
  %v4112 = vsub.f32 1.0, %v4111
  %v4113 = vmul.f32 %v4110, %v4112
  %v4114 = vadd.f32 %v4110, %v4113
  %vm4115 = vweird.f32 %v4110
  %v4116 = vsel %vm4115, %v4110, %v4114
  %v4117 = vmul.f32 %v4109, %v4116
  %v4118 = vsub.f32 %v4062, %v4117
  %v4119 = vsub.f32 %v4063, %v4117
  %v4120 = vsub.f32 %v4064, %v4117
  %v4121 = vsub.f32 %v4065, %v4117
  %v4122 = vsub.f32 %v4066, %v4117
  %v4123 = vsub.f32 %v4067, %v4117
  %v4124 = vsub.f32 %v4068, %v4117
  %v4125 = vsub.f32 %v4069, %v4117
  %v4126 = vsub.f32 %v4070, %v4117
  %v4127 = vsub.f32 %v4071, %v4117
  %v4128 = vsub.f32 %v4072, %v4117
  %v4129 = vsub.f32 %v4073, %v4117
  %v4130 = vsub.f32 %v4074, %v4117
  %v4131 = vmul.f32 %v4118, %v4118
  %v4132 = vmul.f32 %v4119, %v4119
  %v4133 = vmul.f32 %v4120, %v4120
  %v4134 = vmul.f32 %v4121, %v4121
  %v4135 = vmul.f32 %v4122, %v4122
  %v4136 = vmul.f32 %v4123, %v4123
  %v4137 = vmul.f32 %v4124, %v4124
  %v4138 = vmul.f32 %v4125, %v4125
  %v4139 = vmul.f32 %v4126, %v4126
  %v4140 = vmul.f32 %v4127, %v4127
  %v4141 = vmul.f32 %v4128, %v4128
  %v4142 = vmul.f32 %v4129, %v4129
  %v4143 = vmul.f32 %v4130, %v4130
  %v4144 = vsel %vm4077, %v4131, 0.0
  %v4145 = vsel %vm4077, %v4132, 0.0
  %v4146 = vadd.f32 %v4144, %v4145
  %v4147 = vsel %vm4077, %v4133, 0.0
  %v4148 = vadd.f32 %v4146, %v4147
  %v4149 = vsel %vm4077, %v4134, 0.0
  %v4150 = vadd.f32 %v4148, %v4149
  %v4151 = vsel %vm4077, %v4135, 0.0
  %v4152 = vadd.f32 %v4150, %v4151
  %v4153 = vsel %vm4077, %v4136, 0.0
  %v4154 = vadd.f32 %v4152, %v4153
  %v4155 = vsel %vm4077, %v4137, 0.0
  %v4156 = vadd.f32 %v4154, %v4155
  %v4157 = vsel %vm4077, %v4138, 0.0
  %v4158 = vadd.f32 %v4156, %v4157
  %v4159 = vsel %vm4077, %v4139, 0.0
  %v4160 = vadd.f32 %v4158, %v4159
  %v4161 = vsel %vm4077, %v4140, 0.0
  %v4162 = vadd.f32 %v4160, %v4161
  %v4163 = vsel %vm4077, %v4141, 0.0
  %v4164 = vadd.f32 %v4162, %v4163
  %v4165 = vsel %vm4077, %v4142, 0.0
  %v4166 = vadd.f32 %v4164, %v4165
  %v4167 = vsel %vm4101, %v4143, 0.0
  %v4168 = vadd.f32 %v4166, %v4167
  %v4169 = vrot.slane %v4168, 4
  %v4170 = vadd.f32 %v4168, %v4169
  %v4171 = vrot.slane %v4170, 2
  %v4172 = vadd.f32 %v4170, %v4171
  %v4173 = vrot.slane %v4172, 1
  %v4174 = vadd.f32 %v4172, %v4173
  %v4175 = vmul.f32 %v4174, %v4116
  %v4176 = vadd.f32 %v4175, 1e-05
  %v4177 = vrsqrt.pop %v4176
  %v4178 = vmul.f32 %v4177, %v4176
  %v4179 = vmul.f32 %v4178, %v4177
  %v4180 = vmul.f32 0.5, %v4179
  %v4181 = vsub.f32 1.5, %v4180
  %v4182 = vmul.f32 %v4177, %v4181
  %vm4183 = vweird.f32 %v4176
  %vm4184 = vweird.f32 %v4177
  %vm4185 = vmor %vm4183, %vm4184
  %v4186 = vsel %vm4185, %v4177, %v4182
  %v4187 = vmul.f32 %v4118, %v4186
  %v4188 = vmul.f32 %v4119, %v4186
  %v4189 = vmul.f32 %v4120, %v4186
  %v4190 = vmul.f32 %v4121, %v4186
  %v4191 = vmul.f32 %v4122, %v4186
  %v4192 = vmul.f32 %v4123, %v4186
  %v4193 = vmul.f32 %v4124, %v4186
  %v4194 = vmul.f32 %v4125, %v4186
  %v4195 = vmul.f32 %v4126, %v4186
  %v4196 = vmul.f32 %v4127, %v4186
  %v4197 = vmul.f32 %v4128, %v4186
  %v4198 = vmul.f32 %v4129, %v4186
  %v4199 = vmul.f32 %v4130, %v4186
  %v4201 = vperm.slane %v4075, 0
  %v4203 = vmul.f32 %v4187, %v4201
  %v4204 = vmul.f32 %v4188, %v4201
  %v4205 = vmul.f32 %v4189, %v4201
  %v4206 = vmul.f32 %v4190, %v4201
  %v4207 = vmul.f32 %v4191, %v4201
  %v4208 = vmul.f32 %v4192, %v4201
  %v4209 = vmul.f32 %v4193, %v4201
  %v4210 = vmul.f32 %v4194, %v4201
  %v4211 = vmul.f32 %v4195, %v4201
  %v4212 = vmul.f32 %v4196, %v4201
  %v4213 = vmul.f32 %v4197, %v4201
  %v4214 = vmul.f32 %v4198, %v4201
  %v4215 = vmul.f32 %v4199, %v4201
  %v4217 = vperm.slane %v4076, 0
  %v4219 = vadd.f32 %v4203, %v4217
  %v4220 = vadd.f32 %v4204, %v4217
  %v4221 = vadd.f32 %v4205, %v4217
  %v4222 = vadd.f32 %v4206, %v4217
  %v4223 = vadd.f32 %v4207, %v4217
  %v4224 = vadd.f32 %v4208, %v4217
  %v4225 = vadd.f32 %v4209, %v4217
  %v4226 = vadd.f32 %v4210, %v4217
  %v4227 = vadd.f32 %v4211, %v4217
  %v4228 = vadd.f32 %v4212, %v4217
  %v4229 = vadd.f32 %v4213, %v4217
  %v4230 = vadd.f32 %v4214, %v4217
  %v4231 = vadd.f32 %v4215, %v4217
  %v4232 = vmax.f32 %v4219, 0.0
  %v4233 = vmax.f32 %v4220, 0.0
  %v4234 = vmax.f32 %v4221, 0.0
  %v4235 = vmax.f32 %v4222, 0.0
  %v4236 = vmax.f32 %v4223, 0.0
  %v4237 = vmax.f32 %v4224, 0.0
  %v4238 = vmax.f32 %v4225, 0.0
  %v4239 = vmax.f32 %v4226, 0.0
  %v4240 = vmax.f32 %v4227, 0.0
  %v4241 = vmax.f32 %v4228, 0.0
  %v4242 = vmax.f32 %v4229, 0.0
  %v4243 = vmax.f32 %v4230, 0.0
  %v4244 = vmax.f32 %v4231, 0.0
  %v4245 = vld [vmem:[%s8] sm:$0xff]
  %v4246 = vld [vmem:[%s8 + $0x8] sm:$0xff]
  %v4247 = vld [vmem:[%s8 + $0x10] sm:$0xff]
  %v4248 = vld [vmem:[%s8 + $0x18] sm:$0xff]
  %vm4249 = vcmask 801792
  %v4251 = vsel %vm4249, %v4245, 0
  %v4254 = vsel %vm4249, %v4246, 0
  %v4257 = vsel %vm4249, %v4247, 0
  %v4260 = vsel %vm4249, %v4248, 0
  %v4263 = vsel %vm936, %v4244, 0
  %4265 = vmatpush.msra.mxu0 0.0
  %4266 = vmatpush.msra.mxu0 0.0
  %4267 = vmatpush.msra.mxu0 0.0
  %4268 = vmatpush.msra.mxu0 %v4263
  %4269 = vmatpush.msra.mxu0 %v4243
  %4270 = vmatpush.msra.mxu0 %v4242
  %4271 = vmatpush.msra.mxu0 %v4241
  %4272 = vmatpush.msra.mxu0 %v4240
  %4273 = vmatpush.msra.mxu0 %v4239
  %4274 = vmatpush.msra.mxu0 %v4238
  %4275 = vmatpush.msra.mxu0 %v4237
  %4276 = vmatpush.msra.mxu0 %v4236
  %4277 = vmatpush.msra.mxu0 %v4235
  %4278 = vmatpush.msra.mxu0 %v4234
  %4279 = vmatpush.msra.mxu0 %v4233
  %4280 = vmatpush.msra.mxu0 %v4232
  %4281 = vmatmul.f32.gmra.mxu0 %v4251
  %v4282 = vpop.f32.mrf.mxu0
  %v4283 = vadd.f32 0.0, %v4282
  %4284 = vmatmul.f32.gmra.mxu0 %v4254
  %v4285 = vpop.f32.mrf.mxu0
  %v4286 = vadd.f32 0.0, %v4285
  %4287 = vmatmul.f32.gmra.mxu0 %v4257
  %v4288 = vpop.f32.mrf.mxu0
  %v4289 = vadd.f32 0.0, %v4288
  %4290 = vmatmul.f32.gmra.mxu0 %v4260
  %v4291 = vpop.f32.mrf.mxu0
  %v4292 = vadd.f32 0.0, %v4291
  %4293 = vdwg.mxu0
  %v4294 = vld [vmem:[%s9] sm:$0xff]
  %s4295 = scalar_lea.vmem %s8, 32
  %v4296 = vld [vmem:[%s4295] sm:$0xff]
  %v4297 = vld [vmem:[%s4295 + $0x8] sm:$0xff]
  %v4298 = vld [vmem:[%s4295 + $0x10] sm:$0xff]
  %v4299 = vld [vmem:[%s4295 + $0x18] sm:$0xff]
  %v4301 = vsel %vm4249, %v4296, 0
  %v4304 = vsel %vm4249, %v4297, 0
  %v4307 = vsel %vm4249, %v4298, 0
  %v4310 = vsel %vm4249, %v4299, 0
  %4312 = vmatpush.msra.mxu0 0.0
  %4313 = vmatpush.msra.mxu0 0.0
  %4314 = vmatpush.msra.mxu0 0.0
  %4315 = vmatpush.msra.mxu0 %v4263
  %4316 = vmatpush.msra.mxu0 %v4243
  %4317 = vmatpush.msra.mxu0 %v4242
  %4318 = vmatpush.msra.mxu0 %v4241
  %4319 = vmatpush.msra.mxu0 %v4240
  %4320 = vmatpush.msra.mxu0 %v4239
  %4321 = vmatpush.msra.mxu0 %v4238
  %4322 = vmatpush.msra.mxu0 %v4237
  %4323 = vmatpush.msra.mxu0 %v4236
  %4324 = vmatpush.msra.mxu0 %v4235
  %4325 = vmatpush.msra.mxu0 %v4234
  %4326 = vmatpush.msra.mxu0 %v4233
  %4327 = vmatpush.msra.mxu0 %v4232
  %4328 = vmatmul.f32.gmra.mxu0 %v4301
  %v4329 = vpop.f32.mrf.mxu0
  %v4330 = vadd.f32 0.0, %v4329
  %4331 = vmatmul.f32.gmra.mxu0 %v4304
  %v4332 = vpop.f32.mrf.mxu0
  %v4333 = vadd.f32 0.0, %v4332
  %4334 = vmatmul.f32.gmra.mxu0 %v4307
  %v4335 = vpop.f32.mrf.mxu0
  %v4336 = vadd.f32 0.0, %v4335
  %4337 = vmatmul.f32.gmra.mxu0 %v4310
  %v4338 = vpop.f32.mrf.mxu0
  %v4339 = vadd.f32 0.0, %v4338
  %4340 = vdwg.mxu0
  %s4341 = scalar_lea.vmem %s9, 8
  %v4342 = vld [vmem:[%s4341] sm:$0xff]
  %v4344 = vsel %vm4077, %v4330, 0
  %v4347 = vsel %vm4077, %v4333, 0
  %v4350 = vsel %vm4077, %v4336, 0
  %v4353 = vsel %vm4077, %v4339, 0
  %4355 = vmatpush.msra.mxu0 0.0
  %4356 = vmatpush.msra.mxu0 0.0
  %4357 = vmatpush.msra.mxu0 0.0
  %4358 = vmatpush.msra.mxu0 0.0
  %4359 = vmatpush.msra.mxu0 0.0
  %4360 = vmatpush.msra.mxu0 0.0
  %4361 = vmatpush.msra.mxu0 0.0
  %4362 = vmatpush.msra.mxu0 0.0
  %4363 = vmatpush.msra.mxu0 0.0
  %4364 = vmatpush.msra.mxu0 0.0
  %4365 = vmatpush.msra.mxu0 0.0
  %4366 = vmatpush.msra.mxu0 0.0
  %4367 = vmatpush.msra.mxu0 0.0
  %4368 = vmatpush.msra.mxu0 0.0
  %4369 = vmatpush.msra.mxu0 0.0
  %4370 = vmatpush.msra.mxu0 %v4342
  %4371 = vmatmul.f32.gmra.mxu0 %v4344
  %v4372 = vpop.f32.mrf.mxu0
  %v4373 = vadd.f32 0.0, %v4372
  %4374 = vmatmul.f32.gmra.mxu0 %v4347
  %v4375 = vpop.f32.mrf.mxu0
  %v4376 = vadd.f32 0.0, %v4375
  %4377 = vmatmul.f32.gmra.mxu0 %v4350
  %v4378 = vpop.f32.mrf.mxu0
  %v4379 = vadd.f32 0.0, %v4378
  %4380 = vmatmul.f32.gmra.mxu0 %v4353
  %v4381 = vpop.f32.mrf.mxu0
  %v4382 = vadd.f32 0.0, %v4381
  %4383 = vdwg.mxu0
  %v4385 = vsel %vm4077, %v4283, 0
  %v4388 = vsel %vm4077, %v4286, 0
  %v4391 = vsel %vm4077, %v4289, 0
  %v4394 = vsel %vm4077, %v4292, 0
  %4396 = vmatpush.msra.mxu0 0.0
  %4397 = vmatpush.msra.mxu0 0.0
  %4398 = vmatpush.msra.mxu0 0.0
  %4399 = vmatpush.msra.mxu0 0.0
  %4400 = vmatpush.msra.mxu0 0.0
  %4401 = vmatpush.msra.mxu0 0.0
  %4402 = vmatpush.msra.mxu0 0.0
  %4403 = vmatpush.msra.mxu0 0.0
  %4404 = vmatpush.msra.mxu0 0.0
  %4405 = vmatpush.msra.mxu0 0.0
  %4406 = vmatpush.msra.mxu0 0.0
  %4407 = vmatpush.msra.mxu0 0.0
  %4408 = vmatpush.msra.mxu0 0.0
  %4409 = vmatpush.msra.mxu0 0.0
  %4410 = vmatpush.msra.mxu0 0.0
  %4411 = vmatpush.msra.mxu0 %v4294
  %4412 = vmatmul.f32.gmra.mxu0 %v4385
  %v4413 = vpop.f32.mrf.mxu0
  %v4414 = vadd.f32 %v4373, %v4413
  %4415 = vmatmul.f32.gmra.mxu0 %v4388
  %v4416 = vpop.f32.mrf.mxu0
  %v4417 = vadd.f32 %v4376, %v4416
  %4418 = vmatmul.f32.gmra.mxu0 %v4391
  %v4419 = vpop.f32.mrf.mxu0
  %v4420 = vadd.f32 %v4379, %v4419
  %4421 = vmatmul.f32.gmra.mxu0 %v4394
  %v4422 = vpop.f32.mrf.mxu0
  %v4423 = vadd.f32 %v4382, %v4422
  %4424 = vdwg.mxu0
  %s4425 = scalar_lea.vmem %s8, 64
  %v4426 = vld [vmem:[%s4425] sm:$0xff]
  %v4427 = vld [vmem:[%s4425 + $0x8] sm:$0xff]
  %v4428 = vld [vmem:[%s4425 + $0x10] sm:$0xff]
  %v4429 = vld [vmem:[%s4425 + $0x18] sm:$0xff]
  %v4431 = vsel %vm4249, %v4426, 0
  %v4434 = vsel %vm4249, %v4427, 0
  %v4437 = vsel %vm4249, %v4428, 0
  %v4440 = vsel %vm4249, %v4429, 0
  %4442 = vmatpush.msra.mxu0 0.0
  %4443 = vmatpush.msra.mxu0 0.0
  %4444 = vmatpush.msra.mxu0 0.0
  %4445 = vmatpush.msra.mxu0 %v4263
  %4446 = vmatpush.msra.mxu0 %v4243
  %4447 = vmatpush.msra.mxu0 %v4242
  %4448 = vmatpush.msra.mxu0 %v4241
  %4449 = vmatpush.msra.mxu0 %v4240
  %4450 = vmatpush.msra.mxu0 %v4239
  %4451 = vmatpush.msra.mxu0 %v4238
  %4452 = vmatpush.msra.mxu0 %v4237
  %4453 = vmatpush.msra.mxu0 %v4236
  %4454 = vmatpush.msra.mxu0 %v4235
  %4455 = vmatpush.msra.mxu0 %v4234
  %4456 = vmatpush.msra.mxu0 %v4233
  %4457 = vmatpush.msra.mxu0 %v4232
  %4458 = vmatmul.f32.gmra.mxu0 %v4431
  %v4459 = vpop.f32.mrf.mxu0
  %v4460 = vadd.f32 0.0, %v4459
  %4461 = vmatmul.f32.gmra.mxu0 %v4434
  %v4462 = vpop.f32.mrf.mxu0
  %v4463 = vadd.f32 0.0, %v4462
  %4464 = vmatmul.f32.gmra.mxu0 %v4437
  %v4465 = vpop.f32.mrf.mxu0
  %v4466 = vadd.f32 0.0, %v4465
  %4467 = vmatmul.f32.gmra.mxu0 %v4440
  %v4468 = vpop.f32.mrf.mxu0
  %v4469 = vadd.f32 0.0, %v4468
  %4470 = vdwg.mxu0
  %s4471 = scalar_lea.vmem %s9, 16
  %v4472 = vld [vmem:[%s4471] sm:$0xff]
  %v4474 = vsel %vm4077, %v4460, 0
  %v4477 = vsel %vm4077, %v4463, 0
  %v4480 = vsel %vm4077, %v4466, 0
  %v4483 = vsel %vm4077, %v4469, 0
  %4485 = vmatpush.msra.mxu0 0.0
  %4486 = vmatpush.msra.mxu0 0.0
  %4487 = vmatpush.msra.mxu0 0.0
  %4488 = vmatpush.msra.mxu0 0.0
  %4489 = vmatpush.msra.mxu0 0.0
  %4490 = vmatpush.msra.mxu0 0.0
  %4491 = vmatpush.msra.mxu0 0.0
  %4492 = vmatpush.msra.mxu0 0.0
  %4493 = vmatpush.msra.mxu0 0.0
  %4494 = vmatpush.msra.mxu0 0.0
  %4495 = vmatpush.msra.mxu0 0.0
  %4496 = vmatpush.msra.mxu0 0.0
  %4497 = vmatpush.msra.mxu0 0.0
  %4498 = vmatpush.msra.mxu0 0.0
  %4499 = vmatpush.msra.mxu0 0.0
  %4500 = vmatpush.msra.mxu0 %v4472
  %4501 = vmatmul.f32.gmra.mxu0 %v4474
  %v4502 = vpop.f32.mrf.mxu0
  %v4503 = vadd.f32 0.0, %v4502
  %4504 = vmatmul.f32.gmra.mxu0 %v4477
  %v4505 = vpop.f32.mrf.mxu0
  %v4506 = vadd.f32 0.0, %v4505
  %4507 = vmatmul.f32.gmra.mxu0 %v4480
  %v4508 = vpop.f32.mrf.mxu0
  %v4509 = vadd.f32 0.0, %v4508
  %4510 = vmatmul.f32.gmra.mxu0 %v4483
  %v4511 = vpop.f32.mrf.mxu0
  %v4512 = vadd.f32 0.0, %v4511
  %4513 = vdwg.mxu0
  %v4514 = vadd.f32 %v4414, %v4503
  %v4515 = vadd.f32 %v4417, %v4506
  %v4516 = vadd.f32 %v4420, %v4509
  %v4517 = vadd.f32 %v4423, %v4512
  %s4518 = scalar_lea.vmem %s8, 96
  %v4519 = vld [vmem:[%s4518] sm:$0xff]
  %v4520 = vld [vmem:[%s4518 + $0x8] sm:$0xff]
  %v4521 = vld [vmem:[%s4518 + $0x10] sm:$0xff]
  %v4522 = vld [vmem:[%s4518 + $0x18] sm:$0xff]
  %v4524 = vsel %vm4249, %v4519, 0
  %v4527 = vsel %vm4249, %v4520, 0
  %v4530 = vsel %vm4249, %v4521, 0
  %v4533 = vsel %vm4249, %v4522, 0
  %4535 = vmatpush.msra.mxu0 0.0
  %4536 = vmatpush.msra.mxu0 0.0
  %4537 = vmatpush.msra.mxu0 0.0
  %4538 = vmatpush.msra.mxu0 %v4263
  %4539 = vmatpush.msra.mxu0 %v4243
  %4540 = vmatpush.msra.mxu0 %v4242
  %4541 = vmatpush.msra.mxu0 %v4241
  %4542 = vmatpush.msra.mxu0 %v4240
  %4543 = vmatpush.msra.mxu0 %v4239
  %4544 = vmatpush.msra.mxu0 %v4238
  %4545 = vmatpush.msra.mxu0 %v4237
  %4546 = vmatpush.msra.mxu0 %v4236
  %4547 = vmatpush.msra.mxu0 %v4235
  %4548 = vmatpush.msra.mxu0 %v4234
  %4549 = vmatpush.msra.mxu0 %v4233
  %4550 = vmatpush.msra.mxu0 %v4232
  %4551 = vmatmul.f32.gmra.mxu0 %v4524
  %v4552 = vpop.f32.mrf.mxu0
  %v4553 = vadd.f32 0.0, %v4552
  %4554 = vmatmul.f32.gmra.mxu0 %v4527
  %v4555 = vpop.f32.mrf.mxu0
  %v4556 = vadd.f32 0.0, %v4555
  %4557 = vmatmul.f32.gmra.mxu0 %v4530
  %v4558 = vpop.f32.mrf.mxu0
  %v4559 = vadd.f32 0.0, %v4558
  %4560 = vmatmul.f32.gmra.mxu0 %v4533
  %v4561 = vpop.f32.mrf.mxu0
  %v4562 = vadd.f32 0.0, %v4561
  %4563 = vdwg.mxu0
  %s4564 = scalar_lea.vmem %s9, 24
  %v4565 = vld [vmem:[%s4564] sm:$0xff]
  %v4567 = vsel %vm4077, %v4553, 0
  %v4570 = vsel %vm4077, %v4556, 0
  %v4573 = vsel %vm4077, %v4559, 0
  %v4576 = vsel %vm4077, %v4562, 0
  %4578 = vmatpush.msra.mxu0 0.0
  %4579 = vmatpush.msra.mxu0 0.0
  %4580 = vmatpush.msra.mxu0 0.0
  %4581 = vmatpush.msra.mxu0 0.0
  %4582 = vmatpush.msra.mxu0 0.0
  %4583 = vmatpush.msra.mxu0 0.0
  %4584 = vmatpush.msra.mxu0 0.0
  %4585 = vmatpush.msra.mxu0 0.0
  %4586 = vmatpush.msra.mxu0 0.0
  %4587 = vmatpush.msra.mxu0 0.0
  %4588 = vmatpush.msra.mxu0 0.0
  %4589 = vmatpush.msra.mxu0 0.0
  %4590 = vmatpush.msra.mxu0 0.0
  %4591 = vmatpush.msra.mxu0 0.0
  %4592 = vmatpush.msra.mxu0 0.0
  %4593 = vmatpush.msra.mxu0 %v4565
  %4594 = vmatmul.f32.gmra.mxu0 %v4567
  %v4595 = vpop.f32.mrf.mxu0
  %v4596 = vadd.f32 0.0, %v4595
  %4597 = vmatmul.f32.gmra.mxu0 %v4570
  %v4598 = vpop.f32.mrf.mxu0
  %v4599 = vadd.f32 0.0, %v4598
  %4600 = vmatmul.f32.gmra.mxu0 %v4573
  %v4601 = vpop.f32.mrf.mxu0
  %v4602 = vadd.f32 0.0, %v4601
  %4603 = vmatmul.f32.gmra.mxu0 %v4576
  %v4604 = vpop.f32.mrf.mxu0
  %v4605 = vadd.f32 0.0, %v4604
  %4606 = vdwg.mxu0
  %v4607 = vadd.f32 %v4514, %v4596
  %v4608 = vadd.f32 %v4515, %v4599
  %v4609 = vadd.f32 %v4516, %v4602
  %v4610 = vadd.f32 %v4517, %v4605
  %s4611 = scalar_lea.vmem %s8, 128
  %v4612 = vld [vmem:[%s4611] sm:$0xff]
  %v4613 = vld [vmem:[%s4611 + $0x8] sm:$0xff]
  %v4614 = vld [vmem:[%s4611 + $0x10] sm:$0xff]
  %v4615 = vld [vmem:[%s4611 + $0x18] sm:$0xff]
  %v4617 = vsel %vm4249, %v4612, 0
  %v4620 = vsel %vm4249, %v4613, 0
  %v4623 = vsel %vm4249, %v4614, 0
  %v4626 = vsel %vm4249, %v4615, 0
  %4628 = vmatpush.msra.mxu0 0.0
  %4629 = vmatpush.msra.mxu0 0.0
  %4630 = vmatpush.msra.mxu0 0.0
  %4631 = vmatpush.msra.mxu0 %v4263
  %4632 = vmatpush.msra.mxu0 %v4243
  %4633 = vmatpush.msra.mxu0 %v4242
  %4634 = vmatpush.msra.mxu0 %v4241
  %4635 = vmatpush.msra.mxu0 %v4240
  %4636 = vmatpush.msra.mxu0 %v4239
  %4637 = vmatpush.msra.mxu0 %v4238
  %4638 = vmatpush.msra.mxu0 %v4237
  %4639 = vmatpush.msra.mxu0 %v4236
  %4640 = vmatpush.msra.mxu0 %v4235
  %4641 = vmatpush.msra.mxu0 %v4234
  %4642 = vmatpush.msra.mxu0 %v4233
  %4643 = vmatpush.msra.mxu0 %v4232
  %4644 = vmatmul.f32.gmra.mxu0 %v4617
  %v4645 = vpop.f32.mrf.mxu0
  %v4646 = vadd.f32 0.0, %v4645
  %4647 = vmatmul.f32.gmra.mxu0 %v4620
  %v4648 = vpop.f32.mrf.mxu0
  %v4649 = vadd.f32 0.0, %v4648
  %4650 = vmatmul.f32.gmra.mxu0 %v4623
  %v4651 = vpop.f32.mrf.mxu0
  %v4652 = vadd.f32 0.0, %v4651
  %4653 = vmatmul.f32.gmra.mxu0 %v4626
  %v4654 = vpop.f32.mrf.mxu0
  %v4655 = vadd.f32 0.0, %v4654
  %4656 = vdwg.mxu0
  %s4657 = scalar_lea.vmem %s9, 32
  %v4658 = vld [vmem:[%s4657] sm:$0xff]
  %v4660 = vsel %vm4077, %v4646, 0
  %v4663 = vsel %vm4077, %v4649, 0
  %v4666 = vsel %vm4077, %v4652, 0
  %v4669 = vsel %vm4077, %v4655, 0
  %4671 = vmatpush.msra.mxu0 0.0
  %4672 = vmatpush.msra.mxu0 0.0
  %4673 = vmatpush.msra.mxu0 0.0
  %4674 = vmatpush.msra.mxu0 0.0
  %4675 = vmatpush.msra.mxu0 0.0
  %4676 = vmatpush.msra.mxu0 0.0
  %4677 = vmatpush.msra.mxu0 0.0
  %4678 = vmatpush.msra.mxu0 0.0
  %4679 = vmatpush.msra.mxu0 0.0
  %4680 = vmatpush.msra.mxu0 0.0
  %4681 = vmatpush.msra.mxu0 0.0
  %4682 = vmatpush.msra.mxu0 0.0
  %4683 = vmatpush.msra.mxu0 0.0
  %4684 = vmatpush.msra.mxu0 0.0
  %4685 = vmatpush.msra.mxu0 0.0
  %4686 = vmatpush.msra.mxu0 %v4658
  %4687 = vmatmul.f32.gmra.mxu0 %v4660
  %v4688 = vpop.f32.mrf.mxu0
  %v4689 = vadd.f32 0.0, %v4688
  %4690 = vmatmul.f32.gmra.mxu0 %v4663
  %v4691 = vpop.f32.mrf.mxu0
  %v4692 = vadd.f32 0.0, %v4691
  %4693 = vmatmul.f32.gmra.mxu0 %v4666
  %v4694 = vpop.f32.mrf.mxu0
  %v4695 = vadd.f32 0.0, %v4694
  %4696 = vmatmul.f32.gmra.mxu0 %v4669
  %v4697 = vpop.f32.mrf.mxu0
  %v4698 = vadd.f32 0.0, %v4697
  %4699 = vdwg.mxu0
  %v4700 = vadd.f32 %v4607, %v4689
  %v4701 = vadd.f32 %v4608, %v4692
  %v4702 = vadd.f32 %v4609, %v4695
  %v4703 = vadd.f32 %v4610, %v4698
  %s4704 = scalar_lea.vmem %s8, 160
  %v4705 = vld [vmem:[%s4704] sm:$0xff]
  %v4706 = vld [vmem:[%s4704 + $0x8] sm:$0xff]
  %v4707 = vld [vmem:[%s4704 + $0x10] sm:$0xff]
  %v4708 = vld [vmem:[%s4704 + $0x18] sm:$0xff]
  %v4710 = vsel %vm4249, %v4705, 0
  %v4713 = vsel %vm4249, %v4706, 0
  %v4716 = vsel %vm4249, %v4707, 0
  %v4719 = vsel %vm4249, %v4708, 0
  %4721 = vmatpush.msra.mxu0 0.0
  %4722 = vmatpush.msra.mxu0 0.0
  %4723 = vmatpush.msra.mxu0 0.0
  %4724 = vmatpush.msra.mxu0 %v4263
  %4725 = vmatpush.msra.mxu0 %v4243
  %4726 = vmatpush.msra.mxu0 %v4242
  %4727 = vmatpush.msra.mxu0 %v4241
  %4728 = vmatpush.msra.mxu0 %v4240
  %4729 = vmatpush.msra.mxu0 %v4239
  %4730 = vmatpush.msra.mxu0 %v4238
  %4731 = vmatpush.msra.mxu0 %v4237
  %4732 = vmatpush.msra.mxu0 %v4236
  %4733 = vmatpush.msra.mxu0 %v4235
  %4734 = vmatpush.msra.mxu0 %v4234
  %4735 = vmatpush.msra.mxu0 %v4233
  %4736 = vmatpush.msra.mxu0 %v4232
  %4737 = vmatmul.f32.gmra.mxu0 %v4710
  %v4738 = vpop.f32.mrf.mxu0
  %v4739 = vadd.f32 0.0, %v4738
  %4740 = vmatmul.f32.gmra.mxu0 %v4713
  %v4741 = vpop.f32.mrf.mxu0
  %v4742 = vadd.f32 0.0, %v4741
  %4743 = vmatmul.f32.gmra.mxu0 %v4716
  %v4744 = vpop.f32.mrf.mxu0
  %v4745 = vadd.f32 0.0, %v4744
  %4746 = vmatmul.f32.gmra.mxu0 %v4719
  %v4747 = vpop.f32.mrf.mxu0
  %v4748 = vadd.f32 0.0, %v4747
  %4749 = vdwg.mxu0
  %s4750 = scalar_lea.vmem %s9, 40
  %v4751 = vld [vmem:[%s4750] sm:$0xff]
  %v4753 = vsel %vm4077, %v4739, 0
  %v4756 = vsel %vm4077, %v4742, 0
  %v4759 = vsel %vm4077, %v4745, 0
  %v4762 = vsel %vm4077, %v4748, 0
  %4764 = vmatpush.msra.mxu0 0.0
  %4765 = vmatpush.msra.mxu0 0.0
  %4766 = vmatpush.msra.mxu0 0.0
  %4767 = vmatpush.msra.mxu0 0.0
  %4768 = vmatpush.msra.mxu0 0.0
  %4769 = vmatpush.msra.mxu0 0.0
  %4770 = vmatpush.msra.mxu0 0.0
  %4771 = vmatpush.msra.mxu0 0.0
  %4772 = vmatpush.msra.mxu0 0.0
  %4773 = vmatpush.msra.mxu0 0.0
  %4774 = vmatpush.msra.mxu0 0.0
  %4775 = vmatpush.msra.mxu0 0.0
  %4776 = vmatpush.msra.mxu0 0.0
  %4777 = vmatpush.msra.mxu0 0.0
  %4778 = vmatpush.msra.mxu0 0.0
  %4779 = vmatpush.msra.mxu0 %v4751
  %4780 = vmatmul.f32.gmra.mxu0 %v4753
  %v4781 = vpop.f32.mrf.mxu0
  %v4782 = vadd.f32 0.0, %v4781
  %4783 = vmatmul.f32.gmra.mxu0 %v4756
  %v4784 = vpop.f32.mrf.mxu0
  %v4785 = vadd.f32 0.0, %v4784
  %4786 = vmatmul.f32.gmra.mxu0 %v4759
  %v4787 = vpop.f32.mrf.mxu0
  %v4788 = vadd.f32 0.0, %v4787
  %4789 = vmatmul.f32.gmra.mxu0 %v4762
  %v4790 = vpop.f32.mrf.mxu0
  %v4791 = vadd.f32 0.0, %v4790
  %4792 = vdwg.mxu0
  %v4793 = vadd.f32 %v4700, %v4782
  %v4794 = vadd.f32 %v4701, %v4785
  %v4795 = vadd.f32 %v4702, %v4788
  %v4796 = vadd.f32 %v4703, %v4791
  %s4797 = scalar_lea.vmem %s8, 192
  %v4798 = vld [vmem:[%s4797] sm:$0xff]
  %v4799 = vld [vmem:[%s4797 + $0x8] sm:$0xff]
  %v4800 = vld [vmem:[%s4797 + $0x10] sm:$0xff]
  %v4801 = vld [vmem:[%s4797 + $0x18] sm:$0xff]
  %v4803 = vsel %vm4249, %v4798, 0
  %v4806 = vsel %vm4249, %v4799, 0
  %v4809 = vsel %vm4249, %v4800, 0
  %v4812 = vsel %vm4249, %v4801, 0
  %4814 = vmatpush.msra.mxu0 0.0
  %4815 = vmatpush.msra.mxu0 0.0
  %4816 = vmatpush.msra.mxu0 0.0
  %4817 = vmatpush.msra.mxu0 %v4263
  %4818 = vmatpush.msra.mxu0 %v4243
  %4819 = vmatpush.msra.mxu0 %v4242
  %4820 = vmatpush.msra.mxu0 %v4241
  %4821 = vmatpush.msra.mxu0 %v4240
  %4822 = vmatpush.msra.mxu0 %v4239
  %4823 = vmatpush.msra.mxu0 %v4238
  %4824 = vmatpush.msra.mxu0 %v4237
  %4825 = vmatpush.msra.mxu0 %v4236
  %4826 = vmatpush.msra.mxu0 %v4235
  %4827 = vmatpush.msra.mxu0 %v4234
  %4828 = vmatpush.msra.mxu0 %v4233
  %4829 = vmatpush.msra.mxu0 %v4232
  %4830 = vmatmul.f32.gmra.mxu0 %v4803
  %v4831 = vpop.f32.mrf.mxu0
  %v4832 = vadd.f32 0.0, %v4831
  %4833 = vmatmul.f32.gmra.mxu0 %v4806
  %v4834 = vpop.f32.mrf.mxu0
  %v4835 = vadd.f32 0.0, %v4834
  %4836 = vmatmul.f32.gmra.mxu0 %v4809
  %v4837 = vpop.f32.mrf.mxu0
  %v4838 = vadd.f32 0.0, %v4837
  %4839 = vmatmul.f32.gmra.mxu0 %v4812
  %v4840 = vpop.f32.mrf.mxu0
  %v4841 = vadd.f32 0.0, %v4840
  %4842 = vdwg.mxu0
  %s4843 = scalar_lea.vmem %s9, 48
  %v4844 = vld [vmem:[%s4843] sm:$0xff]
  %v4846 = vsel %vm4077, %v4832, 0
  %v4849 = vsel %vm4077, %v4835, 0
  %v4852 = vsel %vm4077, %v4838, 0
  %v4855 = vsel %vm4077, %v4841, 0
  %4857 = vmatpush.msra.mxu0 0.0
  %4858 = vmatpush.msra.mxu0 0.0
  %4859 = vmatpush.msra.mxu0 0.0
  %4860 = vmatpush.msra.mxu0 0.0
  %4861 = vmatpush.msra.mxu0 0.0
  %4862 = vmatpush.msra.mxu0 0.0
  %4863 = vmatpush.msra.mxu0 0.0
  %4864 = vmatpush.msra.mxu0 0.0
  %4865 = vmatpush.msra.mxu0 0.0
  %4866 = vmatpush.msra.mxu0 0.0
  %4867 = vmatpush.msra.mxu0 0.0
  %4868 = vmatpush.msra.mxu0 0.0
  %4869 = vmatpush.msra.mxu0 0.0
  %4870 = vmatpush.msra.mxu0 0.0
  %4871 = vmatpush.msra.mxu0 0.0
  %4872 = vmatpush.msra.mxu0 %v4844
  %4873 = vmatmul.f32.gmra.mxu0 %v4846
  %v4874 = vpop.f32.mrf.mxu0
  %v4875 = vadd.f32 0.0, %v4874
  %4876 = vmatmul.f32.gmra.mxu0 %v4849
  %v4877 = vpop.f32.mrf.mxu0
  %v4878 = vadd.f32 0.0, %v4877
  %4879 = vmatmul.f32.gmra.mxu0 %v4852
  %v4880 = vpop.f32.mrf.mxu0
  %v4881 = vadd.f32 0.0, %v4880
  %4882 = vmatmul.f32.gmra.mxu0 %v4855
  %v4883 = vpop.f32.mrf.mxu0
  %v4884 = vadd.f32 0.0, %v4883
  %4885 = vdwg.mxu0
  %v4886 = vadd.f32 %v4793, %v4875
  %v4887 = vadd.f32 %v4794, %v4878
  %v4888 = vadd.f32 %v4795, %v4881
  %v4889 = vadd.f32 %v4796, %v4884
  %s4890 = scalar_lea.vmem %s8, 224
  %v4891 = vld [vmem:[%s4890] sm:$0xff]
  %v4892 = vld [vmem:[%s4890 + $0x8] sm:$0xff]
  %v4893 = vld [vmem:[%s4890 + $0x10] sm:$0xff]
  %v4894 = vld [vmem:[%s4890 + $0x18] sm:$0xff]
  %v4896 = vsel %vm4249, %v4891, 0
  %v4899 = vsel %vm4249, %v4892, 0
  %v4902 = vsel %vm4249, %v4893, 0
  %v4905 = vsel %vm4249, %v4894, 0
  %4907 = vmatpush.msra.mxu0 0.0
  %4908 = vmatpush.msra.mxu0 0.0
  %4909 = vmatpush.msra.mxu0 0.0
  %4910 = vmatpush.msra.mxu0 %v4263
  %4911 = vmatpush.msra.mxu0 %v4243
  %4912 = vmatpush.msra.mxu0 %v4242
  %4913 = vmatpush.msra.mxu0 %v4241
  %4914 = vmatpush.msra.mxu0 %v4240
  %4915 = vmatpush.msra.mxu0 %v4239
  %4916 = vmatpush.msra.mxu0 %v4238
  %4917 = vmatpush.msra.mxu0 %v4237
  %4918 = vmatpush.msra.mxu0 %v4236
  %4919 = vmatpush.msra.mxu0 %v4235
  %4920 = vmatpush.msra.mxu0 %v4234
  %4921 = vmatpush.msra.mxu0 %v4233
  %4922 = vmatpush.msra.mxu0 %v4232
  %4923 = vmatmul.f32.gmra.mxu0 %v4896
  %v4924 = vpop.f32.mrf.mxu0
  %v4925 = vadd.f32 0.0, %v4924
  %4926 = vmatmul.f32.gmra.mxu0 %v4899
  %v4927 = vpop.f32.mrf.mxu0
  %v4928 = vadd.f32 0.0, %v4927
  %4929 = vmatmul.f32.gmra.mxu0 %v4902
  %v4930 = vpop.f32.mrf.mxu0
  %v4931 = vadd.f32 0.0, %v4930
  %4932 = vmatmul.f32.gmra.mxu0 %v4905
  %v4933 = vpop.f32.mrf.mxu0
  %v4934 = vadd.f32 0.0, %v4933
  %4935 = vdwg.mxu0
  %s4936 = scalar_lea.vmem %s9, 56
  %v4937 = vld [vmem:[%s4936] sm:$0xff]
  %v4939 = vsel %vm4077, %v4925, 0
  %v4942 = vsel %vm4077, %v4928, 0
  %v4945 = vsel %vm4077, %v4931, 0
  %v4948 = vsel %vm4077, %v4934, 0
  %4950 = vmatpush.msra.mxu0 0.0
  %4951 = vmatpush.msra.mxu0 0.0
  %4952 = vmatpush.msra.mxu0 0.0
  %4953 = vmatpush.msra.mxu0 0.0
  %4954 = vmatpush.msra.mxu0 0.0
  %4955 = vmatpush.msra.mxu0 0.0
  %4956 = vmatpush.msra.mxu0 0.0
  %4957 = vmatpush.msra.mxu0 0.0
  %4958 = vmatpush.msra.mxu0 0.0
  %4959 = vmatpush.msra.mxu0 0.0
  %4960 = vmatpush.msra.mxu0 0.0
  %4961 = vmatpush.msra.mxu0 0.0
  %4962 = vmatpush.msra.mxu0 0.0
  %4963 = vmatpush.msra.mxu0 0.0
  %4964 = vmatpush.msra.mxu0 0.0
  %4965 = vmatpush.msra.mxu0 %v4937
  %4966 = vmatmul.f32.gmra.mxu0 %v4939
  %v4967 = vpop.f32.mrf.mxu0
  %v4968 = vadd.f32 0.0, %v4967
  %4969 = vmatmul.f32.gmra.mxu0 %v4942
  %v4970 = vpop.f32.mrf.mxu0
  %v4971 = vadd.f32 0.0, %v4970
  %4972 = vmatmul.f32.gmra.mxu0 %v4945
  %v4973 = vpop.f32.mrf.mxu0
  %v4974 = vadd.f32 0.0, %v4973
  %4975 = vmatmul.f32.gmra.mxu0 %v4948
  %v4976 = vpop.f32.mrf.mxu0
  %v4977 = vadd.f32 0.0, %v4976
  %4978 = vdwg.mxu0
  %v4979 = vadd.f32 %v4886, %v4968
  %v4980 = vadd.f32 %v4887, %v4971
  %v4981 = vadd.f32 %v4888, %v4974
  %v4982 = vadd.f32 %v4889, %v4977
  %s4983 = scalar_lea.vmem %s8, 256
  %v4984 = vld [vmem:[%s4983] sm:$0xff]
  %v4985 = vld [vmem:[%s4983 + $0x8] sm:$0xff]
  %v4986 = vld [vmem:[%s4983 + $0x10] sm:$0xff]
  %v4987 = vld [vmem:[%s4983 + $0x18] sm:$0xff]
  %v4989 = vsel %vm4249, %v4984, 0
  %v4992 = vsel %vm4249, %v4985, 0
  %v4995 = vsel %vm4249, %v4986, 0
  %v4998 = vsel %vm4249, %v4987, 0
  %5000 = vmatpush.msra.mxu0 0.0
  %5001 = vmatpush.msra.mxu0 0.0
  %5002 = vmatpush.msra.mxu0 0.0
  %5003 = vmatpush.msra.mxu0 %v4263
  %5004 = vmatpush.msra.mxu0 %v4243
  %5005 = vmatpush.msra.mxu0 %v4242
  %5006 = vmatpush.msra.mxu0 %v4241
  %5007 = vmatpush.msra.mxu0 %v4240
  %5008 = vmatpush.msra.mxu0 %v4239
  %5009 = vmatpush.msra.mxu0 %v4238
  %5010 = vmatpush.msra.mxu0 %v4237
  %5011 = vmatpush.msra.mxu0 %v4236
  %5012 = vmatpush.msra.mxu0 %v4235
  %5013 = vmatpush.msra.mxu0 %v4234
  %5014 = vmatpush.msra.mxu0 %v4233
  %5015 = vmatpush.msra.mxu0 %v4232
  %5016 = vmatmul.f32.gmra.mxu0 %v4989
  %v5017 = vpop.f32.mrf.mxu0
  %v5018 = vadd.f32 0.0, %v5017
  %5019 = vmatmul.f32.gmra.mxu0 %v4992
  %v5020 = vpop.f32.mrf.mxu0
  %v5021 = vadd.f32 0.0, %v5020
  %5022 = vmatmul.f32.gmra.mxu0 %v4995
  %v5023 = vpop.f32.mrf.mxu0
  %v5024 = vadd.f32 0.0, %v5023
  %5025 = vmatmul.f32.gmra.mxu0 %v4998
  %v5026 = vpop.f32.mrf.mxu0
  %v5027 = vadd.f32 0.0, %v5026
  %5028 = vdwg.mxu0
  %s5029 = scalar_lea.vmem %s9, 64
  %v5030 = vld [vmem:[%s5029] sm:$0xff]
  %v5032 = vsel %vm4077, %v5018, 0
  %v5035 = vsel %vm4077, %v5021, 0
  %v5038 = vsel %vm4077, %v5024, 0
  %v5041 = vsel %vm4077, %v5027, 0
  %5043 = vmatpush.msra.mxu0 0.0
  %5044 = vmatpush.msra.mxu0 0.0
  %5045 = vmatpush.msra.mxu0 0.0
  %5046 = vmatpush.msra.mxu0 0.0
  %5047 = vmatpush.msra.mxu0 0.0
  %5048 = vmatpush.msra.mxu0 0.0
  %5049 = vmatpush.msra.mxu0 0.0
  %5050 = vmatpush.msra.mxu0 0.0
  %5051 = vmatpush.msra.mxu0 0.0
  %5052 = vmatpush.msra.mxu0 0.0
  %5053 = vmatpush.msra.mxu0 0.0
  %5054 = vmatpush.msra.mxu0 0.0
  %5055 = vmatpush.msra.mxu0 0.0
  %5056 = vmatpush.msra.mxu0 0.0
  %5057 = vmatpush.msra.mxu0 0.0
  %5058 = vmatpush.msra.mxu0 %v5030
  %5059 = vmatmul.f32.gmra.mxu0 %v5032
  %v5060 = vpop.f32.mrf.mxu0
  %v5061 = vadd.f32 0.0, %v5060
  %5062 = vmatmul.f32.gmra.mxu0 %v5035
  %v5063 = vpop.f32.mrf.mxu0
  %v5064 = vadd.f32 0.0, %v5063
  %5065 = vmatmul.f32.gmra.mxu0 %v5038
  %v5066 = vpop.f32.mrf.mxu0
  %v5067 = vadd.f32 0.0, %v5066
  %5068 = vmatmul.f32.gmra.mxu0 %v5041
  %v5069 = vpop.f32.mrf.mxu0
  %v5070 = vadd.f32 0.0, %v5069
  %5071 = vdwg.mxu0
  %v5072 = vadd.f32 %v4979, %v5061
  %v5073 = vadd.f32 %v4980, %v5064
  %v5074 = vadd.f32 %v4981, %v5067
  %v5075 = vadd.f32 %v4982, %v5070
  %v5076 = vld [vmem:[%s10] sm:$0x1]
  %v5077 = vld [vmem:[%s11] sm:$0x1]
  %vm5078 = vcmask 130048
  %v5079 = vsel %vm5078, %v5072, 0.0
  %v5080 = vsel %vm5078, %v5073, 0.0
  %v5081 = vadd.f32 %v5079, %v5080
  %v5082 = vsel %vm5078, %v5074, 0.0
  %v5083 = vadd.f32 %v5081, %v5082
  %v5084 = vsel %vm5078, %v5075, 0.0
  %v5085 = vadd.f32 %v5083, %v5084
  %v5086 = vrot.slane %v5085, 4
  %v5087 = vadd.f32 %v5085, %v5086
  %v5088 = vrot.slane %v5087, 2
  %v5089 = vadd.f32 %v5087, %v5088
  %v5090 = vrot.slane %v5089, 1
  %v5091 = vadd.f32 %v5089, %v5090
  %v5092 = vrcp.pop 32.0
  %v5093 = vmul.f32 32.0, %v5092
  %v5094 = vsub.f32 1.0, %v5093
  %v5095 = vmul.f32 %v5092, %v5094
  %v5096 = vadd.f32 %v5092, %v5095
  %vm5097 = vweird.f32 %v5092
  %v5098 = vsel %vm5097, %v5092, %v5096
  %v5099 = vmul.f32 %v5091, %v5098
  %v5100 = vsub.f32 %v5072, %v5099
  %v5101 = vsub.f32 %v5073, %v5099
  %v5102 = vsub.f32 %v5074, %v5099
  %v5103 = vsub.f32 %v5075, %v5099
  %v5104 = vmul.f32 %v5100, %v5100
  %v5105 = vmul.f32 %v5101, %v5101
  %v5106 = vmul.f32 %v5102, %v5102
  %v5107 = vmul.f32 %v5103, %v5103
  %v5108 = vsel %vm5078, %v5104, 0.0
  %v5109 = vsel %vm5078, %v5105, 0.0
  %v5110 = vadd.f32 %v5108, %v5109
  %v5111 = vsel %vm5078, %v5106, 0.0
  %v5112 = vadd.f32 %v5110, %v5111
  %v5113 = vsel %vm5078, %v5107, 0.0
  %v5114 = vadd.f32 %v5112, %v5113
  %v5115 = vrot.slane %v5114, 4
  %v5116 = vadd.f32 %v5114, %v5115
  %v5117 = vrot.slane %v5116, 2
  %v5118 = vadd.f32 %v5116, %v5117
  %v5119 = vrot.slane %v5118, 1
  %v5120 = vadd.f32 %v5118, %v5119
  %v5121 = vmul.f32 %v5120, %v5098
  %v5122 = vadd.f32 %v5121, 1e-05
  %v5123 = vrsqrt.pop %v5122
  %v5124 = vmul.f32 %v5123, %v5122
  %v5125 = vmul.f32 %v5124, %v5123
  %v5126 = vmul.f32 0.5, %v5125
  %v5127 = vsub.f32 1.5, %v5126
  %v5128 = vmul.f32 %v5123, %v5127
  %vm5129 = vweird.f32 %v5122
  %vm5130 = vweird.f32 %v5123
  %vm5131 = vmor %vm5129, %vm5130
  %v5132 = vsel %vm5131, %v5123, %v5128
  %v5133 = vmul.f32 %v5100, %v5132
  %v5134 = vmul.f32 %v5101, %v5132
  %v5135 = vmul.f32 %v5102, %v5132
  %v5136 = vmul.f32 %v5103, %v5132
  %v5138 = vperm.slane %v5076, 0
  %v5140 = vmul.f32 %v5133, %v5138
  %v5141 = vmul.f32 %v5134, %v5138
  %v5142 = vmul.f32 %v5135, %v5138
  %v5143 = vmul.f32 %v5136, %v5138
  %v5145 = vperm.slane %v5077, 0
  %v5147 = vadd.f32 %v5140, %v5145
  %v5148 = vadd.f32 %v5141, %v5145
  %v5149 = vadd.f32 %v5142, %v5145
  %v5150 = vadd.f32 %v5143, %v5145
  %v5151 = vmax.f32 %v5147, 0.0
  %v5152 = vmax.f32 %v5148, 0.0
  %v5153 = vmax.f32 %v5149, 0.0
  %v5154 = vmax.f32 %v5150, 0.0
  %v5155 = vld [vmem:[%s12] sm:$0xff]
  %v5156 = vld [vmem:[%s12 + $0x8] sm:$0xff]
  %v5157 = vld [vmem:[%s12 + $0x10] sm:$0x3]
  %vm5158 = vcmask 261120
  %v5160 = vsel %vm5158, %v5155, 0
  %v5163 = vsel %vm5158, %v5156, 0
  %v5166 = vsel %vm5158, %v5157, 0
  %5168 = vmatpush.msra.mxu0 0.0
  %5169 = vmatpush.msra.mxu0 0.0
  %5170 = vmatpush.msra.mxu0 0.0
  %5171 = vmatpush.msra.mxu0 0.0
  %5172 = vmatpush.msra.mxu0 0.0
  %5173 = vmatpush.msra.mxu0 0.0
  %5174 = vmatpush.msra.mxu0 0.0
  %5175 = vmatpush.msra.mxu0 0.0
  %5176 = vmatpush.msra.mxu0 0.0
  %5177 = vmatpush.msra.mxu0 0.0
  %5178 = vmatpush.msra.mxu0 0.0
  %5179 = vmatpush.msra.mxu0 0.0
  %5180 = vmatpush.msra.mxu0 %v5154
  %5181 = vmatpush.msra.mxu0 %v5153
  %5182 = vmatpush.msra.mxu0 %v5152
  %5183 = vmatpush.msra.mxu0 %v5151
  %5184 = vmatmul.f32.gmra.mxu0 %v5160
  %v5185 = vpop.f32.mrf.mxu0
  %v5186 = vadd.f32 0.0, %v5185
  %5187 = vmatmul.f32.gmra.mxu0 %v5163
  %v5188 = vpop.f32.mrf.mxu0
  %v5189 = vadd.f32 0.0, %v5188
  %5190 = vmatmul.f32.gmra.mxu0 %v5166
  %v5191 = vpop.f32.mrf.mxu0
  %v5192 = vadd.f32 0.0, %v5191
  %5193 = vdwg.mxu0
  %v5194 = vld [vmem:[%s13] sm:$0xff]
  %v5195 = vld [vmem:[%s13 + $0x8] sm:$0xff]
  %s5196 = scalar_lea.vmem %s12, 24
  %v5197 = vld [vmem:[%s5196] sm:$0xff]
  %v5198 = vld [vmem:[%s5196 + $0x8] sm:$0xff]
  %v5199 = vld [vmem:[%s5196 + $0x10] sm:$0x3]
  %v5201 = vsel %vm5158, %v5197, 0
  %v5204 = vsel %vm5158, %v5198, 0
  %v5207 = vsel %vm5158, %v5199, 0
  %5209 = vmatpush.msra.mxu0 0.0
  %5210 = vmatpush.msra.mxu0 0.0
  %5211 = vmatpush.msra.mxu0 0.0
  %5212 = vmatpush.msra.mxu0 0.0
  %5213 = vmatpush.msra.mxu0 0.0
  %5214 = vmatpush.msra.mxu0 0.0
  %5215 = vmatpush.msra.mxu0 0.0
  %5216 = vmatpush.msra.mxu0 0.0
  %5217 = vmatpush.msra.mxu0 0.0
  %5218 = vmatpush.msra.mxu0 0.0
  %5219 = vmatpush.msra.mxu0 0.0
  %5220 = vmatpush.msra.mxu0 0.0
  %5221 = vmatpush.msra.mxu0 %v5154
  %5222 = vmatpush.msra.mxu0 %v5153
  %5223 = vmatpush.msra.mxu0 %v5152
  %5224 = vmatpush.msra.mxu0 %v5151
  %5225 = vmatmul.f32.gmra.mxu0 %v5201
  %v5226 = vpop.f32.mrf.mxu0
  %v5227 = vadd.f32 0.0, %v5226
  %5228 = vmatmul.f32.gmra.mxu0 %v5204
  %v5229 = vpop.f32.mrf.mxu0
  %v5230 = vadd.f32 0.0, %v5229
  %5231 = vmatmul.f32.gmra.mxu0 %v5207
  %v5232 = vpop.f32.mrf.mxu0
  %v5233 = vadd.f32 0.0, %v5232
  %5234 = vdwg.mxu0
  %s5235 = scalar_lea.vmem %s13, 16
  %v5236 = vld [vmem:[%s5235] sm:$0xff]
  %v5237 = vld [vmem:[%s5235 + $0x8] sm:$0xff]
  %v5239 = vsel %vm5078, %v5227, 0
  %v5242 = vsel %vm5078, %v5230, 0
  %v5245 = vsel %vm5078, %v5233, 0
  %5247 = vmatpush.msra.mxu0 0.0
  %5248 = vmatpush.msra.mxu0 0.0
  %5249 = vmatpush.msra.mxu0 0.0
  %5250 = vmatpush.msra.mxu0 0.0
  %5251 = vmatpush.msra.mxu0 0.0
  %5252 = vmatpush.msra.mxu0 0.0
  %5253 = vmatpush.msra.mxu0 0.0
  %5254 = vmatpush.msra.mxu0 0.0
  %5255 = vmatpush.msra.mxu0 0.0
  %5256 = vmatpush.msra.mxu0 0.0
  %5257 = vmatpush.msra.mxu0 0.0
  %5258 = vmatpush.msra.mxu0 0.0
  %5259 = vmatpush.msra.mxu0 0.0
  %5260 = vmatpush.msra.mxu0 0.0
  %5261 = vmatpush.msra.mxu0 %v5237
  %5262 = vmatpush.msra.mxu0 %v5236
  %5263 = vmatmul.f32.gmra.mxu0 %v5239
  %v5264 = vpop.f32.mrf.mxu0
  %v5265 = vadd.f32 0.0, %v5264
  %5266 = vmatmul.f32.gmra.mxu0 %v5242
  %v5267 = vpop.f32.mrf.mxu0
  %v5268 = vadd.f32 0.0, %v5267
  %5269 = vmatmul.f32.gmra.mxu0 %v5245
  %v5270 = vpop.f32.mrf.mxu0
  %v5271 = vadd.f32 0.0, %v5270
  %5272 = vdwg.mxu0
  %v5274 = vsel %vm5078, %v5186, 0
  %v5277 = vsel %vm5078, %v5189, 0
  %v5280 = vsel %vm5078, %v5192, 0
  %5282 = vmatpush.msra.mxu0 0.0
  %5283 = vmatpush.msra.mxu0 0.0
  %5284 = vmatpush.msra.mxu0 0.0
  %5285 = vmatpush.msra.mxu0 0.0
  %5286 = vmatpush.msra.mxu0 0.0
  %5287 = vmatpush.msra.mxu0 0.0
  %5288 = vmatpush.msra.mxu0 0.0
  %5289 = vmatpush.msra.mxu0 0.0
  %5290 = vmatpush.msra.mxu0 0.0
  %5291 = vmatpush.msra.mxu0 0.0
  %5292 = vmatpush.msra.mxu0 0.0
  %5293 = vmatpush.msra.mxu0 0.0
  %5294 = vmatpush.msra.mxu0 0.0
  %5295 = vmatpush.msra.mxu0 0.0
  %5296 = vmatpush.msra.mxu0 %v5195
  %5297 = vmatpush.msra.mxu0 %v5194
  %5298 = vmatmul.f32.gmra.mxu0 %v5274
  %v5299 = vpop.f32.mrf.mxu0
  %v5300 = vadd.f32 %v5265, %v5299
  %5301 = vmatmul.f32.gmra.mxu0 %v5277
  %v5302 = vpop.f32.mrf.mxu0
  %v5303 = vadd.f32 %v5268, %v5302
  %5304 = vmatmul.f32.gmra.mxu0 %v5280
  %v5305 = vpop.f32.mrf.mxu0
  %v5306 = vadd.f32 %v5271, %v5305
  %5307 = vdwg.mxu0
  %s5308 = scalar_lea.vmem %s12, 48
  %v5309 = vld [vmem:[%s5308] sm:$0xff]
  %v5310 = vld [vmem:[%s5308 + $0x8] sm:$0xff]
  %v5311 = vld [vmem:[%s5308 + $0x10] sm:$0x3]
  %v5313 = vsel %vm5158, %v5309, 0
  %v5316 = vsel %vm5158, %v5310, 0
  %v5319 = vsel %vm5158, %v5311, 0
  %5321 = vmatpush.msra.mxu0 0.0
  %5322 = vmatpush.msra.mxu0 0.0
  %5323 = vmatpush.msra.mxu0 0.0
  %5324 = vmatpush.msra.mxu0 0.0
  %5325 = vmatpush.msra.mxu0 0.0
  %5326 = vmatpush.msra.mxu0 0.0
  %5327 = vmatpush.msra.mxu0 0.0
  %5328 = vmatpush.msra.mxu0 0.0
  %5329 = vmatpush.msra.mxu0 0.0
  %5330 = vmatpush.msra.mxu0 0.0
  %5331 = vmatpush.msra.mxu0 0.0
  %5332 = vmatpush.msra.mxu0 0.0
  %5333 = vmatpush.msra.mxu0 %v5154
  %5334 = vmatpush.msra.mxu0 %v5153
  %5335 = vmatpush.msra.mxu0 %v5152
  %5336 = vmatpush.msra.mxu0 %v5151
  %5337 = vmatmul.f32.gmra.mxu0 %v5313
  %v5338 = vpop.f32.mrf.mxu0
  %v5339 = vadd.f32 0.0, %v5338
  %5340 = vmatmul.f32.gmra.mxu0 %v5316
  %v5341 = vpop.f32.mrf.mxu0
  %v5342 = vadd.f32 0.0, %v5341
  %5343 = vmatmul.f32.gmra.mxu0 %v5319
  %v5344 = vpop.f32.mrf.mxu0
  %v5345 = vadd.f32 0.0, %v5344
  %5346 = vdwg.mxu0
  %s5347 = scalar_lea.vmem %s13, 32
  %v5348 = vld [vmem:[%s5347] sm:$0xff]
  %v5349 = vld [vmem:[%s5347 + $0x8] sm:$0xff]
  %v5351 = vsel %vm5078, %v5339, 0
  %v5354 = vsel %vm5078, %v5342, 0
  %v5357 = vsel %vm5078, %v5345, 0
  %5359 = vmatpush.msra.mxu0 0.0
  %5360 = vmatpush.msra.mxu0 0.0
  %5361 = vmatpush.msra.mxu0 0.0
  %5362 = vmatpush.msra.mxu0 0.0
  %5363 = vmatpush.msra.mxu0 0.0
  %5364 = vmatpush.msra.mxu0 0.0
  %5365 = vmatpush.msra.mxu0 0.0
  %5366 = vmatpush.msra.mxu0 0.0
  %5367 = vmatpush.msra.mxu0 0.0
  %5368 = vmatpush.msra.mxu0 0.0
  %5369 = vmatpush.msra.mxu0 0.0
  %5370 = vmatpush.msra.mxu0 0.0
  %5371 = vmatpush.msra.mxu0 0.0
  %5372 = vmatpush.msra.mxu0 0.0
  %5373 = vmatpush.msra.mxu0 %v5349
  %5374 = vmatpush.msra.mxu0 %v5348
  %5375 = vmatmul.f32.gmra.mxu0 %v5351
  %v5376 = vpop.f32.mrf.mxu0
  %v5377 = vadd.f32 0.0, %v5376
  %5378 = vmatmul.f32.gmra.mxu0 %v5354
  %v5379 = vpop.f32.mrf.mxu0
  %v5380 = vadd.f32 0.0, %v5379
  %5381 = vmatmul.f32.gmra.mxu0 %v5357
  %v5382 = vpop.f32.mrf.mxu0
  %v5383 = vadd.f32 0.0, %v5382
  %5384 = vdwg.mxu0
  %v5385 = vadd.f32 %v5300, %v5377
  %v5386 = vadd.f32 %v5303, %v5380
  %v5387 = vadd.f32 %v5306, %v5383
  %s5388 = scalar_lea.vmem %s12, 72
  %v5389 = vld [vmem:[%s5388] sm:$0xff]
  %v5390 = vld [vmem:[%s5388 + $0x8] sm:$0xff]
  %v5391 = vld [vmem:[%s5388 + $0x10] sm:$0x3]
  %v5393 = vsel %vm5158, %v5389, 0
  %v5396 = vsel %vm5158, %v5390, 0
  %v5399 = vsel %vm5158, %v5391, 0
  %5401 = vmatpush.msra.mxu0 0.0
  %5402 = vmatpush.msra.mxu0 0.0
  %5403 = vmatpush.msra.mxu0 0.0
  %5404 = vmatpush.msra.mxu0 0.0
  %5405 = vmatpush.msra.mxu0 0.0
  %5406 = vmatpush.msra.mxu0 0.0
  %5407 = vmatpush.msra.mxu0 0.0
  %5408 = vmatpush.msra.mxu0 0.0
  %5409 = vmatpush.msra.mxu0 0.0
  %5410 = vmatpush.msra.mxu0 0.0
  %5411 = vmatpush.msra.mxu0 0.0
  %5412 = vmatpush.msra.mxu0 0.0
  %5413 = vmatpush.msra.mxu0 %v5154
  %5414 = vmatpush.msra.mxu0 %v5153
  %5415 = vmatpush.msra.mxu0 %v5152
  %5416 = vmatpush.msra.mxu0 %v5151
  %5417 = vmatmul.f32.gmra.mxu0 %v5393
  %v5418 = vpop.f32.mrf.mxu0
  %v5419 = vadd.f32 0.0, %v5418
  %5420 = vmatmul.f32.gmra.mxu0 %v5396
  %v5421 = vpop.f32.mrf.mxu0
  %v5422 = vadd.f32 0.0, %v5421
  %5423 = vmatmul.f32.gmra.mxu0 %v5399
  %v5424 = vpop.f32.mrf.mxu0
  %v5425 = vadd.f32 0.0, %v5424
  %5426 = vdwg.mxu0
  %s5427 = scalar_lea.vmem %s13, 48
  %v5428 = vld [vmem:[%s5427] sm:$0xff]
  %v5429 = vld [vmem:[%s5427 + $0x8] sm:$0xff]
  %v5431 = vsel %vm5078, %v5419, 0
  %v5434 = vsel %vm5078, %v5422, 0
  %v5437 = vsel %vm5078, %v5425, 0
  %5439 = vmatpush.msra.mxu0 0.0
  %5440 = vmatpush.msra.mxu0 0.0
  %5441 = vmatpush.msra.mxu0 0.0
  %5442 = vmatpush.msra.mxu0 0.0
  %5443 = vmatpush.msra.mxu0 0.0
  %5444 = vmatpush.msra.mxu0 0.0
  %5445 = vmatpush.msra.mxu0 0.0
  %5446 = vmatpush.msra.mxu0 0.0
  %5447 = vmatpush.msra.mxu0 0.0
  %5448 = vmatpush.msra.mxu0 0.0
  %5449 = vmatpush.msra.mxu0 0.0
  %5450 = vmatpush.msra.mxu0 0.0
  %5451 = vmatpush.msra.mxu0 0.0
  %5452 = vmatpush.msra.mxu0 0.0
  %5453 = vmatpush.msra.mxu0 %v5429
  %5454 = vmatpush.msra.mxu0 %v5428
  %5455 = vmatmul.f32.gmra.mxu0 %v5431
  %v5456 = vpop.f32.mrf.mxu0
  %v5457 = vadd.f32 0.0, %v5456
  %5458 = vmatmul.f32.gmra.mxu0 %v5434
  %v5459 = vpop.f32.mrf.mxu0
  %v5460 = vadd.f32 0.0, %v5459
  %5461 = vmatmul.f32.gmra.mxu0 %v5437
  %v5462 = vpop.f32.mrf.mxu0
  %v5463 = vadd.f32 0.0, %v5462
  %5464 = vdwg.mxu0
  %v5465 = vadd.f32 %v5385, %v5457
  %v5466 = vadd.f32 %v5386, %v5460
  %v5467 = vadd.f32 %v5387, %v5463
  %v5468 = vld [vmem:[#allocation2] sm:$0x1]
  %v5470 = vperm.slane %v5468, 0
  %v5472 = vadd.f32 %v5465, %v5470
  %v5473 = vadd.f32 %v5466, %v5470
  %v5474 = vadd.f32 %v5467, %v5470
  %v5475 = vmax.f32 %v5472, 0.0
  %v5476 = vmax.f32 %v5473, 0.0
  %v5477 = vmax.f32 %v5474, 0.0
  %v5478 = vld [vmem:[%s15] sm:$0x3]
  %v5479 = vld [vmem:[#allocation3] sm:$0x1]
  %v5481 = vperm.slane %v5479, 0
  %vm5483 = vcmask 146432
  %v5485 = vsel %vm5483, %v5478, 0
  %v5488 = vsel %vm936, %v5477, 0
  %5490 = vmatpush.msra.mxu0 0.0
  %5491 = vmatpush.msra.mxu0 0.0
  %5492 = vmatpush.msra.mxu0 0.0
  %5493 = vmatpush.msra.mxu0 0.0
  %5494 = vmatpush.msra.mxu0 0.0
  %5495 = vmatpush.msra.mxu0 0.0
  %5496 = vmatpush.msra.mxu0 0.0
  %5497 = vmatpush.msra.mxu0 0.0
  %5498 = vmatpush.msra.mxu0 0.0
  %5499 = vmatpush.msra.mxu0 0.0
  %5500 = vmatpush.msra.mxu0 0.0
  %5501 = vmatpush.msra.mxu0 0.0
  %5502 = vmatpush.msra.mxu0 0.0
  %5503 = vmatpush.msra.mxu0 %v5488
  %5504 = vmatpush.msra.mxu0 %v5476
  %5505 = vmatpush.msra.mxu0 %v5475
  %5506 = vmatmul.f32.gmra.mxu0 %v5485
  %v5507 = vpop.f32.mrf.mxu0
  %v5508 = vadd.f32 %v5481, %v5507
  %5509 = vdwg.mxu0
  %v5510 = vsub.f32 0.0, %v5508
  %v5511 = vmul.f32 %v5510, 1.442695
  %v5512 = vpow.pop %v5511
  %v5513 = vadd.f32 %v5512, 1.0
  %v5514 = vrcp.pop %v5513
  %vm5515 = vcmask 1024
  %5516 = vst.msk [vmem:[%s17] sm:$0x3] %vm5515, %v5514
  // Predicated region
  $region70: #{discriminator_forward.1} parent=0 // pred_check
    _
  $region71: #{discriminator_forward.1} parent=0 // pred_check_branch
    %5518 = sbr.rel (0) target = $region73
  $region72: #{discriminator_forward.1} parent=0 // pred_region
    _
  $region73: #{discriminator_forward.1} parent=0 // pred_fallthru
    _
  // Predicated region
  $region74: #{discriminator_forward.1} parent=0 // pred_check
    _
  $region75: #{discriminator_forward.1} parent=0 // pred_check_branch
    %5520 = sbr.rel (0) target = $region77
  $region76: #{discriminator_forward.1} parent=0 // pred_region
    _
  $region77: #{discriminator_forward.1} parent=0 // pred_fallthru
    _

</llo_original>
